<compile_context>
chip_gen: v7x
topology: tpu7x:2x2x1
jax: 0.10.0
libtpu: 0.0.40
codegen_flags: <defaults>
</compile_context>

<pallas_src>
import functools

import jax
import jax.numpy as jnp
from jax import lax
from jax.experimental import pallas as pl
from jax.experimental.pallas import tpu as pltpu

_EPS = 1e-5
_SQRT_HALF = 0.7071067811865476  # 1/sqrt(2) for exact erf-GELU


def _cdiv(a, b):
    return -(-a // b)


def _round_up(x, m):
    return ((x + m - 1) // m) * m


def _device_kind():
    try:
        return jax.devices()[0].device_kind.lower()
    except Exception:
        return ""


# ----------------------------------------------------------------------------
# Kernel A: weights VMEM-resident, grid = (token_tiles,).  No accumulator.
# ----------------------------------------------------------------------------
def _ff_resident_kernel(x_ref, g_ref, b_ref, w1_ref, b1_ref, w2_ref, b2_ref,
                        o_ref, *, gelu_dtype):
    # LayerNorm in f32; single fused pass for the statistics (sum, sum of sq).
    x = x_ref[...].astype(jnp.float32)
    inv_d = 1.0 / x.shape[-1]
    s1 = jnp.sum(x, axis=-1, keepdims=True)
    s2 = jnp.sum(x * x, axis=-1, keepdims=True)
    mu = s1 * inv_d
    var = jnp.maximum(s2 * inv_d - mu * mu, 0.0)
    xn = (x - mu) * lax.rsqrt(var + _EPS) * g_ref[...] + b_ref[...]
    xn = xn.astype(jnp.bfloat16)                       # MXU-native operand

    # Linear 1: bf16 x bf16 -> f32, then exact erf-GELU (bf16 on v6e/v7x).
    h = jnp.dot(xn, w1_ref[...], preferred_element_type=jnp.float32)
    h = (h + b1_ref[...]).astype(gelu_dtype)
    h = 0.5 * h * (1.0 + lax.erf(h * _SQRT_HALF))

    # Linear 2: reduce over the full hidden dim in one MXU pass; direct store.
    y = jnp.dot(h.astype(jnp.bfloat16), w2_ref[...],
                preferred_element_type=jnp.float32) + b2_ref[...]
    o_ref[...] = y.astype(o_ref.dtype)


# ----------------------------------------------------------------------------
# Kernel B (fallback for very large H): hidden-dim chunking with f32 acc.
# NOTE: the hidden axis k MUST stay the last grid axis and be "arbitrary" —
# the xn/acc scratch reuse depends on it.
# ----------------------------------------------------------------------------
def _ff_chunked_kernel(x_ref, g_ref, b_ref, w1_ref, b1_ref, w2_ref, b2_ref,
                       o_ref, xn_ref, acc_ref, *, gelu_dtype):
    k = pl.program_id(1)

    @pl.when(k == 0)
    def _init():
        x = x_ref[...].astype(jnp.float32)
        inv_d = 1.0 / x.shape[-1]
        s1 = jnp.sum(x, axis=-1, keepdims=True)
        s2 = jnp.sum(x * x, axis=-1, keepdims=True)
        mu = s1 * inv_d
        var = jnp.maximum(s2 * inv_d - mu * mu, 0.0)
        xn = (x - mu) * lax.rsqrt(var + _EPS) * g_ref[...] + b_ref[...]
        xn_ref[...] = xn.astype(jnp.bfloat16)
        acc_ref[...] = jnp.zeros_like(acc_ref)

    h = jnp.dot(xn_ref[...], w1_ref[...], preferred_element_type=jnp.float32)
    h = (h + b1_ref[...]).astype(gelu_dtype)
    h = 0.5 * h * (1.0 + lax.erf(h * _SQRT_HALF))
    acc_ref[...] += jnp.dot(h.astype(jnp.bfloat16), w2_ref[...],
                            preferred_element_type=jnp.float32)

    @pl.when(k == pl.num_programs(1) - 1)
    def _finalize():
        o_ref[...] = (acc_ref[...] + b2_ref[...]).astype(o_ref.dtype)


# ----------------------------------------------------------------------------
# Host wrapper
# ----------------------------------------------------------------------------
def feedforward(x, gamma, beta, w1, b1, w2, b2, *, tile_m=None, tile_h=512):
    """y = Linear2(GELU(Linear1(LayerNorm(x)))), w1:(D,H), w2:(H,D)."""
    orig_shape = x.shape
    D = orig_shape[-1]
    H = w1.shape[1]
    x2 = x.reshape(-1, D)          # no host-side cast/pad: kernel handles dtype
    M = x2.shape[0]
    out_dtype = x.dtype

    kind = _device_kind()
    is_v7 = "v7" in kind
    # VMEM: 64 MiB physical on v7x, 128 MiB on v5e/v6e.  Leave headroom.
    vmem_limit = (48 if is_v7 else 64) * 1024 * 1024
    vmem_budget = (40 if is_v7 else 52) * 1024 * 1024
    # bf16 VPU exists on v6e/v7x only -> bf16 erf-GELU halves the saturating
    # VALU work there; keep f32 GELU on v5e / unknown devices.
    pref_gelu_dtype = jnp.bfloat16 if ("v6" in kind or is_v7) else jnp.float32

    # ---- token-tile sizing --------------------------------------------------
    if tile_m is None:
        tile_m = 512 if M >= 2048 else 256
    if M <= 8:
        tile_m = M                                      # full-dim block is legal
    elif M < 2 * tile_m:
        # keep >=2 token tiles so "parallel" can feed both v7x TensorCores
        tile_m = min(tile_m, _round_up(_cdiv(M, 2), 8))
    num_m = _cdiv(M, tile_m)        # last tile may be partial (masked writes)

    in_b = jnp.dtype(x.dtype).itemsize
    out_b = jnp.dtype(out_dtype).itemsize

    def vmem_cost(hc, resident):
        w = 2 * 2 * (D * hc + hc * D)                   # bf16 weights, 2 buffers
        io = 2 * tile_m * D * (in_b + out_b)            # x / out, double buffered
        interm = tile_m * hc * 6 + tile_m * D * 12      # h (f32 + bf16), xn, y
        scratch = 0 if resident else tile_m * D * (2 + 4)   # xn bf16 + acc f32
        biases = 2 * 2 * (2 * hc + 4 * D) * 4
        return w + io + interm + scratch + biases

    resident = vmem_cost(H, True) <= vmem_budget
    if not resident:
        # largest multiple-of-128 divisor of H that fits the budget
        cand = [h for h in range(128, H + 1, 128)
                if H % h == 0 and h <= max(tile_h, 128)
                and vmem_cost(h, False) <= vmem_budget]
        if cand:
            tile_h = max(cand)
        else:
            # H not chunkable on 128 boundaries: fall back to resident weights
            # (correct; may pressure VMEM for exotic H).
            resident = True

    # Lane-major (1, D)/(1, H) per-feature vectors; bf16 weights (MXU-native,
    # half the HBM traffic) cast once here (constant-folded under jit).
    gamma2 = gamma.reshape(1, D).astype(jnp.float32)
    beta2 = beta.reshape(1, D).astype(jnp.float32)
    b1_2 = b1.reshape(1, H).astype(jnp.float32)
    b2_2 = b2.reshape(1, D).astype(jnp.float32)
    w1_bf = w1.astype(jnp.bfloat16)
    w2_bf = w2.astype(jnp.bfloat16)

    def _run(gelu_dtype):
        if resident:
            kernel = functools.partial(_ff_resident_kernel,
                                       gelu_dtype=gelu_dtype)
            return pl.pallas_call(
                kernel,
                out_shape=jax.ShapeDtypeStruct((M, D), out_dtype),
                grid_spec=pltpu.PrefetchScalarGridSpec(
                    num_scalar_prefetch=0,
                    grid=(num_m,),
                    in_specs=[
                        pl.BlockSpec((tile_m, D), lambda i: (i, 0)),  # x tokens
                        pl.BlockSpec((1, D), lambda i: (0, 0)),       # ln gamma
                        pl.BlockSpec((1, D), lambda i: (0, 0)),       # ln beta
                        pl.BlockSpec((D, H), lambda i: (0, 0)),       # w1 (once)
                        pl.BlockSpec((1, H), lambda i: (0, 0)),       # b1
                        pl.BlockSpec((H, D), lambda i: (0, 0)),       # w2 (once)
                        pl.BlockSpec((1, D), lambda i: (0, 0)),       # b2
                    ],
                    out_specs=pl.BlockSpec((tile_m, D), lambda i: (i, 0)),
                ),
                compiler_params=pltpu.CompilerParams(
                    dimension_semantics=("parallel",),
                    vmem_limit_bytes=vmem_limit),
            )(x2, gamma2, beta2, w1_bf, b1_2, w2_bf, b2_2)

        kernel = functools.partial(_ff_chunked_kernel, gelu_dtype=gelu_dtype)
        return pl.pallas_call(
            kernel,
            out_shape=jax.ShapeDtypeStruct((M, D), out_dtype),
            grid_spec=pltpu.PrefetchScalarGridSpec(
                num_scalar_prefetch=0,
                grid=(num_m, H // tile_h),
                in_specs=[
                    pl.BlockSpec((tile_m, D), lambda i, k: (i, 0)),   # x tokens
                    pl.BlockSpec((1, D), lambda i, k: (0, 0)),        # ln gamma
                    pl.BlockSpec((1, D), lambda i, k: (0, 0)),        # ln beta
                    pl.BlockSpec((D, tile_h), lambda i, k: (0, k)),   # w1 chunk
                    pl.BlockSpec((1, tile_h), lambda i, k: (0, k)),   # b1 chunk
                    pl.BlockSpec((tile_h, D), lambda i, k: (k, 0)),   # w2 chunk
                    pl.BlockSpec((1, D), lambda i, k: (0, 0)),        # b2
                ],
                out_specs=pl.BlockSpec((tile_m, D), lambda i, k: (i, 0)),
                scratch_shapes=[
                    pltpu.VMEM((tile_m, D), jnp.bfloat16),   # LayerNorm(x)
                    pltpu.VMEM((tile_m, D), jnp.float32),    # f32 accumulator
                ],
            ),
            compiler_params=pltpu.CompilerParams(
                dimension_semantics=("parallel", "arbitrary"),
                vmem_limit_bytes=vmem_limit),
        )(x2, gamma2, beta2, w1_bf, b1_2, w2_bf, b2_2)

    try:
        out = _run(pref_gelu_dtype)
    except Exception:
        if pref_gelu_dtype is jnp.float32:
            raise
        # Safety net: fall back to the proven f32 erf-GELU path if bf16 erf
        # fails to lower on this chip/toolchain.
        out = _run(jnp.float32)

    return out.reshape(orig_shape)


# ----------------------------------------------------------------------------
# Pure-JAX f32 reference (PyTorch FeedForward semantics)
# ----------------------------------------------------------------------------
def feedforward_ref(x, gamma, beta, w1, b1, w2, b2, eps=_EPS):
    mu = jnp.mean(x, axis=-1, keepdims=True)
    var = jnp.mean((x - mu) ** 2, axis=-1, keepdims=True)
    xn = (x - mu) * lax.rsqrt(var + eps) * gamma + beta
    h = jnp.dot(xn, w1, precision="highest") + b1
    h = 0.5 * h * (1.0 + lax.erf(h * _SQRT_HALF))
    return jnp.dot(h, w2, precision="highest") + b2


# ----------------------------------------------------------------------------
if __name__ == "__main__":
    B, N, DIM, HIDDEN = 2, 256, 128, 1024

    key = jax.random.PRNGKey(0)
    kx, kg, kb, kw1, kb1, kw2, kb2 = jax.random.split(key, 7)
    x = jax.random.normal(kx, (B, N, DIM), dtype=jnp.float32)
    gamma = 1.0 + 0.1 * jax.random.normal(kg, (DIM,), dtype=jnp.float32)
    beta = 0.1 * jax.random.normal(kb, (DIM,), dtype=jnp.float32)
    w1 = 0.05 * jax.random.normal(kw1, (DIM, HIDDEN), dtype=jnp.float32)
    b1 = 0.02 * jax.random.normal(kb1, (HIDDEN,), dtype=jnp.float32)
    w2 = 0.05 * jax.random.normal(kw2, (HIDDEN, DIM), dtype=jnp.float32)
    b2 = 0.02 * jax.random.normal(kb2, (DIM,), dtype=jnp.float32)

    out = feedforward(x, gamma, beta, w1, b1, w2, b2)
    out = jax.block_until_ready(out)

    ref = feedforward_ref(x, gamma, beta, w1, b1, w2, b2)

    assert out.shape == (B, N, DIM)
    assert bool(jnp.all(jnp.isfinite(out)))
    # bf16 MXU operands (+ bf16 GELU on v6e/v7x) => ~1e-2-level deviation from
    # the all-f32 reference is expected; this is an inference-grade tolerance.
    max_err = float(jnp.max(jnp.abs(out - ref)))
    assert max_err < 1e-1, f"max |err| = {max_err}"
    print("KERNEL_OK")
</pallas_src>

<mosaic_0001>
module attributes {stable_mosaic.version = 11 : i64} {
  func.func @_ff_resident_kernel(%arg0: i32, %arg1: memref<256x128xf32, #tpu.memory_space<vmem>>, %arg2: memref<1x128xf32, #tpu.memory_space<vmem>>, %arg3: memref<1x128xf32, #tpu.memory_space<vmem>>, %arg4: memref<128x1024xbf16, #tpu.memory_space<vmem>>, %arg5: memref<1x1024xf32, #tpu.memory_space<vmem>>, %arg6: memref<1024x128xbf16, #tpu.memory_space<vmem>>, %arg7: memref<1x128xf32, #tpu.memory_space<vmem>>, %arg8: memref<256x128xf32, #tpu.memory_space<vmem>>) attributes {dimension_semantics = [#tpu.dimension_semantics<parallel>], iteration_bounds = array<i64: 2>, scalar_prefetch = 0 : i64, scratch_operands = 0 : i64, tpu.core_type = #tpu.core_type<tc>, window_params = [{transform_indices = @transform_0, window_bounds = array<i64: 256, 128>}, {pipeline_mode = #tpu.pipeline_mode<synchronous>, transform_indices = @transform_1, window_bounds = array<i64: 1, 128>}, {pipeline_mode = #tpu.pipeline_mode<synchronous>, transform_indices = @transform_2, window_bounds = array<i64: 1, 128>}, {pipeline_mode = #tpu.pipeline_mode<synchronous>, transform_indices = @transform_3, window_bounds = array<i64: 128, 1024>}, {pipeline_mode = #tpu.pipeline_mode<synchronous>, transform_indices = @transform_4, window_bounds = array<i64: 1, 1024>}, {pipeline_mode = #tpu.pipeline_mode<synchronous>, transform_indices = @transform_5, window_bounds = array<i64: 1024, 128>}, {pipeline_mode = #tpu.pipeline_mode<synchronous>, transform_indices = @transform_6, window_bounds = array<i64: 1, 128>}, {transform_indices = @transform_7, window_bounds = array<i64: 256, 128>}]} {
    %c0 = arith.constant 0 : index
    %c0_0 = arith.constant 0 : index
    %0 = vector.load %arg1[%c0, %c0_0] : memref<256x128xf32, #tpu.memory_space<vmem>>, vector<256x128xf32>
    %cst = arith.constant dense<0.000000e+00> : vector<256xf32>
    %1 = vector.multi_reduction <add>, %0, %cst [1] : vector<256x128xf32> to vector<256xf32>
    %2 = vector.shape_cast %1 : vector<256xf32> to vector<256x1xf32>
    %3 = arith.mulf %0, %0 : vector<256x128xf32>
    %cst_1 = arith.constant dense<0.000000e+00> : vector<256xf32>
    %4 = vector.multi_reduction <add>, %3, %cst_1 [1] : vector<256x128xf32> to vector<256xf32>
    %5 = vector.shape_cast %4 : vector<256xf32> to vector<256x1xf32>
    %cst_2 = arith.constant 7.812500e-03 : f32
    %6 = vector.broadcast %cst_2 : f32 to vector<256x1xf32>
    %7 = arith.mulf %2, %6 : vector<256x1xf32>
    %cst_3 = arith.constant 7.812500e-03 : f32
    %8 = vector.broadcast %cst_3 : f32 to vector<256x1xf32>
    %9 = arith.mulf %5, %8 : vector<256x1xf32>
    %10 = arith.mulf %7, %7 : vector<256x1xf32>
    %11 = arith.subf %9, %10 : vector<256x1xf32>
    %cst_4 = arith.constant 0.000000e+00 : f32
    %12 = vector.broadcast %cst_4 : f32 to vector<256x1xf32>
    %13 = arith.maximumf %11, %12 : vector<256x1xf32>
    %14 = vector.broadcast %7 : vector<256x1xf32> to vector<256x128xf32>
    %15 = arith.subf %0, %14 : vector<256x128xf32>
    %cst_5 = arith.constant 9.99999974E-6 : f32
    %16 = vector.broadcast %cst_5 : f32 to vector<256x1xf32>
    %17 = arith.addf %13, %16 : vector<256x1xf32>
    %18 = math.rsqrt %17 : vector<256x1xf32>
    %19 = vector.broadcast %18 : vector<256x1xf32> to vector<256x128xf32>
    %20 = arith.mulf %15, %19 : vector<256x128xf32>
    %c0_6 = arith.constant 0 : index
    %c0_7 = arith.constant 0 : index
    %21 = vector.load %arg2[%c0_6, %c0_7] : memref<1x128xf32, #tpu.memory_space<vmem>>, vector<1x128xf32>
    %22 = vector.broadcast %21 : vector<1x128xf32> to vector<256x128xf32>
    %23 = arith.mulf %20, %22 : vector<256x128xf32>
    %c0_8 = arith.constant 0 : index
    %c0_9 = arith.constant 0 : index
    %24 = vector.load %arg3[%c0_8, %c0_9] : memref<1x128xf32, #tpu.memory_space<vmem>>, vector<1x128xf32>
    %25 = vector.broadcast %24 : vector<1x128xf32> to vector<256x128xf32>
    %26 = arith.addf %23, %25 : vector<256x128xf32>
    %27 = arith.truncf %26 : vector<256x128xf32> to vector<256x128xbf16>
    %c0_10 = arith.constant 0 : index
    %c0_11 = arith.constant 0 : index
    %28 = vector.load %arg4[%c0_10, %c0_11] : memref<128x1024xbf16, #tpu.memory_space<vmem>>, vector<128x1024xbf16>
    %cst_12 = arith.constant dense<0.000000e+00> : vector<256x1024xf32>
    %29 = tpu.matmul %27, %28, %cst_12 {dimension_numbers = #tpu.dot_dimension_numbers<[1], [0], [0], [1], [0, 0, 1, 1], [], []>} : vector<256x128xbf16>, vector<128x1024xbf16>, vector<256x1024xf32> -> vector<256x1024xf32>
    %c0_13 = arith.constant 0 : index
    %c0_14 = arith.constant 0 : index
    %30 = vector.load %arg5[%c0_13, %c0_14] : memref<1x1024xf32, #tpu.memory_space<vmem>>, vector<1x1024xf32>
    %31 = vector.broadcast %30 : vector<1x1024xf32> to vector<256x1024xf32>
    %32 = arith.addf %29, %31 : vector<256x1024xf32>
    %cst_15 = arith.constant 5.000000e-01 : f32
    %33 = vector.broadcast %cst_15 : f32 to vector<256x1024xf32>
    %34 = arith.mulf %33, %32 : vector<256x1024xf32>
    %cst_16 = arith.constant 0.707106769 : f32
    %35 = vector.broadcast %cst_16 : f32 to vector<256x1024xf32>
    %36 = arith.mulf %32, %35 : vector<256x1024xf32>
    %37 = math.erf %36 : vector<256x1024xf32>
    %cst_17 = arith.constant 1.000000e+00 : f32
    %38 = vector.broadcast %cst_17 : f32 to vector<256x1024xf32>
    %39 = arith.addf %38, %37 : vector<256x1024xf32>
    %40 = arith.mulf %34, %39 : vector<256x1024xf32>
    %41 = arith.truncf %40 : vector<256x1024xf32> to vector<256x1024xbf16>
    %c0_18 = arith.constant 0 : index
    %c0_19 = arith.constant 0 : index
    %42 = vector.load %arg6[%c0_18, %c0_19] : memref<1024x128xbf16, #tpu.memory_space<vmem>>, vector<1024x128xbf16>
    %cst_20 = arith.constant dense<0.000000e+00> : vector<256x128xf32>
    %43 = tpu.matmul %41, %42, %cst_20 {dimension_numbers = #tpu.dot_dimension_numbers<[1], [0], [0], [1], [0, 0, 1, 1], [], []>} : vector<256x1024xbf16>, vector<1024x128xbf16>, vector<256x128xf32> -> vector<256x128xf32>
    %c0_21 = arith.constant 0 : index
    %c0_22 = arith.constant 0 : index
    %44 = vector.load %arg7[%c0_21, %c0_22] : memref<1x128xf32, #tpu.memory_space<vmem>>, vector<1x128xf32>
    %45 = vector.broadcast %44 : vector<1x128xf32> to vector<256x128xf32>
    %46 = arith.addf %43, %45 : vector<256x128xf32>
    %c0_23 = arith.constant 0 : index
    %c0_24 = arith.constant 0 : index
    %47 = vector.load %arg8[%c0_23, %c0_24] : memref<256x128xf32, #tpu.memory_space<vmem>>, vector<256x128xf32>
    tpu.vector_store %arg8[%c0_23, %c0_24], %46 {strides = array<i32>} : memref<256x128xf32, #tpu.memory_space<vmem>>, vector<256x128xf32>,
    return
  }
  func.func @transform_0(%arg0: i32) -> (i32, i32) {
    %c0_i32 = arith.constant 0 : i32
    %c0_i32_0 = arith.constant 0 : i32
    return %arg0, %c0_i32 : i32, i32
  }
  func.func @transform_1(%arg0: i32) -> (i32, i32) {
    %c0_i32 = arith.constant 0 : i32
    %c0_i32_0 = arith.constant 0 : i32
    %c0_i32_1 = arith.constant 0 : i32
    return %c0_i32, %c0_i32_0 : i32, i32
  }
  func.func @transform_2(%arg0: i32) -> (i32, i32) {
    %c0_i32 = arith.constant 0 : i32
    %c0_i32_0 = arith.constant 0 : i32
    %c0_i32_1 = arith.constant 0 : i32
    return %c0_i32, %c0_i32_0 : i32, i32
  }
  func.func @transform_3(%arg0: i32) -> (i32, i32) {
    %c0_i32 = arith.constant 0 : i32
    %c0_i32_0 = arith.constant 0 : i32
    %c0_i32_1 = arith.constant 0 : i32
    return %c0_i32, %c0_i32_0 : i32, i32
  }
  func.func @transform_4(%arg0: i32) -> (i32, i32) {
    %c0_i32 = arith.constant 0 : i32
    %c0_i32_0 = arith.constant 0 : i32
    %c0_i32_1 = arith.constant 0 : i32
    return %c0_i32, %c0_i32_0 : i32, i32
  }
  func.func @transform_5(%arg0: i32) -> (i32, i32) {
    %c0_i32 = arith.constant 0 : i32
    %c0_i32_0 = arith.constant 0 : i32
    %c0_i32_1 = arith.constant 0 : i32
    return %c0_i32, %c0_i32_0 : i32, i32
  }
  func.func @transform_6(%arg0: i32) -> (i32, i32) {
    %c0_i32 = arith.constant 0 : i32
    %c0_i32_0 = arith.constant 0 : i32
    %c0_i32_1 = arith.constant 0 : i32
    return %c0_i32, %c0_i32_0 : i32, i32
  }
  func.func @transform_7(%arg0: i32) -> (i32, i32) {
    %c0_i32 = arith.constant 0 : i32
    %c0_i32_0 = arith.constant 0 : i32
    return %arg0, %c0_i32 : i32, i32
  }
}

</mosaic_0001>

<llo_original>
// kernel: tpu_custom_call.1
$region0: #{tpu_custom_call.1}
  #allocation0 [shape = 'u32[]', space=smem, size = 0x4, offset = 0x4, fixed_abs, tag = 'smem constant byte address 0x4 - core index']
  #allocation1 [shape = 'u32[144,128]{1,0:T(1,128)}', space=vmem, size = 0x12000, scoped, tag = 'internal scratch']
  %s0 = inlined_call_operand.hbm [shape: f32[512,128], index: 0, kind: input, shape index: {}]
  %s1 = inlined_call_operand.hbm [shape: f32[1,128], index: 1, kind: input, shape index: {}]
  %s2 = inlined_call_operand.hbm [shape: f32[1,128], index: 2, kind: input, shape index: {}]
  %s3 = inlined_call_operand.hbm [shape: bf16[128,1024], index: 3, kind: input, shape index: {}]
  %s4 = inlined_call_operand.hbm [shape: f32[1,1024], index: 4, kind: input, shape index: {}]
  %s5 = inlined_call_operand.hbm [shape: bf16[1024,128], index: 5, kind: input, shape index: {}]
  %s6 = inlined_call_operand.hbm [shape: f32[1,128], index: 6, kind: input, shape index: {}]
  %s7 = inlined_call_operand.hbm [shape: f32[512,128], index: 7, kind: output, shape index: {}]
  %s8 = sld [smem:[#allocation0]]
  $region89: #{tpu_custom_call.1} parent=0
    _
  %s10 = ssub.s32 1, %s8
  %s11 = scalar_select 0, %s10, %s8
  $region1: #{tpu_custom_call.1} parent=0
    #allocation2 [shape = 'u8[262144]{0}', space=vmem, size = 0x40000, scoped, tag = 'input window, operand 0']
    #allocation3 [shape = 's32[2]{0}', space=sflag, size = 0x8, scoped, tag = 'scoped memory for tpu_custom_call.1']
    #allocation4 [shape = 's32[2]{0}', space=sflag, size = 0x8, scoped, tag = 'scoped memory for tpu_custom_call.1']
    #allocation5 [shape = 'u8[512]{0}', space=vmem, size = 0x400, scoped, tag = 'input window, operand 1, single buffered']
    #allocation6 [shape = 's32[1]{0}', space=sflag, size = 0x4, scoped, tag = 'scoped memory for tpu_custom_call.1']
    #allocation7 [shape = 'u8[512]{0}', space=vmem, size = 0x400, scoped, tag = 'input window, operand 2, single buffered']
    #allocation8 [shape = 'u8[262144]{0}', space=vmem, size = 0x40000, scoped, tag = 'input window, operand 3, single buffered']
    #allocation9 [shape = 's32[1]{0}', space=sflag, size = 0x4, scoped, tag = 'scoped memory for tpu_custom_call.1']
    #allocation10 [shape = 'u8[4096]{0}', space=vmem, size = 0x1000, scoped, tag = 'input window, operand 4, single buffered']
    #allocation11 [shape = 'u8[262144]{0}', space=vmem, size = 0x40000, scoped, tag = 'input window, operand 5, single buffered']
    #allocation12 [shape = 's32[1]{0}', space=sflag, size = 0x4, scoped, tag = 'scoped memory for tpu_custom_call.1']
    #allocation13 [shape = 'u8[512]{0}', space=vmem, size = 0x400, scoped, tag = 'input window, operand 6, single buffered']
    #allocation14 [shape = 'u8[262144]{0}', space=vmem, size = 0x40000, scoped, tag = 'output window, operand 0']
    %12 = vsyncpa [#allocation3], 0
    %s13 = scalar_lea.sflag [#allocation3], 1
    %14 = vsyncpa %s13, 0
    %15 = vsyncpa [#allocation6], 0
    %16 = vsyncpa [#allocation9], 0
    %17 = vsyncpa [#allocation12], 0
    %18 = vsyncpa [#allocation4], 0
    %s19 = scalar_lea.sflag [#allocation4], 1
    %20 = vsyncpa %s19, 0
    loop: start=0, step=1, limit=4
    $region2: #{tpu_custom_call.1} parent=1 // loop_pre_header
      _
    $region3: #{tpu_custom_call.1} parent=1 // loop_header
      %s22 = sphi 0, %s26
      %p23 = scmp.ge.s32.totalorder %s22, 4
      %s32 = sphi 0, %s34
      %s35 = sphi 0, %s32
      %s36 = sphi 0, %s35
      %s52 = sphi 0, %s36
      %s56 = sphi 0, %s56
      %s58 = sphi 0, %s56
      %s59 = sphi 0, %s58
      %s73 = sphi 0, %s59
      %s77 = sphi 0, %s77
      %s79 = sphi 0, %s77
      %s80 = sphi 0, %s79
      %s94 = sphi 0, %s80
      %s98 = sphi 0, %s98
      %s100 = sphi 0, %s98
      %s101 = sphi 0, %s100
      %s115 = sphi 0, %s101
      %s119 = sphi 0, %s119
      %s121 = sphi 0, %s119
      %s122 = sphi 0, %s121
      %s136 = sphi 0, %s122
      %s140 = sphi 0, %s140
      %s142 = sphi 0, %s140
      %s143 = sphi 0, %s142
      %s157 = sphi 0, %s143
      %s161 = sphi 0, %s161
      %s163 = sphi 0, %s161
      %s164 = sphi 0, %s163
      %s178 = sphi 0, %s164
      %s184 = sphi 0, %s186
      %s187 = sphi 0, %s184
      %s188 = sphi 0, %s187
      %s204 = sphi 0, %s188
    $region4: #{tpu_custom_call.1} parent=1 // loop_header_branch
      %25 = sbr.rel (%p23) target = $region8
    $region5: #{tpu_custom_call.1} parent=1 // loop_body
      %s27 = ssub.s32 %s22, 1
      %s28 = ssub.s32 %s22, 2
      %s29 = sadd.s32 %s22, 1
      %s30 = ssub.s32 %s22, %s29
      %p31 = scmp.eq.s32.totalorder %s30, 0
      %s33 = sadd.s32 %s32, 1
      %s34 = scalar_select %p31, %s32, %s33
      %p37 = pneg %p31
      %p38 = scmp.eq.s32.totalorder %s22, 1
      %p39 = por %p37, %p38
      %p40 = scmp.ne.s32.totalorder %s32, %s35
      %p41 = scmp.eq.s32.totalorder %s22, 0
      %p42 = por %p40, %p41
      %p43 = scmp.ne.s32.totalorder %s32, %s35
      %p44 = scmp.eq.s32.totalorder %s27, 1
      %p45 = por %p43, %p44
      %p46 = scmp.ne.s32.totalorder %s35, %s36
      %p47 = scmp.eq.s32.totalorder %s27, 0
      %p48 = por %p46, %p47
      %p49 = scmp.ne.s32.totalorder %s35, %s36
      %p50 = scmp.eq.s32.totalorder %s28, 1
      %p51 = por %p49, %p50
      %p53 = scmp.ne.s32.totalorder %s36, %s52
      %p54 = scmp.eq.s32.totalorder %s28, 0
      %p55 = por %p53, %p54
      %s57 = sadd.s32 %s56, 1
      %p60 = scmp.eq.s32.totalorder %s22, 1
      %p61 = scmp.ne.s32.totalorder %s56, %s58
      %p62 = scmp.eq.s32.totalorder %s22, 0
      %p63 = por %p61, %p62
      %p64 = scmp.ne.s32.totalorder %s56, %s58
      %p65 = scmp.eq.s32.totalorder %s27, 1
      %p66 = por %p64, %p65
      %p67 = scmp.ne.s32.totalorder %s58, %s59
      %p68 = scmp.eq.s32.totalorder %s27, 0
      %p69 = por %p67, %p68
      %p70 = scmp.ne.s32.totalorder %s58, %s59
      %p71 = scmp.eq.s32.totalorder %s28, 1
      %p72 = por %p70, %p71
      %p74 = scmp.ne.s32.totalorder %s59, %s73
      %p75 = scmp.eq.s32.totalorder %s28, 0
      %p76 = por %p74, %p75
      %s78 = sadd.s32 %s77, 1
      %p81 = scmp.eq.s32.totalorder %s22, 1
      %p82 = scmp.ne.s32.totalorder %s77, %s79
      %p83 = scmp.eq.s32.totalorder %s22, 0
      %p84 = por %p82, %p83
      %p85 = scmp.ne.s32.totalorder %s77, %s79
      %p86 = scmp.eq.s32.totalorder %s27, 1
      %p87 = por %p85, %p86
      %p88 = scmp.ne.s32.totalorder %s79, %s80
      %p89 = scmp.eq.s32.totalorder %s27, 0
      %p90 = por %p88, %p89
      %p91 = scmp.ne.s32.totalorder %s79, %s80
      %p92 = scmp.eq.s32.totalorder %s28, 1
      %p93 = por %p91, %p92
      %p95 = scmp.ne.s32.totalorder %s80, %s94
      %p96 = scmp.eq.s32.totalorder %s28, 0
      %p97 = por %p95, %p96
      %s99 = sadd.s32 %s98, 1
      %p102 = scmp.eq.s32.totalorder %s22, 1
      %p103 = scmp.ne.s32.totalorder %s98, %s100
      %p104 = scmp.eq.s32.totalorder %s22, 0
      %p105 = por %p103, %p104
      %p106 = scmp.ne.s32.totalorder %s98, %s100
      %p107 = scmp.eq.s32.totalorder %s27, 1
      %p108 = por %p106, %p107
      %p109 = scmp.ne.s32.totalorder %s100, %s101
      %p110 = scmp.eq.s32.totalorder %s27, 0
      %p111 = por %p109, %p110
      %p112 = scmp.ne.s32.totalorder %s100, %s101
      %p113 = scmp.eq.s32.totalorder %s28, 1
      %p114 = por %p112, %p113
      %p116 = scmp.ne.s32.totalorder %s101, %s115
      %p117 = scmp.eq.s32.totalorder %s28, 0
      %p118 = por %p116, %p117
      %s120 = sadd.s32 %s119, 1
      %p123 = scmp.eq.s32.totalorder %s22, 1
      %p124 = scmp.ne.s32.totalorder %s119, %s121
      %p125 = scmp.eq.s32.totalorder %s22, 0
      %p126 = por %p124, %p125
      %p127 = scmp.ne.s32.totalorder %s119, %s121
      %p128 = scmp.eq.s32.totalorder %s27, 1
      %p129 = por %p127, %p128
      %p130 = scmp.ne.s32.totalorder %s121, %s122
      %p131 = scmp.eq.s32.totalorder %s27, 0
      %p132 = por %p130, %p131
      %p133 = scmp.ne.s32.totalorder %s121, %s122
      %p134 = scmp.eq.s32.totalorder %s28, 1
      %p135 = por %p133, %p134
      %p137 = scmp.ne.s32.totalorder %s122, %s136
      %p138 = scmp.eq.s32.totalorder %s28, 0
      %p139 = por %p137, %p138
      %s141 = sadd.s32 %s140, 1
      %p144 = scmp.eq.s32.totalorder %s22, 1
      %p145 = scmp.ne.s32.totalorder %s140, %s142
      %p146 = scmp.eq.s32.totalorder %s22, 0
      %p147 = por %p145, %p146
      %p148 = scmp.ne.s32.totalorder %s140, %s142
      %p149 = scmp.eq.s32.totalorder %s27, 1
      %p150 = por %p148, %p149
      %p151 = scmp.ne.s32.totalorder %s142, %s143
      %p152 = scmp.eq.s32.totalorder %s27, 0
      %p153 = por %p151, %p152
      %p154 = scmp.ne.s32.totalorder %s142, %s143
      %p155 = scmp.eq.s32.totalorder %s28, 1
      %p156 = por %p154, %p155
      %p158 = scmp.ne.s32.totalorder %s143, %s157
      %p159 = scmp.eq.s32.totalorder %s28, 0
      %p160 = por %p158, %p159
      %s162 = sadd.s32 %s161, 1
      %p165 = scmp.eq.s32.totalorder %s22, 1
      %p166 = scmp.ne.s32.totalorder %s161, %s163
      %p167 = scmp.eq.s32.totalorder %s22, 0
      %p168 = por %p166, %p167
      %p169 = scmp.ne.s32.totalorder %s161, %s163
      %p170 = scmp.eq.s32.totalorder %s27, 1
      %p171 = por %p169, %p170
      %p172 = scmp.ne.s32.totalorder %s163, %s164
      %p173 = scmp.eq.s32.totalorder %s27, 0
      %p174 = por %p172, %p173
      %p175 = scmp.ne.s32.totalorder %s163, %s164
      %p176 = scmp.eq.s32.totalorder %s28, 1
      %p177 = por %p175, %p176
      %p179 = scmp.ne.s32.totalorder %s164, %s178
      %p180 = scmp.eq.s32.totalorder %s28, 0
      %p181 = por %p179, %p180
      %s182 = ssub.s32 %s22, %s29
      %p183 = scmp.eq.s32.totalorder %s182, 0
      %s185 = sadd.s32 %s184, 1
      %s186 = scalar_select %p183, %s184, %s185
      %p189 = pneg %p183
      %p190 = scmp.eq.s32.totalorder %s22, 1
      %p191 = por %p189, %p190
      %p192 = scmp.ne.s32.totalorder %s184, %s187
      %p193 = scmp.eq.s32.totalorder %s22, 0
      %p194 = por %p192, %p193
      %p195 = scmp.ne.s32.totalorder %s184, %s187
      %p196 = scmp.eq.s32.totalorder %s27, 1
      %p197 = por %p195, %p196
      %p198 = scmp.ne.s32.totalorder %s187, %s188
      %p199 = scmp.eq.s32.totalorder %s27, 0
      %p200 = por %p198, %p199
      %p201 = scmp.ne.s32.totalorder %s187, %s188
      %p202 = scmp.eq.s32.totalorder %s28, 1
      %p203 = por %p201, %p202
      %p205 = scmp.ne.s32.totalorder %s188, %s204
      %p206 = scmp.eq.s32.totalorder %s28, 0
      %p207 = por %p205, %p206
      %p208 = scmp.le.s32.totalorder 1, %s22
      %p209 = scmp.lt.s32.totalorder %s22, 3
      %p210 = pnand %p208, %p209
      %p211 = pneg %p210
      // Predicated region
      $region9: #{tpu_custom_call.1} parent=5 // pred_check
        _
      $region10: #{tpu_custom_call.1} parent=5 // pred_check_branch
        %213 = sbr.rel (%p210) target = $region12
      $region11: #{tpu_custom_call.1} parent=5 // pred_region
        %s214 = ssub.s32 %s22, 1
        // Predicated region
        $region13: #{tpu_custom_call.1} parent=11 // pred_check
          %p215 = pneg %p69
        $region14: #{tpu_custom_call.1} parent=11 // pred_check_branch
          %217 = sbr.rel (%p215) target = $region16
        $region15: #{tpu_custom_call.1} parent=11 // pred_region
          %s219 = ssub.s32 16, 16
          %220 = vsyncadd [#allocation6], %s219
          %s222 = sshll.u32 [#allocation5], 4
          %s223 = int_to_ptr.vmem [resolvable:$true] %s222
          %225 = dma.hbm_to_vmem [thread:$0]  %s1, 16, %s223, [#allocation6]
        $region16: #{tpu_custom_call.1} parent=11 // pred_fallthru
          _
        // Predicated region
        $region17: #{tpu_custom_call.1} parent=11 // pred_check
          %p226 = pneg %p90
        $region18: #{tpu_custom_call.1} parent=11 // pred_check_branch
          %228 = sbr.rel (%p226) target = $region20
        $region19: #{tpu_custom_call.1} parent=11 // pred_region
          %s230 = ssub.s32 16, 16
          %231 = vsyncadd [#allocation6], %s230
          %s233 = sshll.u32 [#allocation7], 4
          %s234 = int_to_ptr.vmem [resolvable:$true] %s233
          %236 = dma.hbm_to_vmem [thread:$0]  %s2, 16, %s234, [#allocation6]
        $region20: #{tpu_custom_call.1} parent=11 // pred_fallthru
          _
        // Predicated region
        $region21: #{tpu_custom_call.1} parent=11 // pred_check
          %p237 = pneg %p111
        $region22: #{tpu_custom_call.1} parent=11 // pred_check_branch
          %239 = sbr.rel (%p237) target = $region24
        $region23: #{tpu_custom_call.1} parent=11 // pred_region
          %s241 = ssub.s32 8192, 8192
          %242 = vsyncadd [#allocation9], %s241
          %s243 = sshll.u32 [#allocation8], 4
          %s244 = int_to_ptr.vmem [resolvable:$true] %s243
          %249 = dma.hbm_to_vmem [thread:$0]  %s3, 8192, %s244, [#allocation9], 512, 512, 32
        $region24: #{tpu_custom_call.1} parent=11 // pred_fallthru
          _
        // Predicated region
        $region25: #{tpu_custom_call.1} parent=11 // pred_check
          %p250 = pneg %p132
        $region26: #{tpu_custom_call.1} parent=11 // pred_check_branch
          %252 = sbr.rel (%p250) target = $region28
        $region27: #{tpu_custom_call.1} parent=11 // pred_region
          %s254 = ssub.s32 128, 128
          %255 = vsyncadd [#allocation9], %s254
          %s257 = sshll.u32 [#allocation10], 4
          %s258 = int_to_ptr.vmem [resolvable:$true] %s257
          %260 = dma.hbm_to_vmem [thread:$0]  %s4, 128, %s258, [#allocation9]
        $region28: #{tpu_custom_call.1} parent=11 // pred_fallthru
          _
        // Predicated region
        $region29: #{tpu_custom_call.1} parent=11 // pred_check
          %p261 = pneg %p153
        $region30: #{tpu_custom_call.1} parent=11 // pred_check_branch
          %263 = sbr.rel (%p261) target = $region32
        $region31: #{tpu_custom_call.1} parent=11 // pred_region
          %s265 = ssub.s32 8192, 8192
          %266 = vsyncadd [#allocation12], %s265
          %s267 = sshll.u32 [#allocation11], 4
          %s268 = int_to_ptr.vmem [resolvable:$true] %s267
          %273 = dma.hbm_to_vmem [thread:$0]  %s5, 8192, %s268, [#allocation12], 64, 64, 4
        $region32: #{tpu_custom_call.1} parent=11 // pred_fallthru
          _
        // Predicated region
        $region33: #{tpu_custom_call.1} parent=11 // pred_check
          %p274 = pneg %p174
        $region34: #{tpu_custom_call.1} parent=11 // pred_check_branch
          %276 = sbr.rel (%p274) target = $region36
        $region35: #{tpu_custom_call.1} parent=11 // pred_region
          %s278 = ssub.s32 16, 16
          %279 = vsyncadd [#allocation12], %s278
          %s281 = sshll.u32 [#allocation13], 4
          %s282 = int_to_ptr.vmem [resolvable:$true] %s281
          %284 = dma.hbm_to_vmem [thread:$0]  %s6, 16, %s282, [#allocation12]
        $region36: #{tpu_custom_call.1} parent=11 // pred_fallthru
          _
      $region12: #{tpu_custom_call.1} parent=5 // pred_fallthru
        _
      %p285 = scmp.lt.s32.totalorder %s22, 2
      // Predicated region
      $region37: #{tpu_custom_call.1} parent=5 // pred_check
        %p286 = pneg %p285
      $region38: #{tpu_custom_call.1} parent=5 // pred_check_branch
        %288 = sbr.rel (%p286) target = $region40
      $region39: #{tpu_custom_call.1} parent=5 // pred_region
        // Predicated region
        $region41: #{tpu_custom_call.1} parent=39 // pred_check
          %p289 = pneg %p42
        $region42: #{tpu_custom_call.1} parent=39 // pred_check_branch
          %291 = sbr.rel (%p289) target = $region44
        $region43: #{tpu_custom_call.1} parent=39 // pred_region
          %s292 = sand.u32 %s32, 1
          %s293 = scalar_lea.sflag [#allocation3], %s292
          %s294 = sand.u32 %s32, 1
          %s295 = smul.addr %s294, 256
          %s296 = scalar_lea.vmem [#allocation2], %s295
          %s297 = smul.u32 32, %s22
          %s299 = ssub.s32 4096, 4096
          %300 = vsyncadd %s293, %s299
          %s301 = smul.addr %s297, 128
          %s302 = scalar_lea.hbm %s0, %s301
          %s303 = sshll.u32 %s296, 4
          %s304 = int_to_ptr.vmem [resolvable:$true] %s303
          %309 = dma.hbm_to_vmem [thread:$0]  %s302, 4096, %s304, %s293, 128, 128, 8
        $region44: #{tpu_custom_call.1} parent=39 // pred_fallthru
          _
      $region40: #{tpu_custom_call.1} parent=5 // pred_fallthru
        _
      %p310 = scmp.le.s32.totalorder 1, %s22
      %p311 = scmp.lt.s32.totalorder %s22, 3
      %p312 = pnand %p310, %p311
      %p313 = pneg %p312
      // Predicated region
      $region45: #{tpu_custom_call.1} parent=5 // pred_check
        _
      $region46: #{tpu_custom_call.1} parent=5 // pred_check_branch
        %315 = sbr.rel (%p312) target = $region48
      $region47: #{tpu_custom_call.1} parent=5 // pred_region
        %s316 = ssub.s32 %s22, 1
        %s317 = sand.u32 %s35, 1
        %s318 = scalar_lea.sflag [#allocation3], %s317
        %s319 = sand.u32 %s35, 1
        %s320 = smul.addr %s319, 256
        %s321 = scalar_lea.vmem [#allocation2], %s320
        // Predicated region
        $region49: #{tpu_custom_call.1} parent=47 // pred_check
          %p322 = pneg %p48
        $region50: #{tpu_custom_call.1} parent=47 // pred_check_branch
          %324 = sbr.rel (%p322) target = $region52
        $region51: #{tpu_custom_call.1} parent=47 // pred_region
          %325 = dma.done %s318, 4096
        $region52: #{tpu_custom_call.1} parent=47 // pred_fallthru
          _
        // Predicated region
        $region53: #{tpu_custom_call.1} parent=47 // pred_check
          %p326 = pneg %p69
        $region54: #{tpu_custom_call.1} parent=47 // pred_check_branch
          %328 = sbr.rel (%p326) target = $region56
        $region55: #{tpu_custom_call.1} parent=47 // pred_region
          %329 = dma.done [#allocation6], 16
        $region56: #{tpu_custom_call.1} parent=47 // pred_fallthru
          _
        // Predicated region
        $region57: #{tpu_custom_call.1} parent=47 // pred_check
          %p330 = pneg %p90
        $region58: #{tpu_custom_call.1} parent=47 // pred_check_branch
          %332 = sbr.rel (%p330) target = $region60
        $region59: #{tpu_custom_call.1} parent=47 // pred_region
          %333 = dma.done [#allocation6], 16
        $region60: #{tpu_custom_call.1} parent=47 // pred_fallthru
          _
        // Predicated region
        $region61: #{tpu_custom_call.1} parent=47 // pred_check
          %p334 = pneg %p111
        $region62: #{tpu_custom_call.1} parent=47 // pred_check_branch
          %336 = sbr.rel (%p334) target = $region64
        $region63: #{tpu_custom_call.1} parent=47 // pred_region
          %337 = dma.done [#allocation9], 8192
        $region64: #{tpu_custom_call.1} parent=47 // pred_fallthru
          _
        // Predicated region
        $region65: #{tpu_custom_call.1} parent=47 // pred_check
          %p338 = pneg %p132
        $region66: #{tpu_custom_call.1} parent=47 // pred_check_branch
          %340 = sbr.rel (%p338) target = $region68
        $region67: #{tpu_custom_call.1} parent=47 // pred_region
          %341 = dma.done [#allocation9], 128
        $region68: #{tpu_custom_call.1} parent=47 // pred_fallthru
          _
        // Predicated region
        $region69: #{tpu_custom_call.1} parent=47 // pred_check
          %p342 = pneg %p153
        $region70: #{tpu_custom_call.1} parent=47 // pred_check_branch
          %344 = sbr.rel (%p342) target = $region72
        $region71: #{tpu_custom_call.1} parent=47 // pred_region
          %345 = dma.done [#allocation12], 8192
        $region72: #{tpu_custom_call.1} parent=47 // pred_fallthru
          _
        // Predicated region
        $region73: #{tpu_custom_call.1} parent=47 // pred_check
          %p346 = pneg %p174
        $region74: #{tpu_custom_call.1} parent=47 // pred_check_branch
          %348 = sbr.rel (%p346) target = $region76
        $region75: #{tpu_custom_call.1} parent=47 // pred_region
          %349 = dma.done [#allocation12], 16
        $region76: #{tpu_custom_call.1} parent=47 // pred_fallthru
          _
        %s350 = sand.u32 %s35, 1
        %s351 = scalar_lea.sflag [#allocation3], %s350
        %s352 = sand.u32 %s35, 1
        %s353 = smul.addr %s352, 256
        %s354 = scalar_lea.vmem [#allocation2], %s353
        %p355 = pneg %p48
        %p356 = pneg %p45
        %p357 = pneg %p69
        %p358 = pneg %p66
        %p359 = pneg %p90
        %p360 = pneg %p87
        %p361 = pneg %p111
        %p362 = pneg %p108
        %p363 = pneg %p132
        %p364 = pneg %p129
        %p365 = pneg %p153
        %p366 = pneg %p150
        %p367 = pneg %p174
        %p368 = pneg %p171
        %p369 = pneg %p200
        %p370 = pneg %p197
        %s371 = sand.u32 %s187, 1
        %s372 = scalar_lea.sflag [#allocation4], %s371
        %s373 = sand.u32 %s187, 1
        %s374 = smul.addr %s373, 256
        %s375 = scalar_lea.vmem [#allocation14], %s374
        %s376 = smul.u32 32, %s27
        %s377 = smul.u32 32, %s27
        %v379 = vld [vmem:[%s321] sm:$0xff]
        %v380 = vld [vmem:[%s321 + $0x8] sm:$0xff]
        %v381 = vld [vmem:[%s321 + $0x10] sm:$0xff]
        %v382 = vld [vmem:[%s321 + $0x18] sm:$0xff]
        %v383 = vld [vmem:[%s321 + $0x20] sm:$0xff]
        %v384 = vld [vmem:[%s321 + $0x28] sm:$0xff]
        %v385 = vld [vmem:[%s321 + $0x30] sm:$0xff]
        %v386 = vld [vmem:[%s321 + $0x38] sm:$0xff]
        %v387 = vld [vmem:[%s321 + $0x40] sm:$0xff]
        %v388 = vld [vmem:[%s321 + $0x48] sm:$0xff]
        %v389 = vld [vmem:[%s321 + $0x50] sm:$0xff]
        %v390 = vld [vmem:[%s321 + $0x58] sm:$0xff]
        %v391 = vld [vmem:[%s321 + $0x60] sm:$0xff]
        %v392 = vld [vmem:[%s321 + $0x68] sm:$0xff]
        %v393 = vld [vmem:[%s321 + $0x70] sm:$0xff]
        %v394 = vld [vmem:[%s321 + $0x78] sm:$0xff]
        %v395 = vld [vmem:[%s321 + $0x80] sm:$0xff]
        %v396 = vld [vmem:[%s321 + $0x88] sm:$0xff]
        %v397 = vld [vmem:[%s321 + $0x90] sm:$0xff]
        %v398 = vld [vmem:[%s321 + $0x98] sm:$0xff]
        %v399 = vld [vmem:[%s321 + $0xa0] sm:$0xff]
        %v400 = vld [vmem:[%s321 + $0xa8] sm:$0xff]
        %v401 = vld [vmem:[%s321 + $0xb0] sm:$0xff]
        %v402 = vld [vmem:[%s321 + $0xb8] sm:$0xff]
        %v403 = vld [vmem:[%s321 + $0xc0] sm:$0xff]
        %v404 = vld [vmem:[%s321 + $0xc8] sm:$0xff]
        %v405 = vld [vmem:[%s321 + $0xd0] sm:$0xff]
        %v406 = vld [vmem:[%s321 + $0xd8] sm:$0xff]
        %v407 = vld [vmem:[%s321 + $0xe0] sm:$0xff]
        %v408 = vld [vmem:[%s321 + $0xe8] sm:$0xff]
        %v409 = vld [vmem:[%s321 + $0xf0] sm:$0xff]
        %v410 = vld [vmem:[%s321 + $0xf8] sm:$0xff]
        %411 = vadd.xlane.f32.xlu0 %v379
        %v412 = vpop.xlane.xlu0 %411
        %413 = vadd.xlane.f32.xlu0 %v380
        %v414 = vpop.xlane.xlu0 %413
        %415 = vadd.xlane.f32.xlu0 %v381
        %v416 = vpop.xlane.xlu0 %415
        %417 = vadd.xlane.f32.xlu0 %v382
        %v418 = vpop.xlane.xlu0 %417
        %419 = vadd.xlane.f32.xlu0 %v383
        %v420 = vpop.xlane.xlu0 %419
        %421 = vadd.xlane.f32.xlu0 %v384
        %v422 = vpop.xlane.xlu0 %421
        %423 = vadd.xlane.f32.xlu0 %v385
        %v424 = vpop.xlane.xlu0 %423
        %425 = vadd.xlane.f32.xlu0 %v386
        %v426 = vpop.xlane.xlu0 %425
        %427 = vadd.xlane.f32.xlu0 %v387
        %v428 = vpop.xlane.xlu0 %427
        %429 = vadd.xlane.f32.xlu0 %v388
        %v430 = vpop.xlane.xlu0 %429
        %431 = vadd.xlane.f32.xlu0 %v389
        %v432 = vpop.xlane.xlu0 %431
        %433 = vadd.xlane.f32.xlu0 %v390
        %v434 = vpop.xlane.xlu0 %433
        %435 = vadd.xlane.f32.xlu0 %v391
        %v436 = vpop.xlane.xlu0 %435
        %437 = vadd.xlane.f32.xlu0 %v392
        %v438 = vpop.xlane.xlu0 %437
        %439 = vadd.xlane.f32.xlu0 %v393
        %v440 = vpop.xlane.xlu0 %439
        %441 = vadd.xlane.f32.xlu0 %v394
        %v442 = vpop.xlane.xlu0 %441
        %443 = vadd.xlane.f32.xlu0 %v395
        %v444 = vpop.xlane.xlu0 %443
        %445 = vadd.xlane.f32.xlu0 %v396
        %v446 = vpop.xlane.xlu0 %445
        %447 = vadd.xlane.f32.xlu0 %v397
        %v448 = vpop.xlane.xlu0 %447
        %449 = vadd.xlane.f32.xlu0 %v398
        %v450 = vpop.xlane.xlu0 %449
        %451 = vadd.xlane.f32.xlu0 %v399
        %v452 = vpop.xlane.xlu0 %451
        %453 = vadd.xlane.f32.xlu0 %v400
        %v454 = vpop.xlane.xlu0 %453
        %455 = vadd.xlane.f32.xlu0 %v401
        %v456 = vpop.xlane.xlu0 %455
        %457 = vadd.xlane.f32.xlu0 %v402
        %v458 = vpop.xlane.xlu0 %457
        %459 = vadd.xlane.f32.xlu0 %v403
        %v460 = vpop.xlane.xlu0 %459
        %461 = vadd.xlane.f32.xlu0 %v404
        %v462 = vpop.xlane.xlu0 %461
        %463 = vadd.xlane.f32.xlu0 %v405
        %v464 = vpop.xlane.xlu0 %463
        %465 = vadd.xlane.f32.xlu0 %v406
        %v466 = vpop.xlane.xlu0 %465
        %467 = vadd.xlane.f32.xlu0 %v407
        %v468 = vpop.xlane.xlu0 %467
        %469 = vadd.xlane.f32.xlu0 %v408
        %v470 = vpop.xlane.xlu0 %469
        %471 = vadd.xlane.f32.xlu0 %v409
        %v472 = vpop.xlane.xlu0 %471
        %473 = vadd.xlane.f32.xlu0 %v410
        %v474 = vpop.xlane.xlu0 %473
        %v475 = vmul.f32 %v379, %v379
        %v476 = vmul.f32 %v380, %v380
        %v477 = vmul.f32 %v381, %v381
        %v478 = vmul.f32 %v382, %v382
        %v479 = vmul.f32 %v383, %v383
        %v480 = vmul.f32 %v384, %v384
        %v481 = vmul.f32 %v385, %v385
        %v482 = vmul.f32 %v386, %v386
        %v483 = vmul.f32 %v387, %v387
        %v484 = vmul.f32 %v388, %v388
        %v485 = vmul.f32 %v389, %v389
        %v486 = vmul.f32 %v390, %v390
        %v487 = vmul.f32 %v391, %v391
        %v488 = vmul.f32 %v392, %v392
        %v489 = vmul.f32 %v393, %v393
        %v490 = vmul.f32 %v394, %v394
        %v491 = vmul.f32 %v395, %v395
        %v492 = vmul.f32 %v396, %v396
        %v493 = vmul.f32 %v397, %v397
        %v494 = vmul.f32 %v398, %v398
        %v495 = vmul.f32 %v399, %v399
        %v496 = vmul.f32 %v400, %v400
        %v497 = vmul.f32 %v401, %v401
        %v498 = vmul.f32 %v402, %v402
        %v499 = vmul.f32 %v403, %v403
        %v500 = vmul.f32 %v404, %v404
        %v501 = vmul.f32 %v405, %v405
        %v502 = vmul.f32 %v406, %v406
        %v503 = vmul.f32 %v407, %v407
        %v504 = vmul.f32 %v408, %v408
        %v505 = vmul.f32 %v409, %v409
        %v506 = vmul.f32 %v410, %v410
        %507 = vadd.xlane.f32.xlu0 %v475
        %v508 = vpop.xlane.xlu0 %507
        %509 = vadd.xlane.f32.xlu0 %v476
        %v510 = vpop.xlane.xlu0 %509
        %511 = vadd.xlane.f32.xlu0 %v477
        %v512 = vpop.xlane.xlu0 %511
        %513 = vadd.xlane.f32.xlu0 %v478
        %v514 = vpop.xlane.xlu0 %513
        %515 = vadd.xlane.f32.xlu0 %v479
        %v516 = vpop.xlane.xlu0 %515
        %517 = vadd.xlane.f32.xlu0 %v480
        %v518 = vpop.xlane.xlu0 %517
        %519 = vadd.xlane.f32.xlu0 %v481
        %v520 = vpop.xlane.xlu0 %519
        %521 = vadd.xlane.f32.xlu0 %v482
        %v522 = vpop.xlane.xlu0 %521
        %523 = vadd.xlane.f32.xlu0 %v483
        %v524 = vpop.xlane.xlu0 %523
        %525 = vadd.xlane.f32.xlu0 %v484
        %v526 = vpop.xlane.xlu0 %525
        %527 = vadd.xlane.f32.xlu0 %v485
        %v528 = vpop.xlane.xlu0 %527
        %529 = vadd.xlane.f32.xlu0 %v486
        %v530 = vpop.xlane.xlu0 %529
        %531 = vadd.xlane.f32.xlu0 %v487
        %v532 = vpop.xlane.xlu0 %531
        %533 = vadd.xlane.f32.xlu0 %v488
        %v534 = vpop.xlane.xlu0 %533
        %535 = vadd.xlane.f32.xlu0 %v489
        %v536 = vpop.xlane.xlu0 %535
        %537 = vadd.xlane.f32.xlu0 %v490
        %v538 = vpop.xlane.xlu0 %537
        %539 = vadd.xlane.f32.xlu0 %v491
        %v540 = vpop.xlane.xlu0 %539
        %541 = vadd.xlane.f32.xlu0 %v492
        %v542 = vpop.xlane.xlu0 %541
        %543 = vadd.xlane.f32.xlu0 %v493
        %v544 = vpop.xlane.xlu0 %543
        %545 = vadd.xlane.f32.xlu0 %v494
        %v546 = vpop.xlane.xlu0 %545
        %547 = vadd.xlane.f32.xlu0 %v495
        %v548 = vpop.xlane.xlu0 %547
        %549 = vadd.xlane.f32.xlu0 %v496
        %v550 = vpop.xlane.xlu0 %549
        %551 = vadd.xlane.f32.xlu0 %v497
        %v552 = vpop.xlane.xlu0 %551
        %553 = vadd.xlane.f32.xlu0 %v498
        %v554 = vpop.xlane.xlu0 %553
        %555 = vadd.xlane.f32.xlu0 %v499
        %v556 = vpop.xlane.xlu0 %555
        %557 = vadd.xlane.f32.xlu0 %v500
        %v558 = vpop.xlane.xlu0 %557
        %559 = vadd.xlane.f32.xlu0 %v501
        %v560 = vpop.xlane.xlu0 %559
        %561 = vadd.xlane.f32.xlu0 %v502
        %v562 = vpop.xlane.xlu0 %561
        %563 = vadd.xlane.f32.xlu0 %v503
        %v564 = vpop.xlane.xlu0 %563
        %565 = vadd.xlane.f32.xlu0 %v504
        %v566 = vpop.xlane.xlu0 %565
        %567 = vadd.xlane.f32.xlu0 %v505
        %v568 = vpop.xlane.xlu0 %567
        %569 = vadd.xlane.f32.xlu0 %v506
        %v570 = vpop.xlane.xlu0 %569
        %v571 = vmul.f32 %v412, 0.0078125
        %v572 = vmul.f32 %v414, 0.0078125
        %v573 = vmul.f32 %v416, 0.0078125
        %v574 = vmul.f32 %v418, 0.0078125
        %v575 = vmul.f32 %v420, 0.0078125
        %v576 = vmul.f32 %v422, 0.0078125
        %v577 = vmul.f32 %v424, 0.0078125
        %v578 = vmul.f32 %v426, 0.0078125
        %v579 = vmul.f32 %v428, 0.0078125
        %v580 = vmul.f32 %v430, 0.0078125
        %v581 = vmul.f32 %v432, 0.0078125
        %v582 = vmul.f32 %v434, 0.0078125
        %v583 = vmul.f32 %v436, 0.0078125
        %v584 = vmul.f32 %v438, 0.0078125
        %v585 = vmul.f32 %v440, 0.0078125
        %v586 = vmul.f32 %v442, 0.0078125
        %v587 = vmul.f32 %v444, 0.0078125
        %v588 = vmul.f32 %v446, 0.0078125
        %v589 = vmul.f32 %v448, 0.0078125
        %v590 = vmul.f32 %v450, 0.0078125
        %v591 = vmul.f32 %v452, 0.0078125
        %v592 = vmul.f32 %v454, 0.0078125
        %v593 = vmul.f32 %v456, 0.0078125
        %v594 = vmul.f32 %v458, 0.0078125
        %v595 = vmul.f32 %v460, 0.0078125
        %v596 = vmul.f32 %v462, 0.0078125
        %v597 = vmul.f32 %v464, 0.0078125
        %v598 = vmul.f32 %v466, 0.0078125
        %v599 = vmul.f32 %v468, 0.0078125
        %v600 = vmul.f32 %v470, 0.0078125
        %v601 = vmul.f32 %v472, 0.0078125
        %v602 = vmul.f32 %v474, 0.0078125
        %v603 = vmul.f32 %v508, 0.0078125
        %v604 = vmul.f32 %v510, 0.0078125
        %v605 = vmul.f32 %v512, 0.0078125
        %v606 = vmul.f32 %v514, 0.0078125
        %v607 = vmul.f32 %v516, 0.0078125
        %v608 = vmul.f32 %v518, 0.0078125
        %v609 = vmul.f32 %v520, 0.0078125
        %v610 = vmul.f32 %v522, 0.0078125
        %v611 = vmul.f32 %v524, 0.0078125
        %v612 = vmul.f32 %v526, 0.0078125
        %v613 = vmul.f32 %v528, 0.0078125
        %v614 = vmul.f32 %v530, 0.0078125
        %v615 = vmul.f32 %v532, 0.0078125
        %v616 = vmul.f32 %v534, 0.0078125
        %v617 = vmul.f32 %v536, 0.0078125
        %v618 = vmul.f32 %v538, 0.0078125
        %v619 = vmul.f32 %v540, 0.0078125
        %v620 = vmul.f32 %v542, 0.0078125
        %v621 = vmul.f32 %v544, 0.0078125
        %v622 = vmul.f32 %v546, 0.0078125
        %v623 = vmul.f32 %v548, 0.0078125
        %v624 = vmul.f32 %v550, 0.0078125
        %v625 = vmul.f32 %v552, 0.0078125
        %v626 = vmul.f32 %v554, 0.0078125
        %v627 = vmul.f32 %v556, 0.0078125
        %v628 = vmul.f32 %v558, 0.0078125
        %v629 = vmul.f32 %v560, 0.0078125
        %v630 = vmul.f32 %v562, 0.0078125
        %v631 = vmul.f32 %v564, 0.0078125
        %v632 = vmul.f32 %v566, 0.0078125
        %v633 = vmul.f32 %v568, 0.0078125
        %v634 = vmul.f32 %v570, 0.0078125
        %v635 = vmul.f32 %v571, %v571
        %v636 = vmul.f32 %v572, %v572
        %v637 = vmul.f32 %v573, %v573
        %v638 = vmul.f32 %v574, %v574
        %v639 = vmul.f32 %v575, %v575
        %v640 = vmul.f32 %v576, %v576
        %v641 = vmul.f32 %v577, %v577
        %v642 = vmul.f32 %v578, %v578
        %v643 = vmul.f32 %v579, %v579
        %v644 = vmul.f32 %v580, %v580
        %v645 = vmul.f32 %v581, %v581
        %v646 = vmul.f32 %v582, %v582
        %v647 = vmul.f32 %v583, %v583
        %v648 = vmul.f32 %v584, %v584
        %v649 = vmul.f32 %v585, %v585
        %v650 = vmul.f32 %v586, %v586
        %v651 = vmul.f32 %v587, %v587
        %v652 = vmul.f32 %v588, %v588
        %v653 = vmul.f32 %v589, %v589
        %v654 = vmul.f32 %v590, %v590
        %v655 = vmul.f32 %v591, %v591
        %v656 = vmul.f32 %v592, %v592
        %v657 = vmul.f32 %v593, %v593
        %v658 = vmul.f32 %v594, %v594
        %v659 = vmul.f32 %v595, %v595
        %v660 = vmul.f32 %v596, %v596
        %v661 = vmul.f32 %v597, %v597
        %v662 = vmul.f32 %v598, %v598
        %v663 = vmul.f32 %v599, %v599
        %v664 = vmul.f32 %v600, %v600
        %v665 = vmul.f32 %v601, %v601
        %v666 = vmul.f32 %v602, %v602
        %v667 = vsub.f32 %v603, %v635
        %v668 = vsub.f32 %v604, %v636
        %v669 = vsub.f32 %v605, %v637
        %v670 = vsub.f32 %v606, %v638
        %v671 = vsub.f32 %v607, %v639
        %v672 = vsub.f32 %v608, %v640
        %v673 = vsub.f32 %v609, %v641
        %v674 = vsub.f32 %v610, %v642
        %v675 = vsub.f32 %v611, %v643
        %v676 = vsub.f32 %v612, %v644
        %v677 = vsub.f32 %v613, %v645
        %v678 = vsub.f32 %v614, %v646
        %v679 = vsub.f32 %v615, %v647
        %v680 = vsub.f32 %v616, %v648
        %v681 = vsub.f32 %v617, %v649
        %v682 = vsub.f32 %v618, %v650
        %v683 = vsub.f32 %v619, %v651
        %v684 = vsub.f32 %v620, %v652
        %v685 = vsub.f32 %v621, %v653
        %v686 = vsub.f32 %v622, %v654
        %v687 = vsub.f32 %v623, %v655
        %v688 = vsub.f32 %v624, %v656
        %v689 = vsub.f32 %v625, %v657
        %v690 = vsub.f32 %v626, %v658
        %v691 = vsub.f32 %v627, %v659
        %v692 = vsub.f32 %v628, %v660
        %v693 = vsub.f32 %v629, %v661
        %v694 = vsub.f32 %v630, %v662
        %v695 = vsub.f32 %v631, %v663
        %v696 = vsub.f32 %v632, %v664
        %v697 = vsub.f32 %v633, %v665
        %v698 = vsub.f32 %v634, %v666
        %v699 = vmax.f32 %v667, 0.0
        %v700 = vmax.f32 %v668, 0.0
        %v701 = vmax.f32 %v669, 0.0
        %v702 = vmax.f32 %v670, 0.0
        %v703 = vmax.f32 %v671, 0.0
        %v704 = vmax.f32 %v672, 0.0
        %v705 = vmax.f32 %v673, 0.0
        %v706 = vmax.f32 %v674, 0.0
        %v707 = vmax.f32 %v675, 0.0
        %v708 = vmax.f32 %v676, 0.0
        %v709 = vmax.f32 %v677, 0.0
        %v710 = vmax.f32 %v678, 0.0
        %v711 = vmax.f32 %v679, 0.0
        %v712 = vmax.f32 %v680, 0.0
        %v713 = vmax.f32 %v681, 0.0
        %v714 = vmax.f32 %v682, 0.0
        %v715 = vmax.f32 %v683, 0.0
        %v716 = vmax.f32 %v684, 0.0
        %v717 = vmax.f32 %v685, 0.0
        %v718 = vmax.f32 %v686, 0.0
        %v719 = vmax.f32 %v687, 0.0
        %v720 = vmax.f32 %v688, 0.0
        %v721 = vmax.f32 %v689, 0.0
        %v722 = vmax.f32 %v690, 0.0
        %v723 = vmax.f32 %v691, 0.0
        %v724 = vmax.f32 %v692, 0.0
        %v725 = vmax.f32 %v693, 0.0
        %v726 = vmax.f32 %v694, 0.0
        %v727 = vmax.f32 %v695, 0.0
        %v728 = vmax.f32 %v696, 0.0
        %v729 = vmax.f32 %v697, 0.0
        %v730 = vmax.f32 %v698, 0.0
        %v731 = vsub.f32 %v379, %v571
        %v732 = vsub.f32 %v380, %v572
        %v733 = vsub.f32 %v381, %v573
        %v734 = vsub.f32 %v382, %v574
        %v735 = vsub.f32 %v383, %v575
        %v736 = vsub.f32 %v384, %v576
        %v737 = vsub.f32 %v385, %v577
        %v738 = vsub.f32 %v386, %v578
        %v739 = vsub.f32 %v387, %v579
        %v740 = vsub.f32 %v388, %v580
        %v741 = vsub.f32 %v389, %v581
        %v742 = vsub.f32 %v390, %v582
        %v743 = vsub.f32 %v391, %v583
        %v744 = vsub.f32 %v392, %v584
        %v745 = vsub.f32 %v393, %v585
        %v746 = vsub.f32 %v394, %v586
        %v747 = vsub.f32 %v395, %v587
        %v748 = vsub.f32 %v396, %v588
        %v749 = vsub.f32 %v397, %v589
        %v750 = vsub.f32 %v398, %v590
        %v751 = vsub.f32 %v399, %v591
        %v752 = vsub.f32 %v400, %v592
        %v753 = vsub.f32 %v401, %v593
        %v754 = vsub.f32 %v402, %v594
        %v755 = vsub.f32 %v403, %v595
        %v756 = vsub.f32 %v404, %v596
        %v757 = vsub.f32 %v405, %v597
        %v758 = vsub.f32 %v406, %v598
        %v759 = vsub.f32 %v407, %v599
        %v760 = vsub.f32 %v408, %v600
        %v761 = vsub.f32 %v409, %v601
        %v762 = vsub.f32 %v410, %v602
        %v763 = vadd.f32 %v699, 1e-05
        %v764 = vadd.f32 %v700, 1e-05
        %v765 = vadd.f32 %v701, 1e-05
        %v766 = vadd.f32 %v702, 1e-05
        %v767 = vadd.f32 %v703, 1e-05
        %v768 = vadd.f32 %v704, 1e-05
        %v769 = vadd.f32 %v705, 1e-05
        %v770 = vadd.f32 %v706, 1e-05
        %v771 = vadd.f32 %v707, 1e-05
        %v772 = vadd.f32 %v708, 1e-05
        %v773 = vadd.f32 %v709, 1e-05
        %v774 = vadd.f32 %v710, 1e-05
        %v775 = vadd.f32 %v711, 1e-05
        %v776 = vadd.f32 %v712, 1e-05
        %v777 = vadd.f32 %v713, 1e-05
        %v778 = vadd.f32 %v714, 1e-05
        %v779 = vadd.f32 %v715, 1e-05
        %v780 = vadd.f32 %v716, 1e-05
        %v781 = vadd.f32 %v717, 1e-05
        %v782 = vadd.f32 %v718, 1e-05
        %v783 = vadd.f32 %v719, 1e-05
        %v784 = vadd.f32 %v720, 1e-05
        %v785 = vadd.f32 %v721, 1e-05
        %v786 = vadd.f32 %v722, 1e-05
        %v787 = vadd.f32 %v723, 1e-05
        %v788 = vadd.f32 %v724, 1e-05
        %v789 = vadd.f32 %v725, 1e-05
        %v790 = vadd.f32 %v726, 1e-05
        %v791 = vadd.f32 %v727, 1e-05
        %v792 = vadd.f32 %v728, 1e-05
        %v793 = vadd.f32 %v729, 1e-05
        %v794 = vadd.f32 %v730, 1e-05
        %v795 = vrsqrt.pop %v763
        %v796 = vrsqrt.pop %v764
        %v797 = vrsqrt.pop %v765
        %v798 = vrsqrt.pop %v766
        %v799 = vrsqrt.pop %v767
        %v800 = vrsqrt.pop %v768
        %v801 = vrsqrt.pop %v769
        %v802 = vrsqrt.pop %v770
        %v803 = vrsqrt.pop %v771
        %v804 = vrsqrt.pop %v772
        %v805 = vrsqrt.pop %v773
        %v806 = vrsqrt.pop %v774
        %v807 = vrsqrt.pop %v775
        %v808 = vrsqrt.pop %v776
        %v809 = vrsqrt.pop %v777
        %v810 = vrsqrt.pop %v778
        %v811 = vrsqrt.pop %v779
        %v812 = vrsqrt.pop %v780
        %v813 = vrsqrt.pop %v781
        %v814 = vrsqrt.pop %v782
        %v815 = vrsqrt.pop %v783
        %v816 = vrsqrt.pop %v784
        %v817 = vrsqrt.pop %v785
        %v818 = vrsqrt.pop %v786
        %v819 = vrsqrt.pop %v787
        %v820 = vrsqrt.pop %v788
        %v821 = vrsqrt.pop %v789
        %v822 = vrsqrt.pop %v790
        %v823 = vrsqrt.pop %v791
        %v824 = vrsqrt.pop %v792
        %v825 = vrsqrt.pop %v793
        %v826 = vrsqrt.pop %v794
        %v827 = vmul.f32 %v731, %v795
        %v828 = vmul.f32 %v732, %v796
        %v829 = vmul.f32 %v733, %v797
        %v830 = vmul.f32 %v734, %v798
        %v831 = vmul.f32 %v735, %v799
        %v832 = vmul.f32 %v736, %v800
        %v833 = vmul.f32 %v737, %v801
        %v834 = vmul.f32 %v738, %v802
        %v835 = vmul.f32 %v739, %v803
        %v836 = vmul.f32 %v740, %v804
        %v837 = vmul.f32 %v741, %v805
        %v838 = vmul.f32 %v742, %v806
        %v839 = vmul.f32 %v743, %v807
        %v840 = vmul.f32 %v744, %v808
        %v841 = vmul.f32 %v745, %v809
        %v842 = vmul.f32 %v746, %v810
        %v843 = vmul.f32 %v747, %v811
        %v844 = vmul.f32 %v748, %v812
        %v845 = vmul.f32 %v749, %v813
        %v846 = vmul.f32 %v750, %v814
        %v847 = vmul.f32 %v751, %v815
        %v848 = vmul.f32 %v752, %v816
        %v849 = vmul.f32 %v753, %v817
        %v850 = vmul.f32 %v754, %v818
        %v851 = vmul.f32 %v755, %v819
        %v852 = vmul.f32 %v756, %v820
        %v853 = vmul.f32 %v757, %v821
        %v854 = vmul.f32 %v758, %v822
        %v855 = vmul.f32 %v759, %v823
        %v856 = vmul.f32 %v760, %v824
        %v857 = vmul.f32 %v761, %v825
        %v858 = vmul.f32 %v762, %v826
        %v859 = vld [vmem:[#allocation5] sm:$0x1]
        %v861 = vlaneseq
        %v862 = vshrl.u32 %v861, 7
        %v863 = vsub.s32 0, %v862
        %v864 = vrot.slane %v859, %v863
        %v866 = vmul.f32 %v827, %v864
        %v867 = vmul.f32 %v828, %v864
        %v868 = vmul.f32 %v829, %v864
        %v869 = vmul.f32 %v830, %v864
        %v870 = vmul.f32 %v831, %v864
        %v871 = vmul.f32 %v832, %v864
        %v872 = vmul.f32 %v833, %v864
        %v873 = vmul.f32 %v834, %v864
        %v874 = vmul.f32 %v835, %v864
        %v875 = vmul.f32 %v836, %v864
        %v876 = vmul.f32 %v837, %v864
        %v877 = vmul.f32 %v838, %v864
        %v878 = vmul.f32 %v839, %v864
        %v879 = vmul.f32 %v840, %v864
        %v880 = vmul.f32 %v841, %v864
        %v881 = vmul.f32 %v842, %v864
        %v882 = vmul.f32 %v843, %v864
        %v883 = vmul.f32 %v844, %v864
        %v884 = vmul.f32 %v845, %v864
        %v885 = vmul.f32 %v846, %v864
        %v886 = vmul.f32 %v847, %v864
        %v887 = vmul.f32 %v848, %v864
        %v888 = vmul.f32 %v849, %v864
        %v889 = vmul.f32 %v850, %v864
        %v890 = vmul.f32 %v851, %v864
        %v891 = vmul.f32 %v852, %v864
        %v892 = vmul.f32 %v853, %v864
        %v893 = vmul.f32 %v854, %v864
        %v894 = vmul.f32 %v855, %v864
        %v895 = vmul.f32 %v856, %v864
        %v896 = vmul.f32 %v857, %v864
        %v897 = vmul.f32 %v858, %v864
        %v898 = vld [vmem:[#allocation7] sm:$0x1]
        %v900 = vlaneseq
        %v901 = vshrl.u32 %v900, 7
        %v902 = vsub.s32 0, %v901
        %v903 = vrot.slane %v898, %v902
        %v905 = vadd.f32 %v866, %v903
        %v906 = vadd.f32 %v867, %v903
        %v907 = vadd.f32 %v868, %v903
        %v908 = vadd.f32 %v869, %v903
        %v909 = vadd.f32 %v870, %v903
        %v910 = vadd.f32 %v871, %v903
        %v911 = vadd.f32 %v872, %v903
        %v912 = vadd.f32 %v873, %v903
        %v913 = vadd.f32 %v874, %v903
        %v914 = vadd.f32 %v875, %v903
        %v915 = vadd.f32 %v876, %v903
        %v916 = vadd.f32 %v877, %v903
        %v917 = vadd.f32 %v878, %v903
        %v918 = vadd.f32 %v879, %v903
        %v919 = vadd.f32 %v880, %v903
        %v920 = vadd.f32 %v881, %v903
        %v921 = vadd.f32 %v882, %v903
        %v922 = vadd.f32 %v883, %v903
        %v923 = vadd.f32 %v884, %v903
        %v924 = vadd.f32 %v885, %v903
        %v925 = vadd.f32 %v886, %v903
        %v926 = vadd.f32 %v887, %v903
        %v927 = vadd.f32 %v888, %v903
        %v928 = vadd.f32 %v889, %v903
        %v929 = vadd.f32 %v890, %v903
        %v930 = vadd.f32 %v891, %v903
        %v931 = vadd.f32 %v892, %v903
        %v932 = vadd.f32 %v893, %v903
        %v933 = vadd.f32 %v894, %v903
        %v934 = vadd.f32 %v895, %v903
        %v935 = vadd.f32 %v896, %v903
        %v936 = vadd.f32 %v897, %v903
        %v937 = vpack.c.bf16 %v906, %v905
        %v938 = vpack.c.bf16 %v908, %v907
        %v939 = vpack.c.bf16 %v910, %v909
        %v940 = vpack.c.bf16 %v912, %v911
        %v941 = vpack.c.bf16 %v914, %v913
        %v942 = vpack.c.bf16 %v916, %v915
        %v943 = vpack.c.bf16 %v918, %v917
        %v944 = vpack.c.bf16 %v920, %v919
        %v945 = vpack.c.bf16 %v922, %v921
        %v946 = vpack.c.bf16 %v924, %v923
        %v947 = vpack.c.bf16 %v926, %v925
        %v948 = vpack.c.bf16 %v928, %v927
        %v949 = vpack.c.bf16 %v930, %v929
        %v950 = vpack.c.bf16 %v932, %v931
        %v951 = vpack.c.bf16 %v934, %v933
        %v952 = vpack.c.bf16 %v936, %v935
        %v953 = vld [vmem:[#allocation8] sm:$0xff]
        %v954 = vld [vmem:[#allocation8 + $0x8] sm:$0xff]
        %v955 = vld [vmem:[#allocation8 + $0x10] sm:$0xff]
        %v956 = vld [vmem:[#allocation8 + $0x18] sm:$0xff]
        %v957 = vld [vmem:[#allocation8 + $0x20] sm:$0xff]
        %v958 = vld [vmem:[#allocation8 + $0x28] sm:$0xff]
        %v959 = vld [vmem:[#allocation8 + $0x30] sm:$0xff]
        %v960 = vld [vmem:[#allocation8 + $0x38] sm:$0xff]
        %v961 = vld [vmem:[#allocation8 + $0x40] sm:$0xff]
        %v962 = vld [vmem:[#allocation8 + $0x48] sm:$0xff]
        %v963 = vld [vmem:[#allocation8 + $0x50] sm:$0xff]
        %v964 = vld [vmem:[#allocation8 + $0x58] sm:$0xff]
        %v965 = vld [vmem:[#allocation8 + $0x60] sm:$0xff]
        %v966 = vld [vmem:[#allocation8 + $0x68] sm:$0xff]
        %v967 = vld [vmem:[#allocation8 + $0x70] sm:$0xff]
        %v968 = vld [vmem:[#allocation8 + $0x78] sm:$0xff]
        %v969 = vld [vmem:[#allocation8 + $0x80] sm:$0xff]
        %v970 = vld [vmem:[#allocation8 + $0x88] sm:$0xff]
        %v971 = vld [vmem:[#allocation8 + $0x90] sm:$0xff]
        %v972 = vld [vmem:[#allocation8 + $0x98] sm:$0xff]
        %v973 = vld [vmem:[#allocation8 + $0xa0] sm:$0xff]
        %v974 = vld [vmem:[#allocation8 + $0xa8] sm:$0xff]
        %v975 = vld [vmem:[#allocation8 + $0xb0] sm:$0xff]
        %v976 = vld [vmem:[#allocation8 + $0xb8] sm:$0xff]
        %v977 = vld [vmem:[#allocation8 + $0xc0] sm:$0xff]
        %v978 = vld [vmem:[#allocation8 + $0xc8] sm:$0xff]
        %v979 = vld [vmem:[#allocation8 + $0xd0] sm:$0xff]
        %v980 = vld [vmem:[#allocation8 + $0xd8] sm:$0xff]
        %v981 = vld [vmem:[#allocation8 + $0xe0] sm:$0xff]
        %v982 = vld [vmem:[#allocation8 + $0xe8] sm:$0xff]
        %v983 = vld [vmem:[#allocation8 + $0xf0] sm:$0xff]
        %v984 = vld [vmem:[#allocation8 + $0xf8] sm:$0xff]
        %v985 = vld [vmem:[#allocation8 + $0x100] sm:$0xff]
        %v986 = vld [vmem:[#allocation8 + $0x108] sm:$0xff]
        %v987 = vld [vmem:[#allocation8 + $0x110] sm:$0xff]
        %v988 = vld [vmem:[#allocation8 + $0x118] sm:$0xff]
        %v989 = vld [vmem:[#allocation8 + $0x120] sm:$0xff]
        %v990 = vld [vmem:[#allocation8 + $0x128] sm:$0xff]
        %v991 = vld [vmem:[#allocation8 + $0x130] sm:$0xff]
        %v992 = vld [vmem:[#allocation8 + $0x138] sm:$0xff]
        %v993 = vld [vmem:[#allocation8 + $0x140] sm:$0xff]
        %v994 = vld [vmem:[#allocation8 + $0x148] sm:$0xff]
        %v995 = vld [vmem:[#allocation8 + $0x150] sm:$0xff]
        %v996 = vld [vmem:[#allocation8 + $0x158] sm:$0xff]
        %v997 = vld [vmem:[#allocation8 + $0x160] sm:$0xff]
        %v998 = vld [vmem:[#allocation8 + $0x168] sm:$0xff]
        %v999 = vld [vmem:[#allocation8 + $0x170] sm:$0xff]
        %v1000 = vld [vmem:[#allocation8 + $0x178] sm:$0xff]
        %v1001 = vld [vmem:[#allocation8 + $0x180] sm:$0xff]
        %v1002 = vld [vmem:[#allocation8 + $0x188] sm:$0xff]
        %v1003 = vld [vmem:[#allocation8 + $0x190] sm:$0xff]
        %v1004 = vld [vmem:[#allocation8 + $0x198] sm:$0xff]
        %v1005 = vld [vmem:[#allocation8 + $0x1a0] sm:$0xff]
        %v1006 = vld [vmem:[#allocation8 + $0x1a8] sm:$0xff]
        %v1007 = vld [vmem:[#allocation8 + $0x1b0] sm:$0xff]
        %v1008 = vld [vmem:[#allocation8 + $0x1b8] sm:$0xff]
        %v1009 = vld [vmem:[#allocation8 + $0x1c0] sm:$0xff]
        %v1010 = vld [vmem:[#allocation8 + $0x1c8] sm:$0xff]
        %v1011 = vld [vmem:[#allocation8 + $0x1d0] sm:$0xff]
        %v1012 = vld [vmem:[#allocation8 + $0x1d8] sm:$0xff]
        %v1013 = vld [vmem:[#allocation8 + $0x1e0] sm:$0xff]
        %v1014 = vld [vmem:[#allocation8 + $0x1e8] sm:$0xff]
        %v1015 = vld [vmem:[#allocation8 + $0x1f0] sm:$0xff]
        %v1016 = vld [vmem:[#allocation8 + $0x1f8] sm:$0xff]
        %v1017 = vld [vmem:[#allocation10] sm:$0xff]
        %v1019 = vlaneseq
        %v1020 = vshrl.u32 %v1019, 7
        %v1021 = vsub.s32 0, %v1020
        %v1022 = vrot.slane %v1017, %v1021
        %v1023 = vlaneseq
        %v1024 = vshrl.u32 %v1023, 7
        %v1025 = vsub.s32 1, %v1024
        %v1026 = vrot.slane %v1017, %v1025
        %v1027 = vlaneseq
        %v1028 = vshrl.u32 %v1027, 7
        %v1029 = vsub.s32 2, %v1028
        %v1030 = vrot.slane %v1017, %v1029
        %v1031 = vlaneseq
        %v1032 = vshrl.u32 %v1031, 7
        %v1033 = vsub.s32 3, %v1032
        %v1034 = vrot.slane %v1017, %v1033
        %v1035 = vlaneseq
        %v1036 = vshrl.u32 %v1035, 7
        %v1037 = vsub.s32 4, %v1036
        %v1038 = vrot.slane %v1017, %v1037
        %v1039 = vlaneseq
        %v1040 = vshrl.u32 %v1039, 7
        %v1041 = vsub.s32 5, %v1040
        %v1042 = vrot.slane %v1017, %v1041
        %v1043 = vlaneseq
        %v1044 = vshrl.u32 %v1043, 7
        %v1045 = vsub.s32 6, %v1044
        %v1046 = vrot.slane %v1017, %v1045
        %v1047 = vlaneseq
        %v1048 = vshrl.u32 %v1047, 7
        %v1049 = vsub.s32 7, %v1048
        %v1050 = vrot.slane %v1017, %v1049
        %v1123 = vunpack.c.l.b16 %v953
        %v1124 = vunpack.c.h.b16 %v953
        %v1125 = vunpack.c.l.b16 %v954
        %v1126 = vunpack.c.h.b16 %v954
        %v1127 = vunpack.c.l.b16 %v955
        %v1128 = vunpack.c.h.b16 %v955
        %v1129 = vunpack.c.l.b16 %v956
        %v1130 = vunpack.c.h.b16 %v956
        %v1131 = vunpack.c.l.b16 %v957
        %v1132 = vunpack.c.h.b16 %v957
        %v1133 = vunpack.c.l.b16 %v958
        %v1134 = vunpack.c.h.b16 %v958
        %v1135 = vunpack.c.l.b16 %v959
        %v1136 = vunpack.c.h.b16 %v959
        %v1137 = vunpack.c.l.b16 %v960
        %v1138 = vunpack.c.h.b16 %v960
        %v1139 = vunpack.c.l.b16 %v961
        %v1140 = vunpack.c.h.b16 %v961
        %v1141 = vunpack.c.l.b16 %v962
        %v1142 = vunpack.c.h.b16 %v962
        %v1143 = vunpack.c.l.b16 %v963
        %v1144 = vunpack.c.h.b16 %v963
        %v1145 = vunpack.c.l.b16 %v964
        %v1146 = vunpack.c.h.b16 %v964
        %v1147 = vunpack.c.l.b16 %v965
        %v1148 = vunpack.c.h.b16 %v965
        %v1149 = vunpack.c.l.b16 %v966
        %v1150 = vunpack.c.h.b16 %v966
        %v1151 = vunpack.c.l.b16 %v967
        %v1152 = vunpack.c.h.b16 %v967
        %v1153 = vunpack.c.l.b16 %v968
        %v1154 = vunpack.c.h.b16 %v968
        %v1155 = vunpack.c.l.b16 %v969
        %v1156 = vunpack.c.h.b16 %v969
        %v1157 = vunpack.c.l.b16 %v970
        %v1158 = vunpack.c.h.b16 %v970
        %v1159 = vunpack.c.l.b16 %v971
        %v1160 = vunpack.c.h.b16 %v971
        %v1161 = vunpack.c.l.b16 %v972
        %v1162 = vunpack.c.h.b16 %v972
        %v1163 = vunpack.c.l.b16 %v973
        %v1164 = vunpack.c.h.b16 %v973
        %v1165 = vunpack.c.l.b16 %v974
        %v1166 = vunpack.c.h.b16 %v974
        %v1167 = vunpack.c.l.b16 %v975
        %v1168 = vunpack.c.h.b16 %v975
        %v1169 = vunpack.c.l.b16 %v976
        %v1170 = vunpack.c.h.b16 %v976
        %v1171 = vunpack.c.l.b16 %v977
        %v1172 = vunpack.c.h.b16 %v977
        %v1173 = vunpack.c.l.b16 %v978
        %v1174 = vunpack.c.h.b16 %v978
        %v1175 = vunpack.c.l.b16 %v979
        %v1176 = vunpack.c.h.b16 %v979
        %v1177 = vunpack.c.l.b16 %v980
        %v1178 = vunpack.c.h.b16 %v980
        %v1179 = vunpack.c.l.b16 %v981
        %v1180 = vunpack.c.h.b16 %v981
        %v1181 = vunpack.c.l.b16 %v982
        %v1182 = vunpack.c.h.b16 %v982
        %v1183 = vunpack.c.l.b16 %v983
        %v1184 = vunpack.c.h.b16 %v983
        %v1185 = vunpack.c.l.b16 %v984
        %v1186 = vunpack.c.h.b16 %v984
        %v1187 = vunpack.c.l.b16 %v985
        %v1188 = vunpack.c.h.b16 %v985
        %v1189 = vunpack.c.l.b16 %v986
        %v1190 = vunpack.c.h.b16 %v986
        %v1191 = vunpack.c.l.b16 %v987
        %v1192 = vunpack.c.h.b16 %v987
        %v1193 = vunpack.c.l.b16 %v988
        %v1194 = vunpack.c.h.b16 %v988
        %v1195 = vunpack.c.l.b16 %v989
        %v1196 = vunpack.c.h.b16 %v989
        %v1197 = vunpack.c.l.b16 %v990
        %v1198 = vunpack.c.h.b16 %v990
        %v1199 = vunpack.c.l.b16 %v991
        %v1200 = vunpack.c.h.b16 %v991
        %v1201 = vunpack.c.l.b16 %v992
        %v1202 = vunpack.c.h.b16 %v992
        %v1203 = vunpack.c.l.b16 %v993
        %v1204 = vunpack.c.h.b16 %v993
        %v1205 = vunpack.c.l.b16 %v994
        %v1206 = vunpack.c.h.b16 %v994
        %v1207 = vunpack.c.l.b16 %v995
        %v1208 = vunpack.c.h.b16 %v995
        %v1209 = vunpack.c.l.b16 %v996
        %v1210 = vunpack.c.h.b16 %v996
        %v1211 = vunpack.c.l.b16 %v997
        %v1212 = vunpack.c.h.b16 %v997
        %v1213 = vunpack.c.l.b16 %v998
        %v1214 = vunpack.c.h.b16 %v998
        %v1215 = vunpack.c.l.b16 %v999
        %v1216 = vunpack.c.h.b16 %v999
        %v1217 = vunpack.c.l.b16 %v1000
        %v1218 = vunpack.c.h.b16 %v1000
        %v1219 = vunpack.c.l.b16 %v1001
        %v1220 = vunpack.c.h.b16 %v1001
        %v1221 = vunpack.c.l.b16 %v1002
        %v1222 = vunpack.c.h.b16 %v1002
        %v1223 = vunpack.c.l.b16 %v1003
        %v1224 = vunpack.c.h.b16 %v1003
        %v1225 = vunpack.c.l.b16 %v1004
        %v1226 = vunpack.c.h.b16 %v1004
        %v1227 = vunpack.c.l.b16 %v1005
        %v1228 = vunpack.c.h.b16 %v1005
        %v1229 = vunpack.c.l.b16 %v1006
        %v1230 = vunpack.c.h.b16 %v1006
        %v1231 = vunpack.c.l.b16 %v1007
        %v1232 = vunpack.c.h.b16 %v1007
        %v1233 = vunpack.c.l.b16 %v1008
        %v1234 = vunpack.c.h.b16 %v1008
        %v1235 = vunpack.c.l.b16 %v1009
        %v1236 = vunpack.c.h.b16 %v1009
        %v1237 = vunpack.c.l.b16 %v1010
        %v1238 = vunpack.c.h.b16 %v1010
        %v1239 = vunpack.c.l.b16 %v1011
        %v1240 = vunpack.c.h.b16 %v1011
        %v1241 = vunpack.c.l.b16 %v1012
        %v1242 = vunpack.c.h.b16 %v1012
        %v1243 = vunpack.c.l.b16 %v1013
        %v1244 = vunpack.c.h.b16 %v1013
        %v1245 = vunpack.c.l.b16 %v1014
        %v1246 = vunpack.c.h.b16 %v1014
        %v1247 = vunpack.c.l.b16 %v1015
        %v1248 = vunpack.c.h.b16 %v1015
        %v1249 = vunpack.c.l.b16 %v1016
        %v1250 = vunpack.c.h.b16 %v1016
        %v1251 = vpack.c.b16 %v1131, %v1123
        %v1252 = vpack.c.b16 %v1132, %v1124
        %v1253 = vpack.c.b16 %v1133, %v1125
        %v1254 = vpack.c.b16 %v1134, %v1126
        %v1255 = vpack.c.b16 %v1135, %v1127
        %v1256 = vpack.c.b16 %v1136, %v1128
        %v1257 = vpack.c.b16 %v1137, %v1129
        %v1258 = vpack.c.b16 %v1138, %v1130
        %v1259 = vpack.c.b16 %v1147, %v1139
        %v1260 = vpack.c.b16 %v1148, %v1140
        %v1261 = vpack.c.b16 %v1149, %v1141
        %v1262 = vpack.c.b16 %v1150, %v1142
        %v1263 = vpack.c.b16 %v1151, %v1143
        %v1264 = vpack.c.b16 %v1152, %v1144
        %v1265 = vpack.c.b16 %v1153, %v1145
        %v1266 = vpack.c.b16 %v1154, %v1146
        %v1267 = vpack.c.b16 %v1163, %v1155
        %v1268 = vpack.c.b16 %v1164, %v1156
        %v1269 = vpack.c.b16 %v1165, %v1157
        %v1270 = vpack.c.b16 %v1166, %v1158
        %v1271 = vpack.c.b16 %v1167, %v1159
        %v1272 = vpack.c.b16 %v1168, %v1160
        %v1273 = vpack.c.b16 %v1169, %v1161
        %v1274 = vpack.c.b16 %v1170, %v1162
        %v1275 = vpack.c.b16 %v1179, %v1171
        %v1276 = vpack.c.b16 %v1180, %v1172
        %v1277 = vpack.c.b16 %v1181, %v1173
        %v1278 = vpack.c.b16 %v1182, %v1174
        %v1279 = vpack.c.b16 %v1183, %v1175
        %v1280 = vpack.c.b16 %v1184, %v1176
        %v1281 = vpack.c.b16 %v1185, %v1177
        %v1282 = vpack.c.b16 %v1186, %v1178
        %v1283 = vpack.c.b16 %v1195, %v1187
        %v1284 = vpack.c.b16 %v1196, %v1188
        %v1285 = vpack.c.b16 %v1197, %v1189
        %v1286 = vpack.c.b16 %v1198, %v1190
        %v1287 = vpack.c.b16 %v1199, %v1191
        %v1288 = vpack.c.b16 %v1200, %v1192
        %v1289 = vpack.c.b16 %v1201, %v1193
        %v1290 = vpack.c.b16 %v1202, %v1194
        %v1291 = vpack.c.b16 %v1211, %v1203
        %v1292 = vpack.c.b16 %v1212, %v1204
        %v1293 = vpack.c.b16 %v1213, %v1205
        %v1294 = vpack.c.b16 %v1214, %v1206
        %v1295 = vpack.c.b16 %v1215, %v1207
        %v1296 = vpack.c.b16 %v1216, %v1208
        %v1297 = vpack.c.b16 %v1217, %v1209
        %v1298 = vpack.c.b16 %v1218, %v1210
        %v1299 = vpack.c.b16 %v1227, %v1219
        %v1300 = vpack.c.b16 %v1228, %v1220
        %v1301 = vpack.c.b16 %v1229, %v1221
        %v1302 = vpack.c.b16 %v1230, %v1222
        %v1303 = vpack.c.b16 %v1231, %v1223
        %v1304 = vpack.c.b16 %v1232, %v1224
        %v1305 = vpack.c.b16 %v1233, %v1225
        %v1306 = vpack.c.b16 %v1234, %v1226
        %v1307 = vpack.c.b16 %v1243, %v1235
        %v1308 = vpack.c.b16 %v1244, %v1236
        %v1309 = vpack.c.b16 %v1245, %v1237
        %v1310 = vpack.c.b16 %v1246, %v1238
        %v1311 = vpack.c.b16 %v1247, %v1239
        %v1312 = vpack.c.b16 %v1248, %v1240
        %v1313 = vpack.c.b16 %v1249, %v1241
        %v1314 = vpack.c.b16 %v1250, %v1242
        %1379 = vmatprep.subr.bf16.mxu0 %v1252
        %1380 = vmatpush1.bf16.msra.mxu0 %v1251
        %1381 = vmatprep.subr.bf16.mxu0 %v1260
        %1382 = vmatpush1.bf16.msra.mxu0 %v1259
        %1383 = vmatprep.subr.bf16.mxu0 %v1268
        %1384 = vmatpush1.bf16.msra.mxu0 %v1267
        %1385 = vmatprep.subr.bf16.mxu0 %v1276
        %1386 = vmatpush1.bf16.msra.mxu0 %v1275
        %1387 = vmatprep.subr.bf16.mxu0 %v1284
        %1388 = vmatpush1.bf16.msra.mxu0 %v1283
        %1389 = vmatprep.subr.bf16.mxu0 %v1292
        %1390 = vmatpush1.bf16.msra.mxu0 %v1291
        %1391 = vmatprep.subr.bf16.mxu0 %v1300
        %1392 = vmatpush1.bf16.msra.mxu0 %v1299
        %1393 = vmatprep.subr.bf16.mxu0 %v1308
        %1394 = vmatpush1.bf16.msra.mxu0 %v1307
        %1395 = vmatprep.subr.bf16.mxu0 0
        %1396 = vmatpush1.bf16.msra.mxu0 0
        %1397 = vmatprep.subr.bf16.mxu0 0
        %1398 = vmatpush1.bf16.msra.mxu0 0
        %1399 = vmatprep.subr.bf16.mxu0 0
        %1400 = vmatpush1.bf16.msra.mxu0 0
        %1401 = vmatprep.subr.bf16.mxu0 0
        %1402 = vmatpush1.bf16.msra.mxu0 0
        %1403 = vmatprep.subr.bf16.mxu0 0
        %1404 = vmatpush1.bf16.msra.mxu0 0
        %1405 = vmatprep.subr.bf16.mxu0 0
        %1406 = vmatpush1.bf16.msra.mxu0 0
        %1407 = vmatprep.subr.bf16.mxu0 0
        %1408 = vmatpush1.bf16.msra.mxu0 0
        %1409 = vmatprep.subr.bf16.mxu0 0
        %1410 = vmatpush1.bf16.msra.mxu0 0
        %1411 = vmatprep.mubr.bf16.mxu0 0
        %1412 = vmatmul.mubr.bf16.gmra.mrb[0].mxu0 %v937
        %v1413 = vpop.f32.mrb[0].mxu0
        %v1414 = vadd.f32 %v1022, %v1413
        %v1415 = vpop.f32.mrb[0].mxu0
        %v1416 = vadd.f32 %v1026, %v1415
        %v1417 = vpop.f32.mrb[0].mxu0
        %v1418 = vadd.f32 %v1022, %v1417
        %v1419 = vpop.f32.mrb[0].mxu0
        %v1420 = vadd.f32 %v1026, %v1419
        %1421 = vmatprep.mubr.bf16.mxu0 0
        %1422 = vmatmul.mubr.bf16.gmra.mrb[0].mxu0 %v938
        %v1423 = vpop.f32.mrb[0].mxu0
        %v1424 = vadd.f32 %v1022, %v1423
        %v1425 = vpop.f32.mrb[0].mxu0
        %v1426 = vadd.f32 %v1026, %v1425
        %v1427 = vpop.f32.mrb[0].mxu0
        %v1428 = vadd.f32 %v1022, %v1427
        %v1429 = vpop.f32.mrb[0].mxu0
        %v1430 = vadd.f32 %v1026, %v1429
        %1431 = vmatprep.mubr.bf16.mxu0 0
        %1432 = vmatmul.mubr.bf16.gmra.mrb[0].mxu0 %v939
        %v1433 = vpop.f32.mrb[0].mxu0
        %v1434 = vadd.f32 %v1022, %v1433
        %v1435 = vpop.f32.mrb[0].mxu0
        %v1436 = vadd.f32 %v1026, %v1435
        %v1437 = vpop.f32.mrb[0].mxu0
        %v1438 = vadd.f32 %v1022, %v1437
        %v1439 = vpop.f32.mrb[0].mxu0
        %v1440 = vadd.f32 %v1026, %v1439
        %1441 = vmatprep.mubr.bf16.mxu0 0
        %1442 = vmatmul.mubr.bf16.gmra.mrb[0].mxu0 %v940
        %v1443 = vpop.f32.mrb[0].mxu0
        %v1444 = vadd.f32 %v1022, %v1443
        %v1445 = vpop.f32.mrb[0].mxu0
        %v1446 = vadd.f32 %v1026, %v1445
        %v1447 = vpop.f32.mrb[0].mxu0
        %v1448 = vadd.f32 %v1022, %v1447
        %v1449 = vpop.f32.mrb[0].mxu0
        %v1450 = vadd.f32 %v1026, %v1449
        %1451 = vmatprep.mubr.bf16.mxu0 0
        %1452 = vmatmul.mubr.bf16.gmra.mrb[0].mxu0 %v941
        %v1453 = vpop.f32.mrb[0].mxu0
        %v1454 = vadd.f32 %v1022, %v1453
        %v1455 = vpop.f32.mrb[0].mxu0
        %v1456 = vadd.f32 %v1026, %v1455
        %v1457 = vpop.f32.mrb[0].mxu0
        %v1458 = vadd.f32 %v1022, %v1457
        %v1459 = vpop.f32.mrb[0].mxu0
        %v1460 = vadd.f32 %v1026, %v1459
        %1461 = vmatprep.mubr.bf16.mxu0 0
        %1462 = vmatmul.mubr.bf16.gmra.mrb[0].mxu0 %v942
        %v1463 = vpop.f32.mrb[0].mxu0
        %v1464 = vadd.f32 %v1022, %v1463
        %v1465 = vpop.f32.mrb[0].mxu0
        %v1466 = vadd.f32 %v1026, %v1465
        %v1467 = vpop.f32.mrb[0].mxu0
        %v1468 = vadd.f32 %v1022, %v1467
        %v1469 = vpop.f32.mrb[0].mxu0
        %v1470 = vadd.f32 %v1026, %v1469
        %1471 = vmatprep.mubr.bf16.mxu0 0
        %1472 = vmatmul.mubr.bf16.gmra.mrb[0].mxu0 %v943
        %v1473 = vpop.f32.mrb[0].mxu0
        %v1474 = vadd.f32 %v1022, %v1473
        %v1475 = vpop.f32.mrb[0].mxu0
        %v1476 = vadd.f32 %v1026, %v1475
        %v1477 = vpop.f32.mrb[0].mxu0
        %v1478 = vadd.f32 %v1022, %v1477
        %v1479 = vpop.f32.mrb[0].mxu0
        %v1480 = vadd.f32 %v1026, %v1479
        %1481 = vmatprep.mubr.bf16.mxu0 0
        %1482 = vmatmul.mubr.bf16.gmra.mrb[0].mxu0 %v944
        %v1483 = vpop.f32.mrb[0].mxu0
        %v1484 = vadd.f32 %v1022, %v1483
        %v1485 = vpop.f32.mrb[0].mxu0
        %v1486 = vadd.f32 %v1026, %v1485
        %v1487 = vpop.f32.mrb[0].mxu0
        %v1488 = vadd.f32 %v1022, %v1487
        %v1489 = vpop.f32.mrb[0].mxu0
        %v1490 = vadd.f32 %v1026, %v1489
        %1491 = vmatprep.mubr.bf16.mxu0 0
        %1492 = vmatmul.mubr.bf16.gmra.mrb[0].mxu0 %v945
        %v1493 = vpop.f32.mrb[0].mxu0
        %v1494 = vadd.f32 %v1022, %v1493
        %v1495 = vpop.f32.mrb[0].mxu0
        %v1496 = vadd.f32 %v1026, %v1495
        %v1497 = vpop.f32.mrb[0].mxu0
        %v1498 = vadd.f32 %v1022, %v1497
        %v1499 = vpop.f32.mrb[0].mxu0
        %v1500 = vadd.f32 %v1026, %v1499
        %1501 = vmatprep.mubr.bf16.mxu0 0
        %1502 = vmatmul.mubr.bf16.gmra.mrb[0].mxu0 %v946
        %v1503 = vpop.f32.mrb[0].mxu0
        %v1504 = vadd.f32 %v1022, %v1503
        %v1505 = vpop.f32.mrb[0].mxu0
        %v1506 = vadd.f32 %v1026, %v1505
        %v1507 = vpop.f32.mrb[0].mxu0
        %v1508 = vadd.f32 %v1022, %v1507
        %v1509 = vpop.f32.mrb[0].mxu0
        %v1510 = vadd.f32 %v1026, %v1509
        %1511 = vmatprep.mubr.bf16.mxu0 0
        %1512 = vmatmul.mubr.bf16.gmra.mrb[0].mxu0 %v947
        %v1513 = vpop.f32.mrb[0].mxu0
        %v1514 = vadd.f32 %v1022, %v1513
        %v1515 = vpop.f32.mrb[0].mxu0
        %v1516 = vadd.f32 %v1026, %v1515
        %v1517 = vpop.f32.mrb[0].mxu0
        %v1518 = vadd.f32 %v1022, %v1517
        %v1519 = vpop.f32.mrb[0].mxu0
        %v1520 = vadd.f32 %v1026, %v1519
        %1521 = vmatprep.mubr.bf16.mxu0 0
        %1522 = vmatmul.mubr.bf16.gmra.mrb[0].mxu0 %v948
        %v1523 = vpop.f32.mrb[0].mxu0
        %v1524 = vadd.f32 %v1022, %v1523
        %v1525 = vpop.f32.mrb[0].mxu0
        %v1526 = vadd.f32 %v1026, %v1525
        %v1527 = vpop.f32.mrb[0].mxu0
        %v1528 = vadd.f32 %v1022, %v1527
        %v1529 = vpop.f32.mrb[0].mxu0
        %v1530 = vadd.f32 %v1026, %v1529
        %1531 = vmatprep.mubr.bf16.mxu0 0
        %1532 = vmatmul.mubr.bf16.gmra.mrb[0].mxu0 %v949
        %v1533 = vpop.f32.mrb[0].mxu0
        %v1534 = vadd.f32 %v1022, %v1533
        %v1535 = vpop.f32.mrb[0].mxu0
        %v1536 = vadd.f32 %v1026, %v1535
        %v1537 = vpop.f32.mrb[0].mxu0
        %v1538 = vadd.f32 %v1022, %v1537
        %v1539 = vpop.f32.mrb[0].mxu0
        %v1540 = vadd.f32 %v1026, %v1539
        %1541 = vmatprep.mubr.bf16.mxu0 0
        %1542 = vmatmul.mubr.bf16.gmra.mrb[0].mxu0 %v950
        %v1543 = vpop.f32.mrb[0].mxu0
        %v1544 = vadd.f32 %v1022, %v1543
        %v1545 = vpop.f32.mrb[0].mxu0
        %v1546 = vadd.f32 %v1026, %v1545
        %v1547 = vpop.f32.mrb[0].mxu0
        %v1548 = vadd.f32 %v1022, %v1547
        %v1549 = vpop.f32.mrb[0].mxu0
        %v1550 = vadd.f32 %v1026, %v1549
        %1551 = vmatprep.mubr.bf16.mxu0 0
        %1552 = vmatmul.mubr.bf16.gmra.mrb[0].mxu0 %v951
        %v1553 = vpop.f32.mrb[0].mxu0
        %v1554 = vadd.f32 %v1022, %v1553
        %v1555 = vpop.f32.mrb[0].mxu0
        %v1556 = vadd.f32 %v1026, %v1555
        %v1557 = vpop.f32.mrb[0].mxu0
        %v1558 = vadd.f32 %v1022, %v1557
        %v1559 = vpop.f32.mrb[0].mxu0
        %v1560 = vadd.f32 %v1026, %v1559
        %1561 = vmatprep.mubr.bf16.mxu0 0
        %1562 = vmatmul.mubr.bf16.gmra.mrb[0].mxu0 %v952
        %v1563 = vpop.f32.mrb[0].mxu0
        %v1564 = vadd.f32 %v1022, %v1563
        %v1565 = vpop.f32.mrb[0].mxu0
        %v1566 = vadd.f32 %v1026, %v1565
        %v1567 = vpop.f32.mrb[0].mxu0
        %v1568 = vadd.f32 %v1022, %v1567
        %v1569 = vpop.f32.mrb[0].mxu0
        %v1570 = vadd.f32 %v1026, %v1569
        %1571 = vdwg.mxu0
        %1572 = vmatprep.subr.bf16.mxu0 %v1254
        %1573 = vmatpush1.bf16.msra.mxu0 %v1253
        %1574 = vmatprep.subr.bf16.mxu0 %v1262
        %1575 = vmatpush1.bf16.msra.mxu0 %v1261
        %1576 = vmatprep.subr.bf16.mxu0 %v1270
        %1577 = vmatpush1.bf16.msra.mxu0 %v1269
        %1578 = vmatprep.subr.bf16.mxu0 %v1278
        %1579 = vmatpush1.bf16.msra.mxu0 %v1277
        %1580 = vmatprep.subr.bf16.mxu0 %v1286
        %1581 = vmatpush1.bf16.msra.mxu0 %v1285
        %1582 = vmatprep.subr.bf16.mxu0 %v1294
        %1583 = vmatpush1.bf16.msra.mxu0 %v1293
        %1584 = vmatprep.subr.bf16.mxu0 %v1302
        %1585 = vmatpush1.bf16.msra.mxu0 %v1301
        %1586 = vmatprep.subr.bf16.mxu0 %v1310
        %1587 = vmatpush1.bf16.msra.mxu0 %v1309
        %1588 = vmatprep.subr.bf16.mxu0 0
        %1589 = vmatpush1.bf16.msra.mxu0 0
        %1590 = vmatprep.subr.bf16.mxu0 0
        %1591 = vmatpush1.bf16.msra.mxu0 0
        %1592 = vmatprep.subr.bf16.mxu0 0
        %1593 = vmatpush1.bf16.msra.mxu0 0
        %1594 = vmatprep.subr.bf16.mxu0 0
        %1595 = vmatpush1.bf16.msra.mxu0 0
        %1596 = vmatprep.subr.bf16.mxu0 0
        %1597 = vmatpush1.bf16.msra.mxu0 0
        %1598 = vmatprep.subr.bf16.mxu0 0
        %1599 = vmatpush1.bf16.msra.mxu0 0
        %1600 = vmatprep.subr.bf16.mxu0 0
        %1601 = vmatpush1.bf16.msra.mxu0 0
        %1602 = vmatprep.subr.bf16.mxu0 0
        %1603 = vmatpush1.bf16.msra.mxu0 0
        %1604 = vmatprep.mubr.bf16.mxu0 0
        %1605 = vmatmul.mubr.bf16.gmra.mrb[0].mxu0 %v937
        %v1606 = vpop.f32.mrb[0].mxu0
        %v1607 = vadd.f32 %v1030, %v1606
        %v1608 = vpop.f32.mrb[0].mxu0
        %v1609 = vadd.f32 %v1034, %v1608
        %v1610 = vpop.f32.mrb[0].mxu0
        %v1611 = vadd.f32 %v1030, %v1610
        %v1612 = vpop.f32.mrb[0].mxu0
        %v1613 = vadd.f32 %v1034, %v1612
        %1614 = vmatprep.mubr.bf16.mxu0 0
        %1615 = vmatmul.mubr.bf16.gmra.mrb[0].mxu0 %v938
        %v1616 = vpop.f32.mrb[0].mxu0
        %v1617 = vadd.f32 %v1030, %v1616
        %v1618 = vpop.f32.mrb[0].mxu0
        %v1619 = vadd.f32 %v1034, %v1618
        %v1620 = vpop.f32.mrb[0].mxu0
        %v1621 = vadd.f32 %v1030, %v1620
        %v1622 = vpop.f32.mrb[0].mxu0
        %v1623 = vadd.f32 %v1034, %v1622
        %1624 = vmatprep.mubr.bf16.mxu0 0
        %1625 = vmatmul.mubr.bf16.gmra.mrb[0].mxu0 %v939
        %v1626 = vpop.f32.mrb[0].mxu0
        %v1627 = vadd.f32 %v1030, %v1626
        %v1628 = vpop.f32.mrb[0].mxu0
        %v1629 = vadd.f32 %v1034, %v1628
        %v1630 = vpop.f32.mrb[0].mxu0
        %v1631 = vadd.f32 %v1030, %v1630
        %v1632 = vpop.f32.mrb[0].mxu0
        %v1633 = vadd.f32 %v1034, %v1632
        %1634 = vmatprep.mubr.bf16.mxu0 0
        %1635 = vmatmul.mubr.bf16.gmra.mrb[0].mxu0 %v940
        %v1636 = vpop.f32.mrb[0].mxu0
        %v1637 = vadd.f32 %v1030, %v1636
        %v1638 = vpop.f32.mrb[0].mxu0
        %v1639 = vadd.f32 %v1034, %v1638
        %v1640 = vpop.f32.mrb[0].mxu0
        %v1641 = vadd.f32 %v1030, %v1640
        %v1642 = vpop.f32.mrb[0].mxu0
        %v1643 = vadd.f32 %v1034, %v1642
        %1644 = vmatprep.mubr.bf16.mxu0 0
        %1645 = vmatmul.mubr.bf16.gmra.mrb[0].mxu0 %v941
        %v1646 = vpop.f32.mrb[0].mxu0
        %v1647 = vadd.f32 %v1030, %v1646
        %v1648 = vpop.f32.mrb[0].mxu0
        %v1649 = vadd.f32 %v1034, %v1648
        %v1650 = vpop.f32.mrb[0].mxu0
        %v1651 = vadd.f32 %v1030, %v1650
        %v1652 = vpop.f32.mrb[0].mxu0
        %v1653 = vadd.f32 %v1034, %v1652
        %1654 = vmatprep.mubr.bf16.mxu0 0
        %1655 = vmatmul.mubr.bf16.gmra.mrb[0].mxu0 %v942
        %v1656 = vpop.f32.mrb[0].mxu0
        %v1657 = vadd.f32 %v1030, %v1656
        %v1658 = vpop.f32.mrb[0].mxu0
        %v1659 = vadd.f32 %v1034, %v1658
        %v1660 = vpop.f32.mrb[0].mxu0
        %v1661 = vadd.f32 %v1030, %v1660
        %v1662 = vpop.f32.mrb[0].mxu0
        %v1663 = vadd.f32 %v1034, %v1662
        %1664 = vmatprep.mubr.bf16.mxu0 0
        %1665 = vmatmul.mubr.bf16.gmra.mrb[0].mxu0 %v943
        %v1666 = vpop.f32.mrb[0].mxu0
        %v1667 = vadd.f32 %v1030, %v1666
        %v1668 = vpop.f32.mrb[0].mxu0
        %v1669 = vadd.f32 %v1034, %v1668
        %v1670 = vpop.f32.mrb[0].mxu0
        %v1671 = vadd.f32 %v1030, %v1670
        %v1672 = vpop.f32.mrb[0].mxu0
        %v1673 = vadd.f32 %v1034, %v1672
        %1674 = vmatprep.mubr.bf16.mxu0 0
        %1675 = vmatmul.mubr.bf16.gmra.mrb[0].mxu0 %v944
        %v1676 = vpop.f32.mrb[0].mxu0
        %v1677 = vadd.f32 %v1030, %v1676
        %v1678 = vpop.f32.mrb[0].mxu0
        %v1679 = vadd.f32 %v1034, %v1678
        %v1680 = vpop.f32.mrb[0].mxu0
        %v1681 = vadd.f32 %v1030, %v1680
        %v1682 = vpop.f32.mrb[0].mxu0
        %v1683 = vadd.f32 %v1034, %v1682
        %1684 = vmatprep.mubr.bf16.mxu0 0
        %1685 = vmatmul.mubr.bf16.gmra.mrb[0].mxu0 %v945
        %v1686 = vpop.f32.mrb[0].mxu0
        %v1687 = vadd.f32 %v1030, %v1686
        %v1688 = vpop.f32.mrb[0].mxu0
        %v1689 = vadd.f32 %v1034, %v1688
        %v1690 = vpop.f32.mrb[0].mxu0
        %v1691 = vadd.f32 %v1030, %v1690
        %v1692 = vpop.f32.mrb[0].mxu0
        %v1693 = vadd.f32 %v1034, %v1692
        %1694 = vmatprep.mubr.bf16.mxu0 0
        %1695 = vmatmul.mubr.bf16.gmra.mrb[0].mxu0 %v946
        %v1696 = vpop.f32.mrb[0].mxu0
        %v1697 = vadd.f32 %v1030, %v1696
        %v1698 = vpop.f32.mrb[0].mxu0
        %v1699 = vadd.f32 %v1034, %v1698
        %v1700 = vpop.f32.mrb[0].mxu0
        %v1701 = vadd.f32 %v1030, %v1700
        %v1702 = vpop.f32.mrb[0].mxu0
        %v1703 = vadd.f32 %v1034, %v1702
        %1704 = vmatprep.mubr.bf16.mxu0 0
        %1705 = vmatmul.mubr.bf16.gmra.mrb[0].mxu0 %v947
        %v1706 = vpop.f32.mrb[0].mxu0
        %v1707 = vadd.f32 %v1030, %v1706
        %v1708 = vpop.f32.mrb[0].mxu0
        %v1709 = vadd.f32 %v1034, %v1708
        %v1710 = vpop.f32.mrb[0].mxu0
        %v1711 = vadd.f32 %v1030, %v1710
        %v1712 = vpop.f32.mrb[0].mxu0
        %v1713 = vadd.f32 %v1034, %v1712
        %1714 = vmatprep.mubr.bf16.mxu0 0
        %1715 = vmatmul.mubr.bf16.gmra.mrb[0].mxu0 %v948
        %v1716 = vpop.f32.mrb[0].mxu0
        %v1717 = vadd.f32 %v1030, %v1716
        %v1718 = vpop.f32.mrb[0].mxu0
        %v1719 = vadd.f32 %v1034, %v1718
        %v1720 = vpop.f32.mrb[0].mxu0
        %v1721 = vadd.f32 %v1030, %v1720
        %v1722 = vpop.f32.mrb[0].mxu0
        %v1723 = vadd.f32 %v1034, %v1722
        %1724 = vmatprep.mubr.bf16.mxu0 0
        %1725 = vmatmul.mubr.bf16.gmra.mrb[0].mxu0 %v949
        %v1726 = vpop.f32.mrb[0].mxu0
        %v1727 = vadd.f32 %v1030, %v1726
        %v1728 = vpop.f32.mrb[0].mxu0
        %v1729 = vadd.f32 %v1034, %v1728
        %v1730 = vpop.f32.mrb[0].mxu0
        %v1731 = vadd.f32 %v1030, %v1730
        %v1732 = vpop.f32.mrb[0].mxu0
        %v1733 = vadd.f32 %v1034, %v1732
        %1734 = vmatprep.mubr.bf16.mxu0 0
        %1735 = vmatmul.mubr.bf16.gmra.mrb[0].mxu0 %v950
        %v1736 = vpop.f32.mrb[0].mxu0
        %v1737 = vadd.f32 %v1030, %v1736
        %v1738 = vpop.f32.mrb[0].mxu0
        %v1739 = vadd.f32 %v1034, %v1738
        %v1740 = vpop.f32.mrb[0].mxu0
        %v1741 = vadd.f32 %v1030, %v1740
        %v1742 = vpop.f32.mrb[0].mxu0
        %v1743 = vadd.f32 %v1034, %v1742
        %1744 = vmatprep.mubr.bf16.mxu0 0
        %1745 = vmatmul.mubr.bf16.gmra.mrb[0].mxu0 %v951
        %v1746 = vpop.f32.mrb[0].mxu0
        %v1747 = vadd.f32 %v1030, %v1746
        %v1748 = vpop.f32.mrb[0].mxu0
        %v1749 = vadd.f32 %v1034, %v1748
        %v1750 = vpop.f32.mrb[0].mxu0
        %v1751 = vadd.f32 %v1030, %v1750
        %v1752 = vpop.f32.mrb[0].mxu0
        %v1753 = vadd.f32 %v1034, %v1752
        %1754 = vmatprep.mubr.bf16.mxu0 0
        %1755 = vmatmul.mubr.bf16.gmra.mrb[0].mxu0 %v952
        %v1756 = vpop.f32.mrb[0].mxu0
        %v1757 = vadd.f32 %v1030, %v1756
        %v1758 = vpop.f32.mrb[0].mxu0
        %v1759 = vadd.f32 %v1034, %v1758
        %v1760 = vpop.f32.mrb[0].mxu0
        %v1761 = vadd.f32 %v1030, %v1760
        %v1762 = vpop.f32.mrb[0].mxu0
        %v1763 = vadd.f32 %v1034, %v1762
        %1764 = vdwg.mxu0
        %1765 = vmatprep.subr.bf16.mxu0 %v1256
        %1766 = vmatpush1.bf16.msra.mxu0 %v1255
        %1767 = vmatprep.subr.bf16.mxu0 %v1264
        %1768 = vmatpush1.bf16.msra.mxu0 %v1263
        %1769 = vmatprep.subr.bf16.mxu0 %v1272
        %1770 = vmatpush1.bf16.msra.mxu0 %v1271
        %1771 = vmatprep.subr.bf16.mxu0 %v1280
        %1772 = vmatpush1.bf16.msra.mxu0 %v1279
        %1773 = vmatprep.subr.bf16.mxu0 %v1288
        %1774 = vmatpush1.bf16.msra.mxu0 %v1287
        %1775 = vmatprep.subr.bf16.mxu0 %v1296
        %1776 = vmatpush1.bf16.msra.mxu0 %v1295
        %1777 = vmatprep.subr.bf16.mxu0 %v1304
        %1778 = vmatpush1.bf16.msra.mxu0 %v1303
        %1779 = vmatprep.subr.bf16.mxu0 %v1312
        %1780 = vmatpush1.bf16.msra.mxu0 %v1311
        %1781 = vmatprep.subr.bf16.mxu0 0
        %1782 = vmatpush1.bf16.msra.mxu0 0
        %1783 = vmatprep.subr.bf16.mxu0 0
        %1784 = vmatpush1.bf16.msra.mxu0 0
        %1785 = vmatprep.subr.bf16.mxu0 0
        %1786 = vmatpush1.bf16.msra.mxu0 0
        %1787 = vmatprep.subr.bf16.mxu0 0
        %1788 = vmatpush1.bf16.msra.mxu0 0
        %1789 = vmatprep.subr.bf16.mxu0 0
        %1790 = vmatpush1.bf16.msra.mxu0 0
        %1791 = vmatprep.subr.bf16.mxu0 0
        %1792 = vmatpush1.bf16.msra.mxu0 0
        %1793 = vmatprep.subr.bf16.mxu0 0
        %1794 = vmatpush1.bf16.msra.mxu0 0
        %1795 = vmatprep.subr.bf16.mxu0 0
        %1796 = vmatpush1.bf16.msra.mxu0 0
        %1797 = vmatprep.mubr.bf16.mxu0 0
        %1798 = vmatmul.mubr.bf16.gmra.mrb[0].mxu0 %v937
        %v1799 = vpop.f32.mrb[0].mxu0
        %v1800 = vadd.f32 %v1038, %v1799
        %v1801 = vpop.f32.mrb[0].mxu0
        %v1802 = vadd.f32 %v1042, %v1801
        %v1803 = vpop.f32.mrb[0].mxu0
        %v1804 = vadd.f32 %v1038, %v1803
        %v1805 = vpop.f32.mrb[0].mxu0
        %v1806 = vadd.f32 %v1042, %v1805
        %1807 = vmatprep.mubr.bf16.mxu0 0
        %1808 = vmatmul.mubr.bf16.gmra.mrb[0].mxu0 %v938
        %v1809 = vpop.f32.mrb[0].mxu0
        %v1810 = vadd.f32 %v1038, %v1809
        %v1811 = vpop.f32.mrb[0].mxu0
        %v1812 = vadd.f32 %v1042, %v1811
        %v1813 = vpop.f32.mrb[0].mxu0
        %v1814 = vadd.f32 %v1038, %v1813
        %v1815 = vpop.f32.mrb[0].mxu0
        %v1816 = vadd.f32 %v1042, %v1815
        %1817 = vmatprep.mubr.bf16.mxu0 0
        %1818 = vmatmul.mubr.bf16.gmra.mrb[0].mxu0 %v939
        %v1819 = vpop.f32.mrb[0].mxu0
        %v1820 = vadd.f32 %v1038, %v1819
        %v1821 = vpop.f32.mrb[0].mxu0
        %v1822 = vadd.f32 %v1042, %v1821
        %v1823 = vpop.f32.mrb[0].mxu0
        %v1824 = vadd.f32 %v1038, %v1823
        %v1825 = vpop.f32.mrb[0].mxu0
        %v1826 = vadd.f32 %v1042, %v1825
        %1827 = vmatprep.mubr.bf16.mxu0 0
        %1828 = vmatmul.mubr.bf16.gmra.mrb[0].mxu0 %v940
        %v1829 = vpop.f32.mrb[0].mxu0
        %v1830 = vadd.f32 %v1038, %v1829
        %v1831 = vpop.f32.mrb[0].mxu0
        %v1832 = vadd.f32 %v1042, %v1831
        %v1833 = vpop.f32.mrb[0].mxu0
        %v1834 = vadd.f32 %v1038, %v1833
        %v1835 = vpop.f32.mrb[0].mxu0
        %v1836 = vadd.f32 %v1042, %v1835
        %1837 = vmatprep.mubr.bf16.mxu0 0
        %1838 = vmatmul.mubr.bf16.gmra.mrb[0].mxu0 %v941
        %v1839 = vpop.f32.mrb[0].mxu0
        %v1840 = vadd.f32 %v1038, %v1839
        %v1841 = vpop.f32.mrb[0].mxu0
        %v1842 = vadd.f32 %v1042, %v1841
        %v1843 = vpop.f32.mrb[0].mxu0
        %v1844 = vadd.f32 %v1038, %v1843
        %v1845 = vpop.f32.mrb[0].mxu0
        %v1846 = vadd.f32 %v1042, %v1845
        %1847 = vmatprep.mubr.bf16.mxu0 0
        %1848 = vmatmul.mubr.bf16.gmra.mrb[0].mxu0 %v942
        %v1849 = vpop.f32.mrb[0].mxu0
        %v1850 = vadd.f32 %v1038, %v1849
        %v1851 = vpop.f32.mrb[0].mxu0
        %v1852 = vadd.f32 %v1042, %v1851
        %v1853 = vpop.f32.mrb[0].mxu0
        %v1854 = vadd.f32 %v1038, %v1853
        %v1855 = vpop.f32.mrb[0].mxu0
        %v1856 = vadd.f32 %v1042, %v1855
        %1857 = vmatprep.mubr.bf16.mxu0 0
        %1858 = vmatmul.mubr.bf16.gmra.mrb[0].mxu0 %v943
        %v1859 = vpop.f32.mrb[0].mxu0
        %v1860 = vadd.f32 %v1038, %v1859
        %v1861 = vpop.f32.mrb[0].mxu0
        %v1862 = vadd.f32 %v1042, %v1861
        %v1863 = vpop.f32.mrb[0].mxu0
        %v1864 = vadd.f32 %v1038, %v1863
        %v1865 = vpop.f32.mrb[0].mxu0
        %v1866 = vadd.f32 %v1042, %v1865
        %1867 = vmatprep.mubr.bf16.mxu0 0
        %1868 = vmatmul.mubr.bf16.gmra.mrb[0].mxu0 %v944
        %v1869 = vpop.f32.mrb[0].mxu0
        %v1870 = vadd.f32 %v1038, %v1869
        %v1871 = vpop.f32.mrb[0].mxu0
        %v1872 = vadd.f32 %v1042, %v1871
        %v1873 = vpop.f32.mrb[0].mxu0
        %v1874 = vadd.f32 %v1038, %v1873
        %v1875 = vpop.f32.mrb[0].mxu0
        %v1876 = vadd.f32 %v1042, %v1875
        %1877 = vmatprep.mubr.bf16.mxu0 0
        %1878 = vmatmul.mubr.bf16.gmra.mrb[0].mxu0 %v945
        %v1879 = vpop.f32.mrb[0].mxu0
        %v1880 = vadd.f32 %v1038, %v1879
        %v1881 = vpop.f32.mrb[0].mxu0
        %v1882 = vadd.f32 %v1042, %v1881
        %v1883 = vpop.f32.mrb[0].mxu0
        %v1884 = vadd.f32 %v1038, %v1883
        %v1885 = vpop.f32.mrb[0].mxu0
        %v1886 = vadd.f32 %v1042, %v1885
        %1887 = vmatprep.mubr.bf16.mxu0 0
        %1888 = vmatmul.mubr.bf16.gmra.mrb[0].mxu0 %v946
        %v1889 = vpop.f32.mrb[0].mxu0
        %v1890 = vadd.f32 %v1038, %v1889
        %v1891 = vpop.f32.mrb[0].mxu0
        %v1892 = vadd.f32 %v1042, %v1891
        %v1893 = vpop.f32.mrb[0].mxu0
        %v1894 = vadd.f32 %v1038, %v1893
        %v1895 = vpop.f32.mrb[0].mxu0
        %v1896 = vadd.f32 %v1042, %v1895
        %1897 = vmatprep.mubr.bf16.mxu0 0
        %1898 = vmatmul.mubr.bf16.gmra.mrb[0].mxu0 %v947
        %v1899 = vpop.f32.mrb[0].mxu0
        %v1900 = vadd.f32 %v1038, %v1899
        %v1901 = vpop.f32.mrb[0].mxu0
        %v1902 = vadd.f32 %v1042, %v1901
        %v1903 = vpop.f32.mrb[0].mxu0
        %v1904 = vadd.f32 %v1038, %v1903
        %v1905 = vpop.f32.mrb[0].mxu0
        %v1906 = vadd.f32 %v1042, %v1905
        %1907 = vmatprep.mubr.bf16.mxu0 0
        %1908 = vmatmul.mubr.bf16.gmra.mrb[0].mxu0 %v948
        %v1909 = vpop.f32.mrb[0].mxu0
        %v1910 = vadd.f32 %v1038, %v1909
        %v1911 = vpop.f32.mrb[0].mxu0
        %v1912 = vadd.f32 %v1042, %v1911
        %v1913 = vpop.f32.mrb[0].mxu0
        %v1914 = vadd.f32 %v1038, %v1913
        %v1915 = vpop.f32.mrb[0].mxu0
        %v1916 = vadd.f32 %v1042, %v1915
        %1917 = vmatprep.mubr.bf16.mxu0 0
        %1918 = vmatmul.mubr.bf16.gmra.mrb[0].mxu0 %v949
        %v1919 = vpop.f32.mrb[0].mxu0
        %v1920 = vadd.f32 %v1038, %v1919
        %v1921 = vpop.f32.mrb[0].mxu0
        %v1922 = vadd.f32 %v1042, %v1921
        %v1923 = vpop.f32.mrb[0].mxu0
        %v1924 = vadd.f32 %v1038, %v1923
        %v1925 = vpop.f32.mrb[0].mxu0
        %v1926 = vadd.f32 %v1042, %v1925
        %1927 = vmatprep.mubr.bf16.mxu0 0
        %1928 = vmatmul.mubr.bf16.gmra.mrb[0].mxu0 %v950
        %v1929 = vpop.f32.mrb[0].mxu0
        %v1930 = vadd.f32 %v1038, %v1929
        %v1931 = vpop.f32.mrb[0].mxu0
        %v1932 = vadd.f32 %v1042, %v1931
        %v1933 = vpop.f32.mrb[0].mxu0
        %v1934 = vadd.f32 %v1038, %v1933
        %v1935 = vpop.f32.mrb[0].mxu0
        %v1936 = vadd.f32 %v1042, %v1935
        %1937 = vmatprep.mubr.bf16.mxu0 0
        %1938 = vmatmul.mubr.bf16.gmra.mrb[0].mxu0 %v951
        %v1939 = vpop.f32.mrb[0].mxu0
        %v1940 = vadd.f32 %v1038, %v1939
        %v1941 = vpop.f32.mrb[0].mxu0
        %v1942 = vadd.f32 %v1042, %v1941
        %v1943 = vpop.f32.mrb[0].mxu0
        %v1944 = vadd.f32 %v1038, %v1943
        %v1945 = vpop.f32.mrb[0].mxu0
        %v1946 = vadd.f32 %v1042, %v1945
        %1947 = vmatprep.mubr.bf16.mxu0 0
        %1948 = vmatmul.mubr.bf16.gmra.mrb[0].mxu0 %v952
        %v1949 = vpop.f32.mrb[0].mxu0
        %v1950 = vadd.f32 %v1038, %v1949
        %v1951 = vpop.f32.mrb[0].mxu0
        %v1952 = vadd.f32 %v1042, %v1951
        %v1953 = vpop.f32.mrb[0].mxu0
        %v1954 = vadd.f32 %v1038, %v1953
        %v1955 = vpop.f32.mrb[0].mxu0
        %v1956 = vadd.f32 %v1042, %v1955
        %1957 = vdwg.mxu0
        %1958 = vmatprep.subr.bf16.mxu0 %v1258
        %1959 = vmatpush1.bf16.msra.mxu0 %v1257
        %1960 = vmatprep.subr.bf16.mxu0 %v1266
        %1961 = vmatpush1.bf16.msra.mxu0 %v1265
        %1962 = vmatprep.subr.bf16.mxu0 %v1274
        %1963 = vmatpush1.bf16.msra.mxu0 %v1273
        %1964 = vmatprep.subr.bf16.mxu0 %v1282
        %1965 = vmatpush1.bf16.msra.mxu0 %v1281
        %1966 = vmatprep.subr.bf16.mxu0 %v1290
        %1967 = vmatpush1.bf16.msra.mxu0 %v1289
        %1968 = vmatprep.subr.bf16.mxu0 %v1298
        %1969 = vmatpush1.bf16.msra.mxu0 %v1297
        %1970 = vmatprep.subr.bf16.mxu0 %v1306
        %1971 = vmatpush1.bf16.msra.mxu0 %v1305
        %1972 = vmatprep.subr.bf16.mxu0 %v1314
        %1973 = vmatpush1.bf16.msra.mxu0 %v1313
        %1974 = vmatprep.subr.bf16.mxu0 0
        %1975 = vmatpush1.bf16.msra.mxu0 0
        %1976 = vmatprep.subr.bf16.mxu0 0
        %1977 = vmatpush1.bf16.msra.mxu0 0
        %1978 = vmatprep.subr.bf16.mxu0 0
        %1979 = vmatpush1.bf16.msra.mxu0 0
        %1980 = vmatprep.subr.bf16.mxu0 0
        %1981 = vmatpush1.bf16.msra.mxu0 0
        %1982 = vmatprep.subr.bf16.mxu0 0
        %1983 = vmatpush1.bf16.msra.mxu0 0
        %1984 = vmatprep.subr.bf16.mxu0 0
        %1985 = vmatpush1.bf16.msra.mxu0 0
        %1986 = vmatprep.subr.bf16.mxu0 0
        %1987 = vmatpush1.bf16.msra.mxu0 0
        %1988 = vmatprep.subr.bf16.mxu0 0
        %1989 = vmatpush1.bf16.msra.mxu0 0
        %1990 = vmatprep.mubr.bf16.mxu0 0
        %1991 = vmatmul.mubr.bf16.gmra.mrb[0].mxu0 %v937
        %v1992 = vpop.f32.mrb[0].mxu0
        %v1993 = vadd.f32 %v1046, %v1992
        %v1994 = vpop.f32.mrb[0].mxu0
        %v1995 = vadd.f32 %v1050, %v1994
        %v1996 = vpop.f32.mrb[0].mxu0
        %v1997 = vadd.f32 %v1046, %v1996
        %v1998 = vpop.f32.mrb[0].mxu0
        %v1999 = vadd.f32 %v1050, %v1998
        %2000 = vmatprep.mubr.bf16.mxu0 0
        %2001 = vmatmul.mubr.bf16.gmra.mrb[0].mxu0 %v938
        %v2002 = vpop.f32.mrb[0].mxu0
        %v2003 = vadd.f32 %v1046, %v2002
        %v2004 = vpop.f32.mrb[0].mxu0
        %v2005 = vadd.f32 %v1050, %v2004
        %v2006 = vpop.f32.mrb[0].mxu0
        %v2007 = vadd.f32 %v1046, %v2006
        %v2008 = vpop.f32.mrb[0].mxu0
        %v2009 = vadd.f32 %v1050, %v2008
        %2010 = vmatprep.mubr.bf16.mxu0 0
        %2011 = vmatmul.mubr.bf16.gmra.mrb[0].mxu0 %v939
        %v2012 = vpop.f32.mrb[0].mxu0
        %v2013 = vadd.f32 %v1046, %v2012
        %v2014 = vpop.f32.mrb[0].mxu0
        %v2015 = vadd.f32 %v1050, %v2014
        %v2016 = vpop.f32.mrb[0].mxu0
        %v2017 = vadd.f32 %v1046, %v2016
        %v2018 = vpop.f32.mrb[0].mxu0
        %v2019 = vadd.f32 %v1050, %v2018
        %2020 = vmatprep.mubr.bf16.mxu0 0
        %2021 = vmatmul.mubr.bf16.gmra.mrb[0].mxu0 %v940
        %v2022 = vpop.f32.mrb[0].mxu0
        %v2023 = vadd.f32 %v1046, %v2022
        %v2024 = vpop.f32.mrb[0].mxu0
        %v2025 = vadd.f32 %v1050, %v2024
        %v2026 = vpop.f32.mrb[0].mxu0
        %v2027 = vadd.f32 %v1046, %v2026
        %v2028 = vpop.f32.mrb[0].mxu0
        %v2029 = vadd.f32 %v1050, %v2028
        %2030 = vmatprep.mubr.bf16.mxu0 0
        %2031 = vmatmul.mubr.bf16.gmra.mrb[0].mxu0 %v941
        %v2032 = vpop.f32.mrb[0].mxu0
        %v2033 = vadd.f32 %v1046, %v2032
        %v2034 = vpop.f32.mrb[0].mxu0
        %v2035 = vadd.f32 %v1050, %v2034
        %v2036 = vpop.f32.mrb[0].mxu0
        %v2037 = vadd.f32 %v1046, %v2036
        %v2038 = vpop.f32.mrb[0].mxu0
        %v2039 = vadd.f32 %v1050, %v2038
        %2040 = vmatprep.mubr.bf16.mxu0 0
        %2041 = vmatmul.mubr.bf16.gmra.mrb[0].mxu0 %v942
        %v2042 = vpop.f32.mrb[0].mxu0
        %v2043 = vadd.f32 %v1046, %v2042
        %v2044 = vpop.f32.mrb[0].mxu0
        %v2045 = vadd.f32 %v1050, %v2044
        %v2046 = vpop.f32.mrb[0].mxu0
        %v2047 = vadd.f32 %v1046, %v2046
        %v2048 = vpop.f32.mrb[0].mxu0
        %v2049 = vadd.f32 %v1050, %v2048
        %2050 = vmatprep.mubr.bf16.mxu0 0
        %2051 = vmatmul.mubr.bf16.gmra.mrb[0].mxu0 %v943
        %v2052 = vpop.f32.mrb[0].mxu0
        %v2053 = vadd.f32 %v1046, %v2052
        %v2054 = vpop.f32.mrb[0].mxu0
        %v2055 = vadd.f32 %v1050, %v2054
        %v2056 = vpop.f32.mrb[0].mxu0
        %v2057 = vadd.f32 %v1046, %v2056
        %v2058 = vpop.f32.mrb[0].mxu0
        %v2059 = vadd.f32 %v1050, %v2058
        %2060 = vmatprep.mubr.bf16.mxu0 0
        %2061 = vmatmul.mubr.bf16.gmra.mrb[0].mxu0 %v944
        %v2062 = vpop.f32.mrb[0].mxu0
        %v2063 = vadd.f32 %v1046, %v2062
        %v2064 = vpop.f32.mrb[0].mxu0
        %v2065 = vadd.f32 %v1050, %v2064
        %v2066 = vpop.f32.mrb[0].mxu0
        %v2067 = vadd.f32 %v1046, %v2066
        %v2068 = vpop.f32.mrb[0].mxu0
        %v2069 = vadd.f32 %v1050, %v2068
        %2070 = vmatprep.mubr.bf16.mxu0 0
        %2071 = vmatmul.mubr.bf16.gmra.mrb[0].mxu0 %v945
        %v2072 = vpop.f32.mrb[0].mxu0
        %v2073 = vadd.f32 %v1046, %v2072
        %v2074 = vpop.f32.mrb[0].mxu0
        %v2075 = vadd.f32 %v1050, %v2074
        %v2076 = vpop.f32.mrb[0].mxu0
        %v2077 = vadd.f32 %v1046, %v2076
        %v2078 = vpop.f32.mrb[0].mxu0
        %v2079 = vadd.f32 %v1050, %v2078
        %2080 = vmatprep.mubr.bf16.mxu0 0
        %2081 = vmatmul.mubr.bf16.gmra.mrb[0].mxu0 %v946
        %v2082 = vpop.f32.mrb[0].mxu0
        %v2083 = vadd.f32 %v1046, %v2082
        %v2084 = vpop.f32.mrb[0].mxu0
        %v2085 = vadd.f32 %v1050, %v2084
        %v2086 = vpop.f32.mrb[0].mxu0
        %v2087 = vadd.f32 %v1046, %v2086
        %v2088 = vpop.f32.mrb[0].mxu0
        %v2089 = vadd.f32 %v1050, %v2088
        %2090 = vmatprep.mubr.bf16.mxu0 0
        %2091 = vmatmul.mubr.bf16.gmra.mrb[0].mxu0 %v947
        %v2092 = vpop.f32.mrb[0].mxu0
        %v2093 = vadd.f32 %v1046, %v2092
        %v2094 = vpop.f32.mrb[0].mxu0
        %v2095 = vadd.f32 %v1050, %v2094
        %v2096 = vpop.f32.mrb[0].mxu0
        %v2097 = vadd.f32 %v1046, %v2096
        %v2098 = vpop.f32.mrb[0].mxu0
        %v2099 = vadd.f32 %v1050, %v2098
        %2100 = vmatprep.mubr.bf16.mxu0 0
        %2101 = vmatmul.mubr.bf16.gmra.mrb[0].mxu0 %v948
        %v2102 = vpop.f32.mrb[0].mxu0
        %v2103 = vadd.f32 %v1046, %v2102
        %v2104 = vpop.f32.mrb[0].mxu0
        %v2105 = vadd.f32 %v1050, %v2104
        %v2106 = vpop.f32.mrb[0].mxu0
        %v2107 = vadd.f32 %v1046, %v2106
        %v2108 = vpop.f32.mrb[0].mxu0
        %v2109 = vadd.f32 %v1050, %v2108
        %2110 = vmatprep.mubr.bf16.mxu0 0
        %2111 = vmatmul.mubr.bf16.gmra.mrb[0].mxu0 %v949
        %v2112 = vpop.f32.mrb[0].mxu0
        %v2113 = vadd.f32 %v1046, %v2112
        %v2114 = vpop.f32.mrb[0].mxu0
        %v2115 = vadd.f32 %v1050, %v2114
        %v2116 = vpop.f32.mrb[0].mxu0
        %v2117 = vadd.f32 %v1046, %v2116
        %v2118 = vpop.f32.mrb[0].mxu0
        %v2119 = vadd.f32 %v1050, %v2118
        %2120 = vmatprep.mubr.bf16.mxu0 0
        %2121 = vmatmul.mubr.bf16.gmra.mrb[0].mxu0 %v950
        %v2122 = vpop.f32.mrb[0].mxu0
        %v2123 = vadd.f32 %v1046, %v2122
        %v2124 = vpop.f32.mrb[0].mxu0
        %v2125 = vadd.f32 %v1050, %v2124
        %v2126 = vpop.f32.mrb[0].mxu0
        %v2127 = vadd.f32 %v1046, %v2126
        %v2128 = vpop.f32.mrb[0].mxu0
        %v2129 = vadd.f32 %v1050, %v2128
        %2130 = vmatprep.mubr.bf16.mxu0 0
        %2131 = vmatmul.mubr.bf16.gmra.mrb[0].mxu0 %v951
        %v2132 = vpop.f32.mrb[0].mxu0
        %v2133 = vadd.f32 %v1046, %v2132
        %v2134 = vpop.f32.mrb[0].mxu0
        %v2135 = vadd.f32 %v1050, %v2134
        %v2136 = vpop.f32.mrb[0].mxu0
        %v2137 = vadd.f32 %v1046, %v2136
        %v2138 = vpop.f32.mrb[0].mxu0
        %v2139 = vadd.f32 %v1050, %v2138
        %2140 = vmatprep.mubr.bf16.mxu0 0
        %2141 = vmatmul.mubr.bf16.gmra.mrb[0].mxu0 %v952
        %v2142 = vpop.f32.mrb[0].mxu0
        %v2143 = vadd.f32 %v1046, %v2142
        %v2144 = vpop.f32.mrb[0].mxu0
        %v2145 = vadd.f32 %v1050, %v2144
        %v2146 = vpop.f32.mrb[0].mxu0
        %v2147 = vadd.f32 %v1046, %v2146
        %v2148 = vpop.f32.mrb[0].mxu0
        %v2149 = vadd.f32 %v1050, %v2148
        %2150 = vdwg.mxu0
        %v2151 = vmul.f32 %v1414, 0.5
        %v2152 = vmul.f32 %v1416, 0.5
        %v2153 = vmul.f32 %v1607, 0.5
        %v2154 = vmul.f32 %v1609, 0.5
        %v2155 = vmul.f32 %v1800, 0.5
        %v2156 = vmul.f32 %v1802, 0.5
        %v2157 = vmul.f32 %v1993, 0.5
        %v2158 = vmul.f32 %v1995, 0.5
        %v2159 = vmul.f32 %v1418, 0.5
        %v2160 = vmul.f32 %v1420, 0.5
        %v2161 = vmul.f32 %v1611, 0.5
        %v2162 = vmul.f32 %v1613, 0.5
        %v2163 = vmul.f32 %v1804, 0.5
        %v2164 = vmul.f32 %v1806, 0.5
        %v2165 = vmul.f32 %v1997, 0.5
        %v2166 = vmul.f32 %v1999, 0.5
        %v2167 = vmul.f32 %v1424, 0.5
        %v2168 = vmul.f32 %v1426, 0.5
        %v2169 = vmul.f32 %v1617, 0.5
        %v2170 = vmul.f32 %v1619, 0.5
        %v2171 = vmul.f32 %v1810, 0.5
        %v2172 = vmul.f32 %v1812, 0.5
        %v2173 = vmul.f32 %v2003, 0.5
        %v2174 = vmul.f32 %v2005, 0.5
        %v2175 = vmul.f32 %v1428, 0.5
        %v2176 = vmul.f32 %v1430, 0.5
        %v2177 = vmul.f32 %v1621, 0.5
        %v2178 = vmul.f32 %v1623, 0.5
        %v2179 = vmul.f32 %v1814, 0.5
        %v2180 = vmul.f32 %v1816, 0.5
        %v2181 = vmul.f32 %v2007, 0.5
        %v2182 = vmul.f32 %v2009, 0.5
        %v2183 = vmul.f32 %v1434, 0.5
        %v2184 = vmul.f32 %v1436, 0.5
        %v2185 = vmul.f32 %v1627, 0.5
        %v2186 = vmul.f32 %v1629, 0.5
        %v2187 = vmul.f32 %v1820, 0.5
        %v2188 = vmul.f32 %v1822, 0.5
        %v2189 = vmul.f32 %v2013, 0.5
        %v2190 = vmul.f32 %v2015, 0.5
        %v2191 = vmul.f32 %v1438, 0.5
        %v2192 = vmul.f32 %v1440, 0.5
        %v2193 = vmul.f32 %v1631, 0.5
        %v2194 = vmul.f32 %v1633, 0.5
        %v2195 = vmul.f32 %v1824, 0.5
        %v2196 = vmul.f32 %v1826, 0.5
        %v2197 = vmul.f32 %v2017, 0.5
        %v2198 = vmul.f32 %v2019, 0.5
        %v2199 = vmul.f32 %v1444, 0.5
        %v2200 = vmul.f32 %v1446, 0.5
        %v2201 = vmul.f32 %v1637, 0.5
        %v2202 = vmul.f32 %v1639, 0.5
        %v2203 = vmul.f32 %v1830, 0.5
        %v2204 = vmul.f32 %v1832, 0.5
        %v2205 = vmul.f32 %v2023, 0.5
        %v2206 = vmul.f32 %v2025, 0.5
        %v2207 = vmul.f32 %v1448, 0.5
        %v2208 = vmul.f32 %v1450, 0.5
        %v2209 = vmul.f32 %v1641, 0.5
        %v2210 = vmul.f32 %v1643, 0.5
        %v2211 = vmul.f32 %v1834, 0.5
        %v2212 = vmul.f32 %v1836, 0.5
        %v2213 = vmul.f32 %v2027, 0.5
        %v2214 = vmul.f32 %v2029, 0.5
        %v2215 = vmul.f32 %v1454, 0.5
        %v2216 = vmul.f32 %v1456, 0.5
        %v2217 = vmul.f32 %v1647, 0.5
        %v2218 = vmul.f32 %v1649, 0.5
        %v2219 = vmul.f32 %v1840, 0.5
        %v2220 = vmul.f32 %v1842, 0.5
        %v2221 = vmul.f32 %v2033, 0.5
        %v2222 = vmul.f32 %v2035, 0.5
        %v2223 = vmul.f32 %v1458, 0.5
        %v2224 = vmul.f32 %v1460, 0.5
        %v2225 = vmul.f32 %v1651, 0.5
        %v2226 = vmul.f32 %v1653, 0.5
        %v2227 = vmul.f32 %v1844, 0.5
        %v2228 = vmul.f32 %v1846, 0.5
        %v2229 = vmul.f32 %v2037, 0.5
        %v2230 = vmul.f32 %v2039, 0.5
        %v2231 = vmul.f32 %v1464, 0.5
        %v2232 = vmul.f32 %v1466, 0.5
        %v2233 = vmul.f32 %v1657, 0.5
        %v2234 = vmul.f32 %v1659, 0.5
        %v2235 = vmul.f32 %v1850, 0.5
        %v2236 = vmul.f32 %v1852, 0.5
        %v2237 = vmul.f32 %v2043, 0.5
        %v2238 = vmul.f32 %v2045, 0.5
        %v2239 = vmul.f32 %v1468, 0.5
        %v2240 = vmul.f32 %v1470, 0.5
        %v2241 = vmul.f32 %v1661, 0.5
        %v2242 = vmul.f32 %v1663, 0.5
        %v2243 = vmul.f32 %v1854, 0.5
        %v2244 = vmul.f32 %v1856, 0.5
        %v2245 = vmul.f32 %v2047, 0.5
        %v2246 = vmul.f32 %v2049, 0.5
        %v2247 = vmul.f32 %v1474, 0.5
        %v2248 = vmul.f32 %v1476, 0.5
        %v2249 = vmul.f32 %v1667, 0.5
        %v2250 = vmul.f32 %v1669, 0.5
        %v2251 = vmul.f32 %v1860, 0.5
        %v2252 = vmul.f32 %v1862, 0.5
        %v2253 = vmul.f32 %v2053, 0.5
        %v2254 = vmul.f32 %v2055, 0.5
        %v2255 = vmul.f32 %v1478, 0.5
        %v2256 = vmul.f32 %v1480, 0.5
        %v2257 = vmul.f32 %v1671, 0.5
        %v2258 = vmul.f32 %v1673, 0.5
        %v2259 = vmul.f32 %v1864, 0.5
        %v2260 = vmul.f32 %v1866, 0.5
        %v2261 = vmul.f32 %v2057, 0.5
        %v2262 = vmul.f32 %v2059, 0.5
        %v2263 = vmul.f32 %v1484, 0.5
        %v2264 = vmul.f32 %v1486, 0.5
        %v2265 = vmul.f32 %v1677, 0.5
        %v2266 = vmul.f32 %v1679, 0.5
        %v2267 = vmul.f32 %v1870, 0.5
        %v2268 = vmul.f32 %v1872, 0.5
        %v2269 = vmul.f32 %v2063, 0.5
        %v2270 = vmul.f32 %v2065, 0.5
        %v2271 = vmul.f32 %v1488, 0.5
        %v2272 = vmul.f32 %v1490, 0.5
        %v2273 = vmul.f32 %v1681, 0.5
        %v2274 = vmul.f32 %v1683, 0.5
        %v2275 = vmul.f32 %v1874, 0.5
        %v2276 = vmul.f32 %v1876, 0.5
        %v2277 = vmul.f32 %v2067, 0.5
        %v2278 = vmul.f32 %v2069, 0.5
        %v2279 = vmul.f32 %v1494, 0.5
        %v2280 = vmul.f32 %v1496, 0.5
        %v2281 = vmul.f32 %v1687, 0.5
        %v2282 = vmul.f32 %v1689, 0.5
        %v2283 = vmul.f32 %v1880, 0.5
        %v2284 = vmul.f32 %v1882, 0.5
        %v2285 = vmul.f32 %v2073, 0.5
        %v2286 = vmul.f32 %v2075, 0.5
        %v2287 = vmul.f32 %v1498, 0.5
        %v2288 = vmul.f32 %v1500, 0.5
        %v2289 = vmul.f32 %v1691, 0.5
        %v2290 = vmul.f32 %v1693, 0.5
        %v2291 = vmul.f32 %v1884, 0.5
        %v2292 = vmul.f32 %v1886, 0.5
        %v2293 = vmul.f32 %v2077, 0.5
        %v2294 = vmul.f32 %v2079, 0.5
        %v2295 = vmul.f32 %v1504, 0.5
        %v2296 = vmul.f32 %v1506, 0.5
        %v2297 = vmul.f32 %v1697, 0.5
        %v2298 = vmul.f32 %v1699, 0.5
        %v2299 = vmul.f32 %v1890, 0.5
        %v2300 = vmul.f32 %v1892, 0.5
        %v2301 = vmul.f32 %v2083, 0.5
        %v2302 = vmul.f32 %v2085, 0.5
        %v2303 = vmul.f32 %v1508, 0.5
        %v2304 = vmul.f32 %v1510, 0.5
        %v2305 = vmul.f32 %v1701, 0.5
        %v2306 = vmul.f32 %v1703, 0.5
        %v2307 = vmul.f32 %v1894, 0.5
        %v2308 = vmul.f32 %v1896, 0.5
        %v2309 = vmul.f32 %v2087, 0.5
        %v2310 = vmul.f32 %v2089, 0.5
        %v2311 = vmul.f32 %v1514, 0.5
        %v2312 = vmul.f32 %v1516, 0.5
        %v2313 = vmul.f32 %v1707, 0.5
        %v2314 = vmul.f32 %v1709, 0.5
        %v2315 = vmul.f32 %v1900, 0.5
        %v2316 = vmul.f32 %v1902, 0.5
        %v2317 = vmul.f32 %v2093, 0.5
        %v2318 = vmul.f32 %v2095, 0.5
        %v2319 = vmul.f32 %v1518, 0.5
        %v2320 = vmul.f32 %v1520, 0.5
        %v2321 = vmul.f32 %v1711, 0.5
        %v2322 = vmul.f32 %v1713, 0.5
        %v2323 = vmul.f32 %v1904, 0.5
        %v2324 = vmul.f32 %v1906, 0.5
        %v2325 = vmul.f32 %v2097, 0.5
        %v2326 = vmul.f32 %v2099, 0.5
        %v2327 = vmul.f32 %v1524, 0.5
        %v2328 = vmul.f32 %v1526, 0.5
        %v2329 = vmul.f32 %v1717, 0.5
        %v2330 = vmul.f32 %v1719, 0.5
        %v2331 = vmul.f32 %v1910, 0.5
        %v2332 = vmul.f32 %v1912, 0.5
        %v2333 = vmul.f32 %v2103, 0.5
        %v2334 = vmul.f32 %v2105, 0.5
        %v2335 = vmul.f32 %v1528, 0.5
        %v2336 = vmul.f32 %v1530, 0.5
        %v2337 = vmul.f32 %v1721, 0.5
        %v2338 = vmul.f32 %v1723, 0.5
        %v2339 = vmul.f32 %v1914, 0.5
        %v2340 = vmul.f32 %v1916, 0.5
        %v2341 = vmul.f32 %v2107, 0.5
        %v2342 = vmul.f32 %v2109, 0.5
        %v2343 = vmul.f32 %v1534, 0.5
        %v2344 = vmul.f32 %v1536, 0.5
        %v2345 = vmul.f32 %v1727, 0.5
        %v2346 = vmul.f32 %v1729, 0.5
        %v2347 = vmul.f32 %v1920, 0.5
        %v2348 = vmul.f32 %v1922, 0.5
        %v2349 = vmul.f32 %v2113, 0.5
        %v2350 = vmul.f32 %v2115, 0.5
        %v2351 = vmul.f32 %v1538, 0.5
        %v2352 = vmul.f32 %v1540, 0.5
        %v2353 = vmul.f32 %v1731, 0.5
        %v2354 = vmul.f32 %v1733, 0.5
        %v2355 = vmul.f32 %v1924, 0.5
        %v2356 = vmul.f32 %v1926, 0.5
        %v2357 = vmul.f32 %v2117, 0.5
        %v2358 = vmul.f32 %v2119, 0.5
        %v2359 = vmul.f32 %v1544, 0.5
        %v2360 = vmul.f32 %v1546, 0.5
        %v2361 = vmul.f32 %v1737, 0.5
        %v2362 = vmul.f32 %v1739, 0.5
        %v2363 = vmul.f32 %v1930, 0.5
        %v2364 = vmul.f32 %v1932, 0.5
        %v2365 = vmul.f32 %v2123, 0.5
        %v2366 = vmul.f32 %v2125, 0.5
        %v2367 = vmul.f32 %v1548, 0.5
        %v2368 = vmul.f32 %v1550, 0.5
        %v2369 = vmul.f32 %v1741, 0.5
        %v2370 = vmul.f32 %v1743, 0.5
        %v2371 = vmul.f32 %v1934, 0.5
        %v2372 = vmul.f32 %v1936, 0.5
        %v2373 = vmul.f32 %v2127, 0.5
        %v2374 = vmul.f32 %v2129, 0.5
        %v2375 = vmul.f32 %v1554, 0.5
        %v2376 = vmul.f32 %v1556, 0.5
        %v2377 = vmul.f32 %v1747, 0.5
        %v2378 = vmul.f32 %v1749, 0.5
        %v2379 = vmul.f32 %v1940, 0.5
        %v2380 = vmul.f32 %v1942, 0.5
        %v2381 = vmul.f32 %v2133, 0.5
        %v2382 = vmul.f32 %v2135, 0.5
        %v2383 = vmul.f32 %v1558, 0.5
        %v2384 = vmul.f32 %v1560, 0.5
        %v2385 = vmul.f32 %v1751, 0.5
        %v2386 = vmul.f32 %v1753, 0.5
        %v2387 = vmul.f32 %v1944, 0.5
        %v2388 = vmul.f32 %v1946, 0.5
        %v2389 = vmul.f32 %v2137, 0.5
        %v2390 = vmul.f32 %v2139, 0.5
        %v2391 = vmul.f32 %v1564, 0.5
        %v2392 = vmul.f32 %v1566, 0.5
        %v2393 = vmul.f32 %v1757, 0.5
        %v2394 = vmul.f32 %v1759, 0.5
        %v2395 = vmul.f32 %v1950, 0.5
        %v2396 = vmul.f32 %v1952, 0.5
        %v2397 = vmul.f32 %v2143, 0.5
        %v2398 = vmul.f32 %v2145, 0.5
        %v2399 = vmul.f32 %v1568, 0.5
        %v2400 = vmul.f32 %v1570, 0.5
        %v2401 = vmul.f32 %v1761, 0.5
        %v2402 = vmul.f32 %v1763, 0.5
        %v2403 = vmul.f32 %v1954, 0.5
        %v2404 = vmul.f32 %v1956, 0.5
        %v2405 = vmul.f32 %v2147, 0.5
        %v2406 = vmul.f32 %v2149, 0.5
        %v2407 = vmul.f32 %v1414, 0.70710677
        %v2408 = vmul.f32 %v1416, 0.70710677
        %v2409 = vmul.f32 %v1607, 0.70710677
        %v2410 = vmul.f32 %v1609, 0.70710677
        %v2411 = vmul.f32 %v1800, 0.70710677
        %v2412 = vmul.f32 %v1802, 0.70710677
        %v2413 = vmul.f32 %v1993, 0.70710677
        %v2414 = vmul.f32 %v1995, 0.70710677
        %v2415 = vmul.f32 %v1418, 0.70710677
        %v2416 = vmul.f32 %v1420, 0.70710677
        %v2417 = vmul.f32 %v1611, 0.70710677
        %v2418 = vmul.f32 %v1613, 0.70710677
        %v2419 = vmul.f32 %v1804, 0.70710677
        %v2420 = vmul.f32 %v1806, 0.70710677
        %v2421 = vmul.f32 %v1997, 0.70710677
        %v2422 = vmul.f32 %v1999, 0.70710677
        %v2423 = vmul.f32 %v1424, 0.70710677
        %v2424 = vmul.f32 %v1426, 0.70710677
        %v2425 = vmul.f32 %v1617, 0.70710677
        %v2426 = vmul.f32 %v1619, 0.70710677
        %v2427 = vmul.f32 %v1810, 0.70710677
        %v2428 = vmul.f32 %v1812, 0.70710677
        %v2429 = vmul.f32 %v2003, 0.70710677
        %v2430 = vmul.f32 %v2005, 0.70710677
        %v2431 = vmul.f32 %v1428, 0.70710677
        %v2432 = vmul.f32 %v1430, 0.70710677
        %v2433 = vmul.f32 %v1621, 0.70710677
        %v2434 = vmul.f32 %v1623, 0.70710677
        %v2435 = vmul.f32 %v1814, 0.70710677
        %v2436 = vmul.f32 %v1816, 0.70710677
        %v2437 = vmul.f32 %v2007, 0.70710677
        %v2438 = vmul.f32 %v2009, 0.70710677
        %v2439 = vmul.f32 %v1434, 0.70710677
        %v2440 = vmul.f32 %v1436, 0.70710677
        %v2441 = vmul.f32 %v1627, 0.70710677
        %v2442 = vmul.f32 %v1629, 0.70710677
        %v2443 = vmul.f32 %v1820, 0.70710677
        %v2444 = vmul.f32 %v1822, 0.70710677
        %v2445 = vmul.f32 %v2013, 0.70710677
        %v2446 = vmul.f32 %v2015, 0.70710677
        %v2447 = vmul.f32 %v1438, 0.70710677
        %v2448 = vmul.f32 %v1440, 0.70710677
        %v2449 = vmul.f32 %v1631, 0.70710677
        %v2450 = vmul.f32 %v1633, 0.70710677
        %v2451 = vmul.f32 %v1824, 0.70710677
        %v2452 = vmul.f32 %v1826, 0.70710677
        %v2453 = vmul.f32 %v2017, 0.70710677
        %v2454 = vmul.f32 %v2019, 0.70710677
        %v2455 = vmul.f32 %v1444, 0.70710677
        %v2456 = vmul.f32 %v1446, 0.70710677
        %v2457 = vmul.f32 %v1637, 0.70710677
        %v2458 = vmul.f32 %v1639, 0.70710677
        %v2459 = vmul.f32 %v1830, 0.70710677
        %v2460 = vmul.f32 %v1832, 0.70710677
        %v2461 = vmul.f32 %v2023, 0.70710677
        %v2462 = vmul.f32 %v2025, 0.70710677
        %v2463 = vmul.f32 %v1448, 0.70710677
        %v2464 = vmul.f32 %v1450, 0.70710677
        %v2465 = vmul.f32 %v1641, 0.70710677
        %v2466 = vmul.f32 %v1643, 0.70710677
        %v2467 = vmul.f32 %v1834, 0.70710677
        %v2468 = vmul.f32 %v1836, 0.70710677
        %v2469 = vmul.f32 %v2027, 0.70710677
        %v2470 = vmul.f32 %v2029, 0.70710677
        %v2471 = vmul.f32 %v1454, 0.70710677
        %v2472 = vmul.f32 %v1456, 0.70710677
        %v2473 = vmul.f32 %v1647, 0.70710677
        %v2474 = vmul.f32 %v1649, 0.70710677
        %v2475 = vmul.f32 %v1840, 0.70710677
        %v2476 = vmul.f32 %v1842, 0.70710677
        %v2477 = vmul.f32 %v2033, 0.70710677
        %v2478 = vmul.f32 %v2035, 0.70710677
        %v2479 = vmul.f32 %v1458, 0.70710677
        %v2480 = vmul.f32 %v1460, 0.70710677
        %v2481 = vmul.f32 %v1651, 0.70710677
        %v2482 = vmul.f32 %v1653, 0.70710677
        %v2483 = vmul.f32 %v1844, 0.70710677
        %v2484 = vmul.f32 %v1846, 0.70710677
        %v2485 = vmul.f32 %v2037, 0.70710677
        %v2486 = vmul.f32 %v2039, 0.70710677
        %v2487 = vmul.f32 %v1464, 0.70710677
        %v2488 = vmul.f32 %v1466, 0.70710677
        %v2489 = vmul.f32 %v1657, 0.70710677
        %v2490 = vmul.f32 %v1659, 0.70710677
        %v2491 = vmul.f32 %v1850, 0.70710677
        %v2492 = vmul.f32 %v1852, 0.70710677
        %v2493 = vmul.f32 %v2043, 0.70710677
        %v2494 = vmul.f32 %v2045, 0.70710677
        %v2495 = vmul.f32 %v1468, 0.70710677
        %v2496 = vmul.f32 %v1470, 0.70710677
        %v2497 = vmul.f32 %v1661, 0.70710677
        %v2498 = vmul.f32 %v1663, 0.70710677
        %v2499 = vmul.f32 %v1854, 0.70710677
        %v2500 = vmul.f32 %v1856, 0.70710677
        %v2501 = vmul.f32 %v2047, 0.70710677
        %v2502 = vmul.f32 %v2049, 0.70710677
        %v2503 = vmul.f32 %v1474, 0.70710677
        %v2504 = vmul.f32 %v1476, 0.70710677
        %v2505 = vmul.f32 %v1667, 0.70710677
        %v2506 = vmul.f32 %v1669, 0.70710677
        %v2507 = vmul.f32 %v1860, 0.70710677
        %v2508 = vmul.f32 %v1862, 0.70710677
        %v2509 = vmul.f32 %v2053, 0.70710677
        %v2510 = vmul.f32 %v2055, 0.70710677
        %v2511 = vmul.f32 %v1478, 0.70710677
        %v2512 = vmul.f32 %v1480, 0.70710677
        %v2513 = vmul.f32 %v1671, 0.70710677
        %v2514 = vmul.f32 %v1673, 0.70710677
        %v2515 = vmul.f32 %v1864, 0.70710677
        %v2516 = vmul.f32 %v1866, 0.70710677
        %v2517 = vmul.f32 %v2057, 0.70710677
        %v2518 = vmul.f32 %v2059, 0.70710677
        %v2519 = vmul.f32 %v1484, 0.70710677
        %v2520 = vmul.f32 %v1486, 0.70710677
        %v2521 = vmul.f32 %v1677, 0.70710677
        %v2522 = vmul.f32 %v1679, 0.70710677
        %v2523 = vmul.f32 %v1870, 0.70710677
        %v2524 = vmul.f32 %v1872, 0.70710677
        %v2525 = vmul.f32 %v2063, 0.70710677
        %v2526 = vmul.f32 %v2065, 0.70710677
        %v2527 = vmul.f32 %v1488, 0.70710677
        %v2528 = vmul.f32 %v1490, 0.70710677
        %v2529 = vmul.f32 %v1681, 0.70710677
        %v2530 = vmul.f32 %v1683, 0.70710677
        %v2531 = vmul.f32 %v1874, 0.70710677
        %v2532 = vmul.f32 %v1876, 0.70710677
        %v2533 = vmul.f32 %v2067, 0.70710677
        %v2534 = vmul.f32 %v2069, 0.70710677
        %v2535 = vmul.f32 %v1494, 0.70710677
        %v2536 = vmul.f32 %v1496, 0.70710677
        %v2537 = vmul.f32 %v1687, 0.70710677
        %v2538 = vmul.f32 %v1689, 0.70710677
        %v2539 = vmul.f32 %v1880, 0.70710677
        %v2540 = vmul.f32 %v1882, 0.70710677
        %v2541 = vmul.f32 %v2073, 0.70710677
        %v2542 = vmul.f32 %v2075, 0.70710677
        %v2543 = vmul.f32 %v1498, 0.70710677
        %v2544 = vmul.f32 %v1500, 0.70710677
        %v2545 = vmul.f32 %v1691, 0.70710677
        %v2546 = vmul.f32 %v1693, 0.70710677
        %v2547 = vmul.f32 %v1884, 0.70710677
        %v2548 = vmul.f32 %v1886, 0.70710677
        %v2549 = vmul.f32 %v2077, 0.70710677
        %v2550 = vmul.f32 %v2079, 0.70710677
        %v2551 = vmul.f32 %v1504, 0.70710677
        %v2552 = vmul.f32 %v1506, 0.70710677
        %v2553 = vmul.f32 %v1697, 0.70710677
        %v2554 = vmul.f32 %v1699, 0.70710677
        %v2555 = vmul.f32 %v1890, 0.70710677
        %v2556 = vmul.f32 %v1892, 0.70710677
        %v2557 = vmul.f32 %v2083, 0.70710677
        %v2558 = vmul.f32 %v2085, 0.70710677
        %v2559 = vmul.f32 %v1508, 0.70710677
        %v2560 = vmul.f32 %v1510, 0.70710677
        %v2561 = vmul.f32 %v1701, 0.70710677
        %v2562 = vmul.f32 %v1703, 0.70710677
        %v2563 = vmul.f32 %v1894, 0.70710677
        %v2564 = vmul.f32 %v1896, 0.70710677
        %v2565 = vmul.f32 %v2087, 0.70710677
        %v2566 = vmul.f32 %v2089, 0.70710677
        %v2567 = vmul.f32 %v1514, 0.70710677
        %v2568 = vmul.f32 %v1516, 0.70710677
        %v2569 = vmul.f32 %v1707, 0.70710677
        %v2570 = vmul.f32 %v1709, 0.70710677
        %v2571 = vmul.f32 %v1900, 0.70710677
        %v2572 = vmul.f32 %v1902, 0.70710677
        %v2573 = vmul.f32 %v2093, 0.70710677
        %v2574 = vmul.f32 %v2095, 0.70710677
        %v2575 = vmul.f32 %v1518, 0.70710677
        %v2576 = vmul.f32 %v1520, 0.70710677
        %v2577 = vmul.f32 %v1711, 0.70710677
        %v2578 = vmul.f32 %v1713, 0.70710677
        %v2579 = vmul.f32 %v1904, 0.70710677
        %v2580 = vmul.f32 %v1906, 0.70710677
        %v2581 = vmul.f32 %v2097, 0.70710677
        %v2582 = vmul.f32 %v2099, 0.70710677
        %v2583 = vmul.f32 %v1524, 0.70710677
        %v2584 = vmul.f32 %v1526, 0.70710677
        %v2585 = vmul.f32 %v1717, 0.70710677
        %v2586 = vmul.f32 %v1719, 0.70710677
        %v2587 = vmul.f32 %v1910, 0.70710677
        %v2588 = vmul.f32 %v1912, 0.70710677
        %v2589 = vmul.f32 %v2103, 0.70710677
        %v2590 = vmul.f32 %v2105, 0.70710677
        %v2591 = vmul.f32 %v1528, 0.70710677
        %v2592 = vmul.f32 %v1530, 0.70710677
        %v2593 = vmul.f32 %v1721, 0.70710677
        %v2594 = vmul.f32 %v1723, 0.70710677
        %v2595 = vmul.f32 %v1914, 0.70710677
        %v2596 = vmul.f32 %v1916, 0.70710677
        %v2597 = vmul.f32 %v2107, 0.70710677
        %v2598 = vmul.f32 %v2109, 0.70710677
        %v2599 = vmul.f32 %v1534, 0.70710677
        %v2600 = vmul.f32 %v1536, 0.70710677
        %v2601 = vmul.f32 %v1727, 0.70710677
        %v2602 = vmul.f32 %v1729, 0.70710677
        %v2603 = vmul.f32 %v1920, 0.70710677
        %v2604 = vmul.f32 %v1922, 0.70710677
        %v2605 = vmul.f32 %v2113, 0.70710677
        %v2606 = vmul.f32 %v2115, 0.70710677
        %v2607 = vmul.f32 %v1538, 0.70710677
        %v2608 = vmul.f32 %v1540, 0.70710677
        %v2609 = vmul.f32 %v1731, 0.70710677
        %v2610 = vmul.f32 %v1733, 0.70710677
        %v2611 = vmul.f32 %v1924, 0.70710677
        %v2612 = vmul.f32 %v1926, 0.70710677
        %v2613 = vmul.f32 %v2117, 0.70710677
        %v2614 = vmul.f32 %v2119, 0.70710677
        %v2615 = vmul.f32 %v1544, 0.70710677
        %v2616 = vmul.f32 %v1546, 0.70710677
        %v2617 = vmul.f32 %v1737, 0.70710677
        %v2618 = vmul.f32 %v1739, 0.70710677
        %v2619 = vmul.f32 %v1930, 0.70710677
        %v2620 = vmul.f32 %v1932, 0.70710677
        %v2621 = vmul.f32 %v2123, 0.70710677
        %v2622 = vmul.f32 %v2125, 0.70710677
        %v2623 = vmul.f32 %v1548, 0.70710677
        %v2624 = vmul.f32 %v1550, 0.70710677
        %v2625 = vmul.f32 %v1741, 0.70710677
        %v2626 = vmul.f32 %v1743, 0.70710677
        %v2627 = vmul.f32 %v1934, 0.70710677
        %v2628 = vmul.f32 %v1936, 0.70710677
        %v2629 = vmul.f32 %v2127, 0.70710677
        %v2630 = vmul.f32 %v2129, 0.70710677
        %v2631 = vmul.f32 %v1554, 0.70710677
        %v2632 = vmul.f32 %v1556, 0.70710677
        %v2633 = vmul.f32 %v1747, 0.70710677
        %v2634 = vmul.f32 %v1749, 0.70710677
        %v2635 = vmul.f32 %v1940, 0.70710677
        %v2636 = vmul.f32 %v1942, 0.70710677
        %v2637 = vmul.f32 %v2133, 0.70710677
        %v2638 = vmul.f32 %v2135, 0.70710677
        %v2639 = vmul.f32 %v1558, 0.70710677
        %v2640 = vmul.f32 %v1560, 0.70710677
        %v2641 = vmul.f32 %v1751, 0.70710677
        %v2642 = vmul.f32 %v1753, 0.70710677
        %v2643 = vmul.f32 %v1944, 0.70710677
        %v2644 = vmul.f32 %v1946, 0.70710677
        %v2645 = vmul.f32 %v2137, 0.70710677
        %v2646 = vmul.f32 %v2139, 0.70710677
        %v2647 = vmul.f32 %v1564, 0.70710677
        %v2648 = vmul.f32 %v1566, 0.70710677
        %v2649 = vmul.f32 %v1757, 0.70710677
        %v2650 = vmul.f32 %v1759, 0.70710677
        %v2651 = vmul.f32 %v1950, 0.70710677
        %v2652 = vmul.f32 %v1952, 0.70710677
        %v2653 = vmul.f32 %v2143, 0.70710677
        %v2654 = vmul.f32 %v2145, 0.70710677
        %v2655 = vmul.f32 %v1568, 0.70710677
        %v2656 = vmul.f32 %v1570, 0.70710677
        %v2657 = vmul.f32 %v1761, 0.70710677
        %v2658 = vmul.f32 %v1763, 0.70710677
        %v2659 = vmul.f32 %v1954, 0.70710677
        %v2660 = vmul.f32 %v1956, 0.70710677
        %v2661 = vmul.f32 %v2147, 0.70710677
        %v2662 = vmul.f32 %v2149, 0.70710677
        %v2663 = verf.f32.pop %v2407
        %v2664 = verf.f32.pop %v2408
        %v2665 = verf.f32.pop %v2409
        %v2666 = verf.f32.pop %v2410
        %v2667 = verf.f32.pop %v2411
        %v2668 = verf.f32.pop %v2412
        %v2669 = verf.f32.pop %v2413
        %v2670 = verf.f32.pop %v2414
        %v2671 = verf.f32.pop %v2415
        %v2672 = verf.f32.pop %v2416
        %v2673 = verf.f32.pop %v2417
        %v2674 = verf.f32.pop %v2418
        %v2675 = verf.f32.pop %v2419
        %v2676 = verf.f32.pop %v2420
        %v2677 = verf.f32.pop %v2421
        %v2678 = verf.f32.pop %v2422
        %v2679 = verf.f32.pop %v2423
        %v2680 = verf.f32.pop %v2424
        %v2681 = verf.f32.pop %v2425
        %v2682 = verf.f32.pop %v2426
        %v2683 = verf.f32.pop %v2427
        %v2684 = verf.f32.pop %v2428
        %v2685 = verf.f32.pop %v2429
        %v2686 = verf.f32.pop %v2430
        %v2687 = verf.f32.pop %v2431
        %v2688 = verf.f32.pop %v2432
        %v2689 = verf.f32.pop %v2433
        %v2690 = verf.f32.pop %v2434
        %v2691 = verf.f32.pop %v2435
        %v2692 = verf.f32.pop %v2436
        %v2693 = verf.f32.pop %v2437
        %v2694 = verf.f32.pop %v2438
        %v2695 = verf.f32.pop %v2439
        %v2696 = verf.f32.pop %v2440
        %v2697 = verf.f32.pop %v2441
        %v2698 = verf.f32.pop %v2442
        %v2699 = verf.f32.pop %v2443
        %v2700 = verf.f32.pop %v2444
        %v2701 = verf.f32.pop %v2445
        %v2702 = verf.f32.pop %v2446
        %v2703 = verf.f32.pop %v2447
        %v2704 = verf.f32.pop %v2448
        %v2705 = verf.f32.pop %v2449
        %v2706 = verf.f32.pop %v2450
        %v2707 = verf.f32.pop %v2451
        %v2708 = verf.f32.pop %v2452
        %v2709 = verf.f32.pop %v2453
        %v2710 = verf.f32.pop %v2454
        %v2711 = verf.f32.pop %v2455
        %v2712 = verf.f32.pop %v2456
        %v2713 = verf.f32.pop %v2457
        %v2714 = verf.f32.pop %v2458
        %v2715 = verf.f32.pop %v2459
        %v2716 = verf.f32.pop %v2460
        %v2717 = verf.f32.pop %v2461
        %v2718 = verf.f32.pop %v2462
        %v2719 = verf.f32.pop %v2463
        %v2720 = verf.f32.pop %v2464
        %v2721 = verf.f32.pop %v2465
        %v2722 = verf.f32.pop %v2466
        %v2723 = verf.f32.pop %v2467
        %v2724 = verf.f32.pop %v2468
        %v2725 = verf.f32.pop %v2469
        %v2726 = verf.f32.pop %v2470
        %v2727 = verf.f32.pop %v2471
        %v2728 = verf.f32.pop %v2472
        %v2729 = verf.f32.pop %v2473
        %v2730 = verf.f32.pop %v2474
        %v2731 = verf.f32.pop %v2475
        %v2732 = verf.f32.pop %v2476
        %v2733 = verf.f32.pop %v2477
        %v2734 = verf.f32.pop %v2478
        %v2735 = verf.f32.pop %v2479
        %v2736 = verf.f32.pop %v2480
        %v2737 = verf.f32.pop %v2481
        %v2738 = verf.f32.pop %v2482
        %v2739 = verf.f32.pop %v2483
        %v2740 = verf.f32.pop %v2484
        %v2741 = verf.f32.pop %v2485
        %v2742 = verf.f32.pop %v2486
        %v2743 = verf.f32.pop %v2487
        %v2744 = verf.f32.pop %v2488
        %v2745 = verf.f32.pop %v2489
        %v2746 = verf.f32.pop %v2490
        %v2747 = verf.f32.pop %v2491
        %v2748 = verf.f32.pop %v2492
        %v2749 = verf.f32.pop %v2493
        %v2750 = verf.f32.pop %v2494
        %v2751 = verf.f32.pop %v2495
        %v2752 = verf.f32.pop %v2496
        %v2753 = verf.f32.pop %v2497
        %v2754 = verf.f32.pop %v2498
        %v2755 = verf.f32.pop %v2499
        %v2756 = verf.f32.pop %v2500
        %v2757 = verf.f32.pop %v2501
        %v2758 = verf.f32.pop %v2502
        %v2759 = verf.f32.pop %v2503
        %v2760 = verf.f32.pop %v2504
        %v2761 = verf.f32.pop %v2505
        %v2762 = verf.f32.pop %v2506
        %v2763 = verf.f32.pop %v2507
        %v2764 = verf.f32.pop %v2508
        %v2765 = verf.f32.pop %v2509
        %v2766 = verf.f32.pop %v2510
        %v2767 = verf.f32.pop %v2511
        %v2768 = verf.f32.pop %v2512
        %v2769 = verf.f32.pop %v2513
        %v2770 = verf.f32.pop %v2514
        %v2771 = verf.f32.pop %v2515
        %v2772 = verf.f32.pop %v2516
        %v2773 = verf.f32.pop %v2517
        %v2774 = verf.f32.pop %v2518
        %v2775 = verf.f32.pop %v2519
        %v2776 = verf.f32.pop %v2520
        %v2777 = verf.f32.pop %v2521
        %v2778 = verf.f32.pop %v2522
        %v2779 = verf.f32.pop %v2523
        %v2780 = verf.f32.pop %v2524
        %v2781 = verf.f32.pop %v2525
        %v2782 = verf.f32.pop %v2526
        %v2783 = verf.f32.pop %v2527
        %v2784 = verf.f32.pop %v2528
        %v2785 = verf.f32.pop %v2529
        %v2786 = verf.f32.pop %v2530
        %v2787 = verf.f32.pop %v2531
        %v2788 = verf.f32.pop %v2532
        %v2789 = verf.f32.pop %v2533
        %v2790 = verf.f32.pop %v2534
        %v2791 = verf.f32.pop %v2535
        %v2792 = verf.f32.pop %v2536
        %v2793 = verf.f32.pop %v2537
        %v2794 = verf.f32.pop %v2538
        %v2795 = verf.f32.pop %v2539
        %v2796 = verf.f32.pop %v2540
        %v2797 = verf.f32.pop %v2541
        %v2798 = verf.f32.pop %v2542
        %v2799 = verf.f32.pop %v2543
        %v2800 = verf.f32.pop %v2544
        %v2801 = verf.f32.pop %v2545
        %v2802 = verf.f32.pop %v2546
        %v2803 = verf.f32.pop %v2547
        %v2804 = verf.f32.pop %v2548
        %v2805 = verf.f32.pop %v2549
        %v2806 = verf.f32.pop %v2550
        %v2807 = verf.f32.pop %v2551
        %v2808 = verf.f32.pop %v2552
        %v2809 = verf.f32.pop %v2553
        %v2810 = verf.f32.pop %v2554
        %v2811 = verf.f32.pop %v2555
        %v2812 = verf.f32.pop %v2556
        %v2813 = verf.f32.pop %v2557
        %v2814 = verf.f32.pop %v2558
        %v2815 = verf.f32.pop %v2559
        %v2816 = verf.f32.pop %v2560
        %v2817 = verf.f32.pop %v2561
        %v2818 = verf.f32.pop %v2562
        %v2819 = verf.f32.pop %v2563
        %v2820 = verf.f32.pop %v2564
        %v2821 = verf.f32.pop %v2565
        %v2822 = verf.f32.pop %v2566
        %v2823 = verf.f32.pop %v2567
        %v2824 = verf.f32.pop %v2568
        %v2825 = verf.f32.pop %v2569
        %v2826 = verf.f32.pop %v2570
        %v2827 = verf.f32.pop %v2571
        %v2828 = verf.f32.pop %v2572
        %v2829 = verf.f32.pop %v2573
        %v2830 = verf.f32.pop %v2574
        %v2831 = verf.f32.pop %v2575
        %v2832 = verf.f32.pop %v2576
        %v2833 = verf.f32.pop %v2577
        %v2834 = verf.f32.pop %v2578
        %v2835 = verf.f32.pop %v2579
        %v2836 = verf.f32.pop %v2580
        %v2837 = verf.f32.pop %v2581
        %v2838 = verf.f32.pop %v2582
        %v2839 = verf.f32.pop %v2583
        %v2840 = verf.f32.pop %v2584
        %v2841 = verf.f32.pop %v2585
        %v2842 = verf.f32.pop %v2586
        %v2843 = verf.f32.pop %v2587
        %v2844 = verf.f32.pop %v2588
        %v2845 = verf.f32.pop %v2589
        %v2846 = verf.f32.pop %v2590
        %v2847 = verf.f32.pop %v2591
        %v2848 = verf.f32.pop %v2592
        %v2849 = verf.f32.pop %v2593
        %v2850 = verf.f32.pop %v2594
        %v2851 = verf.f32.pop %v2595
        %v2852 = verf.f32.pop %v2596
        %v2853 = verf.f32.pop %v2597
        %v2854 = verf.f32.pop %v2598
        %v2855 = verf.f32.pop %v2599
        %v2856 = verf.f32.pop %v2600
        %v2857 = verf.f32.pop %v2601
        %v2858 = verf.f32.pop %v2602
        %v2859 = verf.f32.pop %v2603
        %v2860 = verf.f32.pop %v2604
        %v2861 = verf.f32.pop %v2605
        %v2862 = verf.f32.pop %v2606
        %v2863 = verf.f32.pop %v2607
        %v2864 = verf.f32.pop %v2608
        %v2865 = verf.f32.pop %v2609
        %v2866 = verf.f32.pop %v2610
        %v2867 = verf.f32.pop %v2611
        %v2868 = verf.f32.pop %v2612
        %v2869 = verf.f32.pop %v2613
        %v2870 = verf.f32.pop %v2614
        %v2871 = verf.f32.pop %v2615
        %v2872 = verf.f32.pop %v2616
        %v2873 = verf.f32.pop %v2617
        %v2874 = verf.f32.pop %v2618
        %v2875 = verf.f32.pop %v2619
        %v2876 = verf.f32.pop %v2620
        %v2877 = verf.f32.pop %v2621
        %v2878 = verf.f32.pop %v2622
        %v2879 = verf.f32.pop %v2623
        %v2880 = verf.f32.pop %v2624
        %v2881 = verf.f32.pop %v2625
        %v2882 = verf.f32.pop %v2626
        %v2883 = verf.f32.pop %v2627
        %v2884 = verf.f32.pop %v2628
        %v2885 = verf.f32.pop %v2629
        %v2886 = verf.f32.pop %v2630
        %v2887 = verf.f32.pop %v2631
        %v2888 = verf.f32.pop %v2632
        %v2889 = verf.f32.pop %v2633
        %v2890 = verf.f32.pop %v2634
        %v2891 = verf.f32.pop %v2635
        %v2892 = verf.f32.pop %v2636
        %v2893 = verf.f32.pop %v2637
        %v2894 = verf.f32.pop %v2638
        %v2895 = verf.f32.pop %v2639
        %v2896 = verf.f32.pop %v2640
        %v2897 = verf.f32.pop %v2641
        %v2898 = verf.f32.pop %v2642
        %v2899 = verf.f32.pop %v2643
        %v2900 = verf.f32.pop %v2644
        %v2901 = verf.f32.pop %v2645
        %v2902 = verf.f32.pop %v2646
        %v2903 = verf.f32.pop %v2647
        %v2904 = verf.f32.pop %v2648
        %v2905 = verf.f32.pop %v2649
        %v2906 = verf.f32.pop %v2650
        %v2907 = verf.f32.pop %v2651
        %v2908 = verf.f32.pop %v2652
        %v2909 = verf.f32.pop %v2653
        %v2910 = verf.f32.pop %v2654
        %v2911 = verf.f32.pop %v2655
        %v2912 = verf.f32.pop %v2656
        %v2913 = verf.f32.pop %v2657
        %v2914 = verf.f32.pop %v2658
        %v2915 = verf.f32.pop %v2659
        %v2916 = verf.f32.pop %v2660
        %v2917 = verf.f32.pop %v2661
        %v2918 = verf.f32.pop %v2662
        %v2919 = vadd.f32 %v2663, 1.0
        %v2920 = vadd.f32 %v2664, 1.0
        %v2921 = vadd.f32 %v2665, 1.0
        %v2922 = vadd.f32 %v2666, 1.0
        %v2923 = vadd.f32 %v2667, 1.0
        %v2924 = vadd.f32 %v2668, 1.0
        %v2925 = vadd.f32 %v2669, 1.0
        %v2926 = vadd.f32 %v2670, 1.0
        %v2927 = vadd.f32 %v2671, 1.0
        %v2928 = vadd.f32 %v2672, 1.0
        %v2929 = vadd.f32 %v2673, 1.0
        %v2930 = vadd.f32 %v2674, 1.0
        %v2931 = vadd.f32 %v2675, 1.0
        %v2932 = vadd.f32 %v2676, 1.0
        %v2933 = vadd.f32 %v2677, 1.0
        %v2934 = vadd.f32 %v2678, 1.0
        %v2935 = vadd.f32 %v2679, 1.0
        %v2936 = vadd.f32 %v2680, 1.0
        %v2937 = vadd.f32 %v2681, 1.0
        %v2938 = vadd.f32 %v2682, 1.0
        %v2939 = vadd.f32 %v2683, 1.0
        %v2940 = vadd.f32 %v2684, 1.0
        %v2941 = vadd.f32 %v2685, 1.0
        %v2942 = vadd.f32 %v2686, 1.0
        %v2943 = vadd.f32 %v2687, 1.0
        %v2944 = vadd.f32 %v2688, 1.0
        %v2945 = vadd.f32 %v2689, 1.0
        %v2946 = vadd.f32 %v2690, 1.0
        %v2947 = vadd.f32 %v2691, 1.0
        %v2948 = vadd.f32 %v2692, 1.0
        %v2949 = vadd.f32 %v2693, 1.0
        %v2950 = vadd.f32 %v2694, 1.0
        %v2951 = vadd.f32 %v2695, 1.0
        %v2952 = vadd.f32 %v2696, 1.0
        %v2953 = vadd.f32 %v2697, 1.0
        %v2954 = vadd.f32 %v2698, 1.0
        %v2955 = vadd.f32 %v2699, 1.0
        %v2956 = vadd.f32 %v2700, 1.0
        %v2957 = vadd.f32 %v2701, 1.0
        %v2958 = vadd.f32 %v2702, 1.0
        %v2959 = vadd.f32 %v2703, 1.0
        %v2960 = vadd.f32 %v2704, 1.0
        %v2961 = vadd.f32 %v2705, 1.0
        %v2962 = vadd.f32 %v2706, 1.0
        %v2963 = vadd.f32 %v2707, 1.0
        %v2964 = vadd.f32 %v2708, 1.0
        %v2965 = vadd.f32 %v2709, 1.0
        %v2966 = vadd.f32 %v2710, 1.0
        %v2967 = vadd.f32 %v2711, 1.0
        %v2968 = vadd.f32 %v2712, 1.0
        %v2969 = vadd.f32 %v2713, 1.0
        %v2970 = vadd.f32 %v2714, 1.0
        %v2971 = vadd.f32 %v2715, 1.0
        %v2972 = vadd.f32 %v2716, 1.0
        %v2973 = vadd.f32 %v2717, 1.0
        %v2974 = vadd.f32 %v2718, 1.0
        %v2975 = vadd.f32 %v2719, 1.0
        %v2976 = vadd.f32 %v2720, 1.0
        %v2977 = vadd.f32 %v2721, 1.0
        %v2978 = vadd.f32 %v2722, 1.0
        %v2979 = vadd.f32 %v2723, 1.0
        %v2980 = vadd.f32 %v2724, 1.0
        %v2981 = vadd.f32 %v2725, 1.0
        %v2982 = vadd.f32 %v2726, 1.0
        %v2983 = vadd.f32 %v2727, 1.0
        %v2984 = vadd.f32 %v2728, 1.0
        %v2985 = vadd.f32 %v2729, 1.0
        %v2986 = vadd.f32 %v2730, 1.0
        %v2987 = vadd.f32 %v2731, 1.0
        %v2988 = vadd.f32 %v2732, 1.0
        %v2989 = vadd.f32 %v2733, 1.0
        %v2990 = vadd.f32 %v2734, 1.0
        %v2991 = vadd.f32 %v2735, 1.0
        %v2992 = vadd.f32 %v2736, 1.0
        %v2993 = vadd.f32 %v2737, 1.0
        %v2994 = vadd.f32 %v2738, 1.0
        %v2995 = vadd.f32 %v2739, 1.0
        %v2996 = vadd.f32 %v2740, 1.0
        %v2997 = vadd.f32 %v2741, 1.0
        %v2998 = vadd.f32 %v2742, 1.0
        %v2999 = vadd.f32 %v2743, 1.0
        %v3000 = vadd.f32 %v2744, 1.0
        %v3001 = vadd.f32 %v2745, 1.0
        %v3002 = vadd.f32 %v2746, 1.0
        %v3003 = vadd.f32 %v2747, 1.0
        %v3004 = vadd.f32 %v2748, 1.0
        %v3005 = vadd.f32 %v2749, 1.0
        %v3006 = vadd.f32 %v2750, 1.0
        %v3007 = vadd.f32 %v2751, 1.0
        %v3008 = vadd.f32 %v2752, 1.0
        %v3009 = vadd.f32 %v2753, 1.0
        %v3010 = vadd.f32 %v2754, 1.0
        %v3011 = vadd.f32 %v2755, 1.0
        %v3012 = vadd.f32 %v2756, 1.0
        %v3013 = vadd.f32 %v2757, 1.0
        %v3014 = vadd.f32 %v2758, 1.0
        %v3015 = vadd.f32 %v2759, 1.0
        %v3016 = vadd.f32 %v2760, 1.0
        %v3017 = vadd.f32 %v2761, 1.0
        %v3018 = vadd.f32 %v2762, 1.0
        %v3019 = vadd.f32 %v2763, 1.0
        %v3020 = vadd.f32 %v2764, 1.0
        %v3021 = vadd.f32 %v2765, 1.0
        %v3022 = vadd.f32 %v2766, 1.0
        %v3023 = vadd.f32 %v2767, 1.0
        %v3024 = vadd.f32 %v2768, 1.0
        %v3025 = vadd.f32 %v2769, 1.0
        %v3026 = vadd.f32 %v2770, 1.0
        %v3027 = vadd.f32 %v2771, 1.0
        %v3028 = vadd.f32 %v2772, 1.0
        %v3029 = vadd.f32 %v2773, 1.0
        %v3030 = vadd.f32 %v2774, 1.0
        %v3031 = vadd.f32 %v2775, 1.0
        %v3032 = vadd.f32 %v2776, 1.0
        %v3033 = vadd.f32 %v2777, 1.0
        %v3034 = vadd.f32 %v2778, 1.0
        %v3035 = vadd.f32 %v2779, 1.0
        %v3036 = vadd.f32 %v2780, 1.0
        %v3037 = vadd.f32 %v2781, 1.0
        %v3038 = vadd.f32 %v2782, 1.0
        %v3039 = vadd.f32 %v2783, 1.0
        %v3040 = vadd.f32 %v2784, 1.0
        %v3041 = vadd.f32 %v2785, 1.0
        %v3042 = vadd.f32 %v2786, 1.0
        %v3043 = vadd.f32 %v2787, 1.0
        %v3044 = vadd.f32 %v2788, 1.0
        %v3045 = vadd.f32 %v2789, 1.0
        %v3046 = vadd.f32 %v2790, 1.0
        %v3047 = vadd.f32 %v2791, 1.0
        %v3048 = vadd.f32 %v2792, 1.0
        %v3049 = vadd.f32 %v2793, 1.0
        %v3050 = vadd.f32 %v2794, 1.0
        %v3051 = vadd.f32 %v2795, 1.0
        %v3052 = vadd.f32 %v2796, 1.0
        %v3053 = vadd.f32 %v2797, 1.0
        %v3054 = vadd.f32 %v2798, 1.0
        %v3055 = vadd.f32 %v2799, 1.0
        %v3056 = vadd.f32 %v2800, 1.0
        %v3057 = vadd.f32 %v2801, 1.0
        %v3058 = vadd.f32 %v2802, 1.0
        %v3059 = vadd.f32 %v2803, 1.0
        %v3060 = vadd.f32 %v2804, 1.0
        %v3061 = vadd.f32 %v2805, 1.0
        %v3062 = vadd.f32 %v2806, 1.0
        %v3063 = vadd.f32 %v2807, 1.0
        %v3064 = vadd.f32 %v2808, 1.0
        %v3065 = vadd.f32 %v2809, 1.0
        %v3066 = vadd.f32 %v2810, 1.0
        %v3067 = vadd.f32 %v2811, 1.0
        %v3068 = vadd.f32 %v2812, 1.0
        %v3069 = vadd.f32 %v2813, 1.0
        %v3070 = vadd.f32 %v2814, 1.0
        %v3071 = vadd.f32 %v2815, 1.0
        %v3072 = vadd.f32 %v2816, 1.0
        %v3073 = vadd.f32 %v2817, 1.0
        %v3074 = vadd.f32 %v2818, 1.0
        %v3075 = vadd.f32 %v2819, 1.0
        %v3076 = vadd.f32 %v2820, 1.0
        %v3077 = vadd.f32 %v2821, 1.0
        %v3078 = vadd.f32 %v2822, 1.0
        %v3079 = vadd.f32 %v2823, 1.0
        %v3080 = vadd.f32 %v2824, 1.0
        %v3081 = vadd.f32 %v2825, 1.0
        %v3082 = vadd.f32 %v2826, 1.0
        %v3083 = vadd.f32 %v2827, 1.0
        %v3084 = vadd.f32 %v2828, 1.0
        %v3085 = vadd.f32 %v2829, 1.0
        %v3086 = vadd.f32 %v2830, 1.0
        %v3087 = vadd.f32 %v2831, 1.0
        %v3088 = vadd.f32 %v2832, 1.0
        %v3089 = vadd.f32 %v2833, 1.0
        %v3090 = vadd.f32 %v2834, 1.0
        %v3091 = vadd.f32 %v2835, 1.0
        %v3092 = vadd.f32 %v2836, 1.0
        %v3093 = vadd.f32 %v2837, 1.0
        %v3094 = vadd.f32 %v2838, 1.0
        %v3095 = vadd.f32 %v2839, 1.0
        %v3096 = vadd.f32 %v2840, 1.0
        %v3097 = vadd.f32 %v2841, 1.0
        %v3098 = vadd.f32 %v2842, 1.0
        %v3099 = vadd.f32 %v2843, 1.0
        %v3100 = vadd.f32 %v2844, 1.0
        %v3101 = vadd.f32 %v2845, 1.0
        %v3102 = vadd.f32 %v2846, 1.0
        %v3103 = vadd.f32 %v2847, 1.0
        %v3104 = vadd.f32 %v2848, 1.0
        %v3105 = vadd.f32 %v2849, 1.0
        %v3106 = vadd.f32 %v2850, 1.0
        %v3107 = vadd.f32 %v2851, 1.0
        %v3108 = vadd.f32 %v2852, 1.0
        %v3109 = vadd.f32 %v2853, 1.0
        %v3110 = vadd.f32 %v2854, 1.0
        %v3111 = vadd.f32 %v2855, 1.0
        %v3112 = vadd.f32 %v2856, 1.0
        %v3113 = vadd.f32 %v2857, 1.0
        %v3114 = vadd.f32 %v2858, 1.0
        %v3115 = vadd.f32 %v2859, 1.0
        %v3116 = vadd.f32 %v2860, 1.0
        %v3117 = vadd.f32 %v2861, 1.0
        %v3118 = vadd.f32 %v2862, 1.0
        %v3119 = vadd.f32 %v2863, 1.0
        %v3120 = vadd.f32 %v2864, 1.0
        %v3121 = vadd.f32 %v2865, 1.0
        %v3122 = vadd.f32 %v2866, 1.0
        %v3123 = vadd.f32 %v2867, 1.0
        %v3124 = vadd.f32 %v2868, 1.0
        %v3125 = vadd.f32 %v2869, 1.0
        %v3126 = vadd.f32 %v2870, 1.0
        %v3127 = vadd.f32 %v2871, 1.0
        %v3128 = vadd.f32 %v2872, 1.0
        %v3129 = vadd.f32 %v2873, 1.0
        %v3130 = vadd.f32 %v2874, 1.0
        %v3131 = vadd.f32 %v2875, 1.0
        %v3132 = vadd.f32 %v2876, 1.0
        %v3133 = vadd.f32 %v2877, 1.0
        %v3134 = vadd.f32 %v2878, 1.0
        %v3135 = vadd.f32 %v2879, 1.0
        %v3136 = vadd.f32 %v2880, 1.0
        %v3137 = vadd.f32 %v2881, 1.0
        %v3138 = vadd.f32 %v2882, 1.0
        %v3139 = vadd.f32 %v2883, 1.0
        %v3140 = vadd.f32 %v2884, 1.0
        %v3141 = vadd.f32 %v2885, 1.0
        %v3142 = vadd.f32 %v2886, 1.0
        %v3143 = vadd.f32 %v2887, 1.0
        %v3144 = vadd.f32 %v2888, 1.0
        %v3145 = vadd.f32 %v2889, 1.0
        %v3146 = vadd.f32 %v2890, 1.0
        %v3147 = vadd.f32 %v2891, 1.0
        %v3148 = vadd.f32 %v2892, 1.0
        %v3149 = vadd.f32 %v2893, 1.0
        %v3150 = vadd.f32 %v2894, 1.0
        %v3151 = vadd.f32 %v2895, 1.0
        %v3152 = vadd.f32 %v2896, 1.0
        %v3153 = vadd.f32 %v2897, 1.0
        %v3154 = vadd.f32 %v2898, 1.0
        %v3155 = vadd.f32 %v2899, 1.0
        %v3156 = vadd.f32 %v2900, 1.0
        %v3157 = vadd.f32 %v2901, 1.0
        %v3158 = vadd.f32 %v2902, 1.0
        %v3159 = vadd.f32 %v2903, 1.0
        %v3160 = vadd.f32 %v2904, 1.0
        %v3161 = vadd.f32 %v2905, 1.0
        %v3162 = vadd.f32 %v2906, 1.0
        %v3163 = vadd.f32 %v2907, 1.0
        %v3164 = vadd.f32 %v2908, 1.0
        %v3165 = vadd.f32 %v2909, 1.0
        %v3166 = vadd.f32 %v2910, 1.0
        %v3167 = vadd.f32 %v2911, 1.0
        %v3168 = vadd.f32 %v2912, 1.0
        %v3169 = vadd.f32 %v2913, 1.0
        %v3170 = vadd.f32 %v2914, 1.0
        %v3171 = vadd.f32 %v2915, 1.0
        %v3172 = vadd.f32 %v2916, 1.0
        %v3173 = vadd.f32 %v2917, 1.0
        %v3174 = vadd.f32 %v2918, 1.0
        %v3175 = vmul.f32 %v2151, %v2919
        %v3176 = vmul.f32 %v2152, %v2920
        %v3177 = vmul.f32 %v2153, %v2921
        %v3178 = vmul.f32 %v2154, %v2922
        %v3179 = vmul.f32 %v2155, %v2923
        %v3180 = vmul.f32 %v2156, %v2924
        %v3181 = vmul.f32 %v2157, %v2925
        %v3182 = vmul.f32 %v2158, %v2926
        %v3183 = vmul.f32 %v2159, %v2927
        %v3184 = vmul.f32 %v2160, %v2928
        %v3185 = vmul.f32 %v2161, %v2929
        %v3186 = vmul.f32 %v2162, %v2930
        %v3187 = vmul.f32 %v2163, %v2931
        %v3188 = vmul.f32 %v2164, %v2932
        %v3189 = vmul.f32 %v2165, %v2933
        %v3190 = vmul.f32 %v2166, %v2934
        %v3191 = vmul.f32 %v2167, %v2935
        %v3192 = vmul.f32 %v2168, %v2936
        %v3193 = vmul.f32 %v2169, %v2937
        %v3194 = vmul.f32 %v2170, %v2938
        %v3195 = vmul.f32 %v2171, %v2939
        %v3196 = vmul.f32 %v2172, %v2940
        %v3197 = vmul.f32 %v2173, %v2941
        %v3198 = vmul.f32 %v2174, %v2942
        %v3199 = vmul.f32 %v2175, %v2943
        %v3200 = vmul.f32 %v2176, %v2944
        %v3201 = vmul.f32 %v2177, %v2945
        %v3202 = vmul.f32 %v2178, %v2946
        %v3203 = vmul.f32 %v2179, %v2947
        %v3204 = vmul.f32 %v2180, %v2948
        %v3205 = vmul.f32 %v2181, %v2949
        %v3206 = vmul.f32 %v2182, %v2950
        %v3207 = vmul.f32 %v2183, %v2951
        %v3208 = vmul.f32 %v2184, %v2952
        %v3209 = vmul.f32 %v2185, %v2953
        %v3210 = vmul.f32 %v2186, %v2954
        %v3211 = vmul.f32 %v2187, %v2955
        %v3212 = vmul.f32 %v2188, %v2956
        %v3213 = vmul.f32 %v2189, %v2957
        %v3214 = vmul.f32 %v2190, %v2958
        %v3215 = vmul.f32 %v2191, %v2959
        %v3216 = vmul.f32 %v2192, %v2960
        %v3217 = vmul.f32 %v2193, %v2961
        %v3218 = vmul.f32 %v2194, %v2962
        %v3219 = vmul.f32 %v2195, %v2963
        %v3220 = vmul.f32 %v2196, %v2964
        %v3221 = vmul.f32 %v2197, %v2965
        %v3222 = vmul.f32 %v2198, %v2966
        %v3223 = vmul.f32 %v2199, %v2967
        %v3224 = vmul.f32 %v2200, %v2968
        %v3225 = vmul.f32 %v2201, %v2969
        %v3226 = vmul.f32 %v2202, %v2970
        %v3227 = vmul.f32 %v2203, %v2971
        %v3228 = vmul.f32 %v2204, %v2972
        %v3229 = vmul.f32 %v2205, %v2973
        %v3230 = vmul.f32 %v2206, %v2974
        %v3231 = vmul.f32 %v2207, %v2975
        %v3232 = vmul.f32 %v2208, %v2976
        %v3233 = vmul.f32 %v2209, %v2977
        %v3234 = vmul.f32 %v2210, %v2978
        %v3235 = vmul.f32 %v2211, %v2979
        %v3236 = vmul.f32 %v2212, %v2980
        %v3237 = vmul.f32 %v2213, %v2981
        %v3238 = vmul.f32 %v2214, %v2982
        %v3239 = vmul.f32 %v2215, %v2983
        %v3240 = vmul.f32 %v2216, %v2984
        %v3241 = vmul.f32 %v2217, %v2985
        %v3242 = vmul.f32 %v2218, %v2986
        %v3243 = vmul.f32 %v2219, %v2987
        %v3244 = vmul.f32 %v2220, %v2988
        %v3245 = vmul.f32 %v2221, %v2989
        %v3246 = vmul.f32 %v2222, %v2990
        %v3247 = vmul.f32 %v2223, %v2991
        %v3248 = vmul.f32 %v2224, %v2992
        %v3249 = vmul.f32 %v2225, %v2993
        %v3250 = vmul.f32 %v2226, %v2994
        %v3251 = vmul.f32 %v2227, %v2995
        %v3252 = vmul.f32 %v2228, %v2996
        %v3253 = vmul.f32 %v2229, %v2997
        %v3254 = vmul.f32 %v2230, %v2998
        %v3255 = vmul.f32 %v2231, %v2999
        %v3256 = vmul.f32 %v2232, %v3000
        %v3257 = vmul.f32 %v2233, %v3001
        %v3258 = vmul.f32 %v2234, %v3002
        %v3259 = vmul.f32 %v2235, %v3003
        %v3260 = vmul.f32 %v2236, %v3004
        %v3261 = vmul.f32 %v2237, %v3005
        %v3262 = vmul.f32 %v2238, %v3006
        %v3263 = vmul.f32 %v2239, %v3007
        %v3264 = vmul.f32 %v2240, %v3008
        %v3265 = vmul.f32 %v2241, %v3009
        %v3266 = vmul.f32 %v2242, %v3010
        %v3267 = vmul.f32 %v2243, %v3011
        %v3268 = vmul.f32 %v2244, %v3012
        %v3269 = vmul.f32 %v2245, %v3013
        %v3270 = vmul.f32 %v2246, %v3014
        %v3271 = vmul.f32 %v2247, %v3015
        %v3272 = vmul.f32 %v2248, %v3016
        %v3273 = vmul.f32 %v2249, %v3017
        %v3274 = vmul.f32 %v2250, %v3018
        %v3275 = vmul.f32 %v2251, %v3019
        %v3276 = vmul.f32 %v2252, %v3020
        %v3277 = vmul.f32 %v2253, %v3021
        %v3278 = vmul.f32 %v2254, %v3022
        %v3279 = vmul.f32 %v2255, %v3023
        %v3280 = vmul.f32 %v2256, %v3024
        %v3281 = vmul.f32 %v2257, %v3025
        %v3282 = vmul.f32 %v2258, %v3026
        %v3283 = vmul.f32 %v2259, %v3027
        %v3284 = vmul.f32 %v2260, %v3028
        %v3285 = vmul.f32 %v2261, %v3029
        %v3286 = vmul.f32 %v2262, %v3030
        %v3287 = vmul.f32 %v2263, %v3031
        %v3288 = vmul.f32 %v2264, %v3032
        %v3289 = vmul.f32 %v2265, %v3033
        %v3290 = vmul.f32 %v2266, %v3034
        %v3291 = vmul.f32 %v2267, %v3035
        %v3292 = vmul.f32 %v2268, %v3036
        %v3293 = vmul.f32 %v2269, %v3037
        %v3294 = vmul.f32 %v2270, %v3038
        %v3295 = vmul.f32 %v2271, %v3039
        %v3296 = vmul.f32 %v2272, %v3040
        %v3297 = vmul.f32 %v2273, %v3041
        %v3298 = vmul.f32 %v2274, %v3042
        %v3299 = vmul.f32 %v2275, %v3043
        %v3300 = vmul.f32 %v2276, %v3044
        %v3301 = vmul.f32 %v2277, %v3045
        %v3302 = vmul.f32 %v2278, %v3046
        %v3303 = vmul.f32 %v2279, %v3047
        %v3304 = vmul.f32 %v2280, %v3048
        %v3305 = vmul.f32 %v2281, %v3049
        %v3306 = vmul.f32 %v2282, %v3050
        %v3307 = vmul.f32 %v2283, %v3051
        %v3308 = vmul.f32 %v2284, %v3052
        %v3309 = vmul.f32 %v2285, %v3053
        %v3310 = vmul.f32 %v2286, %v3054
        %v3311 = vmul.f32 %v2287, %v3055
        %v3312 = vmul.f32 %v2288, %v3056
        %v3313 = vmul.f32 %v2289, %v3057
        %v3314 = vmul.f32 %v2290, %v3058
        %v3315 = vmul.f32 %v2291, %v3059
        %v3316 = vmul.f32 %v2292, %v3060
        %v3317 = vmul.f32 %v2293, %v3061
        %v3318 = vmul.f32 %v2294, %v3062
        %v3319 = vmul.f32 %v2295, %v3063
        %v3320 = vmul.f32 %v2296, %v3064
        %v3321 = vmul.f32 %v2297, %v3065
        %v3322 = vmul.f32 %v2298, %v3066
        %v3323 = vmul.f32 %v2299, %v3067
        %v3324 = vmul.f32 %v2300, %v3068
        %v3325 = vmul.f32 %v2301, %v3069
        %v3326 = vmul.f32 %v2302, %v3070
        %v3327 = vmul.f32 %v2303, %v3071
        %v3328 = vmul.f32 %v2304, %v3072
        %v3329 = vmul.f32 %v2305, %v3073
        %v3330 = vmul.f32 %v2306, %v3074
        %v3331 = vmul.f32 %v2307, %v3075
        %v3332 = vmul.f32 %v2308, %v3076
        %v3333 = vmul.f32 %v2309, %v3077
        %v3334 = vmul.f32 %v2310, %v3078
        %v3335 = vmul.f32 %v2311, %v3079
        %v3336 = vmul.f32 %v2312, %v3080
        %v3337 = vmul.f32 %v2313, %v3081
        %v3338 = vmul.f32 %v2314, %v3082
        %v3339 = vmul.f32 %v2315, %v3083
        %v3340 = vmul.f32 %v2316, %v3084
        %v3341 = vmul.f32 %v2317, %v3085
        %v3342 = vmul.f32 %v2318, %v3086
        %v3343 = vmul.f32 %v2319, %v3087
        %v3344 = vmul.f32 %v2320, %v3088
        %v3345 = vmul.f32 %v2321, %v3089
        %v3346 = vmul.f32 %v2322, %v3090
        %v3347 = vmul.f32 %v2323, %v3091
        %v3348 = vmul.f32 %v2324, %v3092
        %v3349 = vmul.f32 %v2325, %v3093
        %v3350 = vmul.f32 %v2326, %v3094
        %v3351 = vmul.f32 %v2327, %v3095
        %v3352 = vmul.f32 %v2328, %v3096
        %v3353 = vmul.f32 %v2329, %v3097
        %v3354 = vmul.f32 %v2330, %v3098
        %v3355 = vmul.f32 %v2331, %v3099
        %v3356 = vmul.f32 %v2332, %v3100
        %v3357 = vmul.f32 %v2333, %v3101
        %v3358 = vmul.f32 %v2334, %v3102
        %v3359 = vmul.f32 %v2335, %v3103
        %v3360 = vmul.f32 %v2336, %v3104
        %v3361 = vmul.f32 %v2337, %v3105
        %v3362 = vmul.f32 %v2338, %v3106
        %v3363 = vmul.f32 %v2339, %v3107
        %v3364 = vmul.f32 %v2340, %v3108
        %v3365 = vmul.f32 %v2341, %v3109
        %v3366 = vmul.f32 %v2342, %v3110
        %v3367 = vmul.f32 %v2343, %v3111
        %v3368 = vmul.f32 %v2344, %v3112
        %v3369 = vmul.f32 %v2345, %v3113
        %v3370 = vmul.f32 %v2346, %v3114
        %v3371 = vmul.f32 %v2347, %v3115
        %v3372 = vmul.f32 %v2348, %v3116
        %v3373 = vmul.f32 %v2349, %v3117
        %v3374 = vmul.f32 %v2350, %v3118
        %v3375 = vmul.f32 %v2351, %v3119
        %v3376 = vmul.f32 %v2352, %v3120
        %v3377 = vmul.f32 %v2353, %v3121
        %v3378 = vmul.f32 %v2354, %v3122
        %v3379 = vmul.f32 %v2355, %v3123
        %v3380 = vmul.f32 %v2356, %v3124
        %v3381 = vmul.f32 %v2357, %v3125
        %v3382 = vmul.f32 %v2358, %v3126
        %v3383 = vmul.f32 %v2359, %v3127
        %v3384 = vmul.f32 %v2360, %v3128
        %v3385 = vmul.f32 %v2361, %v3129
        %v3386 = vmul.f32 %v2362, %v3130
        %v3387 = vmul.f32 %v2363, %v3131
        %v3388 = vmul.f32 %v2364, %v3132
        %v3389 = vmul.f32 %v2365, %v3133
        %v3390 = vmul.f32 %v2366, %v3134
        %v3391 = vmul.f32 %v2367, %v3135
        %v3392 = vmul.f32 %v2368, %v3136
        %v3393 = vmul.f32 %v2369, %v3137
        %v3394 = vmul.f32 %v2370, %v3138
        %v3395 = vmul.f32 %v2371, %v3139
        %v3396 = vmul.f32 %v2372, %v3140
        %v3397 = vmul.f32 %v2373, %v3141
        %v3398 = vmul.f32 %v2374, %v3142
        %v3399 = vmul.f32 %v2375, %v3143
        %v3400 = vmul.f32 %v2376, %v3144
        %v3401 = vmul.f32 %v2377, %v3145
        %v3402 = vmul.f32 %v2378, %v3146
        %v3403 = vmul.f32 %v2379, %v3147
        %v3404 = vmul.f32 %v2380, %v3148
        %v3405 = vmul.f32 %v2381, %v3149
        %v3406 = vmul.f32 %v2382, %v3150
        %v3407 = vmul.f32 %v2383, %v3151
        %v3408 = vmul.f32 %v2384, %v3152
        %v3409 = vmul.f32 %v2385, %v3153
        %v3410 = vmul.f32 %v2386, %v3154
        %v3411 = vmul.f32 %v2387, %v3155
        %v3412 = vmul.f32 %v2388, %v3156
        %v3413 = vmul.f32 %v2389, %v3157
        %v3414 = vmul.f32 %v2390, %v3158
        %v3415 = vmul.f32 %v2391, %v3159
        %v3416 = vmul.f32 %v2392, %v3160
        %v3417 = vmul.f32 %v2393, %v3161
        %v3418 = vmul.f32 %v2394, %v3162
        %v3419 = vmul.f32 %v2395, %v3163
        %v3420 = vmul.f32 %v2396, %v3164
        %v3421 = vmul.f32 %v2397, %v3165
        %v3422 = vmul.f32 %v2398, %v3166
        %v3423 = vmul.f32 %v2399, %v3167
        %v3424 = vmul.f32 %v2400, %v3168
        %v3425 = vmul.f32 %v2401, %v3169
        %v3426 = vmul.f32 %v2402, %v3170
        %v3427 = vmul.f32 %v2403, %v3171
        %v3428 = vmul.f32 %v2404, %v3172
        %v3429 = vmul.f32 %v2405, %v3173
        %v3430 = vmul.f32 %v2406, %v3174
        %v3431 = vpack.c.bf16 %v3183, %v3175
        %v3432 = vpack.c.bf16 %v3184, %v3176
        %v3433 = vpack.c.bf16 %v3185, %v3177
        %v3434 = vpack.c.bf16 %v3186, %v3178
        %v3435 = vpack.c.bf16 %v3187, %v3179
        %v3436 = vpack.c.bf16 %v3188, %v3180
        %v3437 = vpack.c.bf16 %v3189, %v3181
        %v3438 = vpack.c.bf16 %v3190, %v3182
        %v3439 = vpack.c.bf16 %v3199, %v3191
        %v3440 = vpack.c.bf16 %v3200, %v3192
        %v3441 = vpack.c.bf16 %v3201, %v3193
        %v3442 = vpack.c.bf16 %v3202, %v3194
        %v3443 = vpack.c.bf16 %v3203, %v3195
        %v3444 = vpack.c.bf16 %v3204, %v3196
        %v3445 = vpack.c.bf16 %v3205, %v3197
        %v3446 = vpack.c.bf16 %v3206, %v3198
        %v3447 = vpack.c.bf16 %v3215, %v3207
        %v3448 = vpack.c.bf16 %v3216, %v3208
        %v3449 = vpack.c.bf16 %v3217, %v3209
        %v3450 = vpack.c.bf16 %v3218, %v3210
        %v3451 = vpack.c.bf16 %v3219, %v3211
        %v3452 = vpack.c.bf16 %v3220, %v3212
        %v3453 = vpack.c.bf16 %v3221, %v3213
        %v3454 = vpack.c.bf16 %v3222, %v3214
        %v3455 = vpack.c.bf16 %v3231, %v3223
        %v3456 = vpack.c.bf16 %v3232, %v3224
        %v3457 = vpack.c.bf16 %v3233, %v3225
        %v3458 = vpack.c.bf16 %v3234, %v3226
        %v3459 = vpack.c.bf16 %v3235, %v3227
        %v3460 = vpack.c.bf16 %v3236, %v3228
        %v3461 = vpack.c.bf16 %v3237, %v3229
        %v3462 = vpack.c.bf16 %v3238, %v3230
        %v3463 = vpack.c.bf16 %v3247, %v3239
        %v3464 = vpack.c.bf16 %v3248, %v3240
        %v3465 = vpack.c.bf16 %v3249, %v3241
        %v3466 = vpack.c.bf16 %v3250, %v3242
        %v3467 = vpack.c.bf16 %v3251, %v3243
        %v3468 = vpack.c.bf16 %v3252, %v3244
        %v3469 = vpack.c.bf16 %v3253, %v3245
        %v3470 = vpack.c.bf16 %v3254, %v3246
        %v3471 = vpack.c.bf16 %v3263, %v3255
        %v3472 = vpack.c.bf16 %v3264, %v3256
        %v3473 = vpack.c.bf16 %v3265, %v3257
        %v3474 = vpack.c.bf16 %v3266, %v3258
        %v3475 = vpack.c.bf16 %v3267, %v3259
        %v3476 = vpack.c.bf16 %v3268, %v3260
        %v3477 = vpack.c.bf16 %v3269, %v3261
        %v3478 = vpack.c.bf16 %v3270, %v3262
        %v3479 = vpack.c.bf16 %v3279, %v3271
        %v3480 = vpack.c.bf16 %v3280, %v3272
        %v3481 = vpack.c.bf16 %v3281, %v3273
        %v3482 = vpack.c.bf16 %v3282, %v3274
        %v3483 = vpack.c.bf16 %v3283, %v3275
        %v3484 = vpack.c.bf16 %v3284, %v3276
        %v3485 = vpack.c.bf16 %v3285, %v3277
        %v3486 = vpack.c.bf16 %v3286, %v3278
        %v3487 = vpack.c.bf16 %v3295, %v3287
        %v3488 = vpack.c.bf16 %v3296, %v3288
        %v3489 = vpack.c.bf16 %v3297, %v3289
        %v3490 = vpack.c.bf16 %v3298, %v3290
        %v3491 = vpack.c.bf16 %v3299, %v3291
        %v3492 = vpack.c.bf16 %v3300, %v3292
        %v3493 = vpack.c.bf16 %v3301, %v3293
        %v3494 = vpack.c.bf16 %v3302, %v3294
        %v3495 = vpack.c.bf16 %v3311, %v3303
        %v3496 = vpack.c.bf16 %v3312, %v3304
        %v3497 = vpack.c.bf16 %v3313, %v3305
        %v3498 = vpack.c.bf16 %v3314, %v3306
        %v3499 = vpack.c.bf16 %v3315, %v3307
        %v3500 = vpack.c.bf16 %v3316, %v3308
        %v3501 = vpack.c.bf16 %v3317, %v3309
        %v3502 = vpack.c.bf16 %v3318, %v3310
        %v3503 = vpack.c.bf16 %v3327, %v3319
        %v3504 = vpack.c.bf16 %v3328, %v3320
        %v3505 = vpack.c.bf16 %v3329, %v3321
        %v3506 = vpack.c.bf16 %v3330, %v3322
        %v3507 = vpack.c.bf16 %v3331, %v3323
        %v3508 = vpack.c.bf16 %v3332, %v3324
        %v3509 = vpack.c.bf16 %v3333, %v3325
        %v3510 = vpack.c.bf16 %v3334, %v3326
        %v3511 = vpack.c.bf16 %v3343, %v3335
        %v3512 = vpack.c.bf16 %v3344, %v3336
        %v3513 = vpack.c.bf16 %v3345, %v3337
        %v3514 = vpack.c.bf16 %v3346, %v3338
        %v3515 = vpack.c.bf16 %v3347, %v3339
        %v3516 = vpack.c.bf16 %v3348, %v3340
        %v3517 = vpack.c.bf16 %v3349, %v3341
        %v3518 = vpack.c.bf16 %v3350, %v3342
        %v3519 = vpack.c.bf16 %v3359, %v3351
        %v3520 = vpack.c.bf16 %v3360, %v3352
        %v3521 = vpack.c.bf16 %v3361, %v3353
        %v3522 = vpack.c.bf16 %v3362, %v3354
        %v3523 = vpack.c.bf16 %v3363, %v3355
        %v3524 = vpack.c.bf16 %v3364, %v3356
        %v3525 = vpack.c.bf16 %v3365, %v3357
        %v3526 = vpack.c.bf16 %v3366, %v3358
        %v3527 = vpack.c.bf16 %v3375, %v3367
        %v3528 = vpack.c.bf16 %v3376, %v3368
        %v3529 = vpack.c.bf16 %v3377, %v3369
        %v3530 = vpack.c.bf16 %v3378, %v3370
        %v3531 = vpack.c.bf16 %v3379, %v3371
        %v3532 = vpack.c.bf16 %v3380, %v3372
        %v3533 = vpack.c.bf16 %v3381, %v3373
        %v3534 = vpack.c.bf16 %v3382, %v3374
        %v3535 = vpack.c.bf16 %v3391, %v3383
        %v3536 = vpack.c.bf16 %v3392, %v3384
        %v3537 = vpack.c.bf16 %v3393, %v3385
        %v3538 = vpack.c.bf16 %v3394, %v3386
        %v3539 = vpack.c.bf16 %v3395, %v3387
        %v3540 = vpack.c.bf16 %v3396, %v3388
        %v3541 = vpack.c.bf16 %v3397, %v3389
        %v3542 = vpack.c.bf16 %v3398, %v3390
        %v3543 = vpack.c.bf16 %v3407, %v3399
        %v3544 = vpack.c.bf16 %v3408, %v3400
        %v3545 = vpack.c.bf16 %v3409, %v3401
        %v3546 = vpack.c.bf16 %v3410, %v3402
        %v3547 = vpack.c.bf16 %v3411, %v3403
        %v3548 = vpack.c.bf16 %v3412, %v3404
        %v3549 = vpack.c.bf16 %v3413, %v3405
        %v3550 = vpack.c.bf16 %v3414, %v3406
        %v3551 = vpack.c.bf16 %v3423, %v3415
        %v3552 = vpack.c.bf16 %v3424, %v3416
        %v3553 = vpack.c.bf16 %v3425, %v3417
        %v3554 = vpack.c.bf16 %v3426, %v3418
        %v3555 = vpack.c.bf16 %v3427, %v3419
        %v3556 = vpack.c.bf16 %v3428, %v3420
        %v3557 = vpack.c.bf16 %v3429, %v3421
        %v3558 = vpack.c.bf16 %v3430, %v3422
        %v3559 = vld [vmem:[#allocation11] sm:$0xf]
        %v3560 = vld [vmem:[#allocation11 + $0x4] sm:$0xf]
        %v3561 = vld [vmem:[#allocation11 + $0x8] sm:$0xf]
        %v3562 = vld [vmem:[#allocation11 + $0xc] sm:$0xf]
        %v3563 = vld [vmem:[#allocation11 + $0x10] sm:$0xf]
        %v3564 = vld [vmem:[#allocation11 + $0x14] sm:$0xf]
        %v3565 = vld [vmem:[#allocation11 + $0x18] sm:$0xf]
        %v3566 = vld [vmem:[#allocation11 + $0x1c] sm:$0xf]
        %v3567 = vld [vmem:[#allocation11 + $0x20] sm:$0xf]
        %v3568 = vld [vmem:[#allocation11 + $0x24] sm:$0xf]
        %v3569 = vld [vmem:[#allocation11 + $0x28] sm:$0xf]
        %v3570 = vld [vmem:[#allocation11 + $0x2c] sm:$0xf]
        %v3571 = vld [vmem:[#allocation11 + $0x30] sm:$0xf]
        %v3572 = vld [vmem:[#allocation11 + $0x34] sm:$0xf]
        %v3573 = vld [vmem:[#allocation11 + $0x38] sm:$0xf]
        %v3574 = vld [vmem:[#allocation11 + $0x3c] sm:$0xf]
        %v3575 = vld [vmem:[#allocation11 + $0x40] sm:$0xf]
        %v3576 = vld [vmem:[#allocation11 + $0x44] sm:$0xf]
        %v3577 = vld [vmem:[#allocation11 + $0x48] sm:$0xf]
        %v3578 = vld [vmem:[#allocation11 + $0x4c] sm:$0xf]
        %v3579 = vld [vmem:[#allocation11 + $0x50] sm:$0xf]
        %v3580 = vld [vmem:[#allocation11 + $0x54] sm:$0xf]
        %v3581 = vld [vmem:[#allocation11 + $0x58] sm:$0xf]
        %v3582 = vld [vmem:[#allocation11 + $0x5c] sm:$0xf]
        %v3583 = vld [vmem:[#allocation11 + $0x60] sm:$0xf]
        %v3584 = vld [vmem:[#allocation11 + $0x64] sm:$0xf]
        %v3585 = vld [vmem:[#allocation11 + $0x68] sm:$0xf]
        %v3586 = vld [vmem:[#allocation11 + $0x6c] sm:$0xf]
        %v3587 = vld [vmem:[#allocation11 + $0x70] sm:$0xf]
        %v3588 = vld [vmem:[#allocation11 + $0x74] sm:$0xf]
        %v3589 = vld [vmem:[#allocation11 + $0x78] sm:$0xf]
        %v3590 = vld [vmem:[#allocation11 + $0x7c] sm:$0xf]
        %v3591 = vld [vmem:[#allocation11 + $0x80] sm:$0xf]
        %v3592 = vld [vmem:[#allocation11 + $0x84] sm:$0xf]
        %v3593 = vld [vmem:[#allocation11 + $0x88] sm:$0xf]
        %v3594 = vld [vmem:[#allocation11 + $0x8c] sm:$0xf]
        %v3595 = vld [vmem:[#allocation11 + $0x90] sm:$0xf]
        %v3596 = vld [vmem:[#allocation11 + $0x94] sm:$0xf]
        %v3597 = vld [vmem:[#allocation11 + $0x98] sm:$0xf]
        %v3598 = vld [vmem:[#allocation11 + $0x9c] sm:$0xf]
        %v3599 = vld [vmem:[#allocation11 + $0xa0] sm:$0xf]
        %v3600 = vld [vmem:[#allocation11 + $0xa4] sm:$0xf]
        %v3601 = vld [vmem:[#allocation11 + $0xa8] sm:$0xf]
        %v3602 = vld [vmem:[#allocation11 + $0xac] sm:$0xf]
        %v3603 = vld [vmem:[#allocation11 + $0xb0] sm:$0xf]
        %v3604 = vld [vmem:[#allocation11 + $0xb4] sm:$0xf]
        %v3605 = vld [vmem:[#allocation11 + $0xb8] sm:$0xf]
        %v3606 = vld [vmem:[#allocation11 + $0xbc] sm:$0xf]
        %v3607 = vld [vmem:[#allocation11 + $0xc0] sm:$0xf]
        %v3608 = vld [vmem:[#allocation11 + $0xc4] sm:$0xf]
        %v3609 = vld [vmem:[#allocation11 + $0xc8] sm:$0xf]
        %v3610 = vld [vmem:[#allocation11 + $0xcc] sm:$0xf]
        %v3611 = vld [vmem:[#allocation11 + $0xd0] sm:$0xf]
        %v3612 = vld [vmem:[#allocation11 + $0xd4] sm:$0xf]
        %v3613 = vld [vmem:[#allocation11 + $0xd8] sm:$0xf]
        %v3614 = vld [vmem:[#allocation11 + $0xdc] sm:$0xf]
        %v3615 = vld [vmem:[#allocation11 + $0xe0] sm:$0xf]
        %v3616 = vld [vmem:[#allocation11 + $0xe4] sm:$0xf]
        %v3617 = vld [vmem:[#allocation11 + $0xe8] sm:$0xf]
        %v3618 = vld [vmem:[#allocation11 + $0xec] sm:$0xf]
        %v3619 = vld [vmem:[#allocation11 + $0xf0] sm:$0xf]
        %v3620 = vld [vmem:[#allocation11 + $0xf4] sm:$0xf]
        %v3621 = vld [vmem:[#allocation11 + $0xf8] sm:$0xf]
        %v3622 = vld [vmem:[#allocation11 + $0xfc] sm:$0xf]
        %v3623 = vld [vmem:[#allocation11 + $0x100] sm:$0xf]
        %v3624 = vld [vmem:[#allocation11 + $0x104] sm:$0xf]
        %v3625 = vld [vmem:[#allocation11 + $0x108] sm:$0xf]
        %v3626 = vld [vmem:[#allocation11 + $0x10c] sm:$0xf]
        %v3627 = vld [vmem:[#allocation11 + $0x110] sm:$0xf]
        %v3628 = vld [vmem:[#allocation11 + $0x114] sm:$0xf]
        %v3629 = vld [vmem:[#allocation11 + $0x118] sm:$0xf]
        %v3630 = vld [vmem:[#allocation11 + $0x11c] sm:$0xf]
        %v3631 = vld [vmem:[#allocation11 + $0x120] sm:$0xf]
        %v3632 = vld [vmem:[#allocation11 + $0x124] sm:$0xf]
        %v3633 = vld [vmem:[#allocation11 + $0x128] sm:$0xf]
        %v3634 = vld [vmem:[#allocation11 + $0x12c] sm:$0xf]
        %v3635 = vld [vmem:[#allocation11 + $0x130] sm:$0xf]
        %v3636 = vld [vmem:[#allocation11 + $0x134] sm:$0xf]
        %v3637 = vld [vmem:[#allocation11 + $0x138] sm:$0xf]
        %v3638 = vld [vmem:[#allocation11 + $0x13c] sm:$0xf]
        %v3639 = vld [vmem:[#allocation11 + $0x140] sm:$0xf]
        %v3640 = vld [vmem:[#allocation11 + $0x144] sm:$0xf]
        %v3641 = vld [vmem:[#allocation11 + $0x148] sm:$0xf]
        %v3642 = vld [vmem:[#allocation11 + $0x14c] sm:$0xf]
        %v3643 = vld [vmem:[#allocation11 + $0x150] sm:$0xf]
        %v3644 = vld [vmem:[#allocation11 + $0x154] sm:$0xf]
        %v3645 = vld [vmem:[#allocation11 + $0x158] sm:$0xf]
        %v3646 = vld [vmem:[#allocation11 + $0x15c] sm:$0xf]
        %v3647 = vld [vmem:[#allocation11 + $0x160] sm:$0xf]
        %v3648 = vld [vmem:[#allocation11 + $0x164] sm:$0xf]
        %v3649 = vld [vmem:[#allocation11 + $0x168] sm:$0xf]
        %v3650 = vld [vmem:[#allocation11 + $0x16c] sm:$0xf]
        %v3651 = vld [vmem:[#allocation11 + $0x170] sm:$0xf]
        %v3652 = vld [vmem:[#allocation11 + $0x174] sm:$0xf]
        %v3653 = vld [vmem:[#allocation11 + $0x178] sm:$0xf]
        %v3654 = vld [vmem:[#allocation11 + $0x17c] sm:$0xf]
        %v3655 = vld [vmem:[#allocation11 + $0x180] sm:$0xf]
        %v3656 = vld [vmem:[#allocation11 + $0x184] sm:$0xf]
        %v3657 = vld [vmem:[#allocation11 + $0x188] sm:$0xf]
        %v3658 = vld [vmem:[#allocation11 + $0x18c] sm:$0xf]
        %v3659 = vld [vmem:[#allocation11 + $0x190] sm:$0xf]
        %v3660 = vld [vmem:[#allocation11 + $0x194] sm:$0xf]
        %v3661 = vld [vmem:[#allocation11 + $0x198] sm:$0xf]
        %v3662 = vld [vmem:[#allocation11 + $0x19c] sm:$0xf]
        %v3663 = vld [vmem:[#allocation11 + $0x1a0] sm:$0xf]
        %v3664 = vld [vmem:[#allocation11 + $0x1a4] sm:$0xf]
        %v3665 = vld [vmem:[#allocation11 + $0x1a8] sm:$0xf]
        %v3666 = vld [vmem:[#allocation11 + $0x1ac] sm:$0xf]
        %v3667 = vld [vmem:[#allocation11 + $0x1b0] sm:$0xf]
        %v3668 = vld [vmem:[#allocation11 + $0x1b4] sm:$0xf]
        %v3669 = vld [vmem:[#allocation11 + $0x1b8] sm:$0xf]
        %v3670 = vld [vmem:[#allocation11 + $0x1bc] sm:$0xf]
        %v3671 = vld [vmem:[#allocation11 + $0x1c0] sm:$0xf]
        %v3672 = vld [vmem:[#allocation11 + $0x1c4] sm:$0xf]
        %v3673 = vld [vmem:[#allocation11 + $0x1c8] sm:$0xf]
        %v3674 = vld [vmem:[#allocation11 + $0x1cc] sm:$0xf]
        %v3675 = vld [vmem:[#allocation11 + $0x1d0] sm:$0xf]
        %v3676 = vld [vmem:[#allocation11 + $0x1d4] sm:$0xf]
        %v3677 = vld [vmem:[#allocation11 + $0x1d8] sm:$0xf]
        %v3678 = vld [vmem:[#allocation11 + $0x1dc] sm:$0xf]
        %v3679 = vld [vmem:[#allocation11 + $0x1e0] sm:$0xf]
        %v3680 = vld [vmem:[#allocation11 + $0x1e4] sm:$0xf]
        %v3681 = vld [vmem:[#allocation11 + $0x1e8] sm:$0xf]
        %v3682 = vld [vmem:[#allocation11 + $0x1ec] sm:$0xf]
        %v3683 = vld [vmem:[#allocation11 + $0x1f0] sm:$0xf]
        %v3684 = vld [vmem:[#allocation11 + $0x1f4] sm:$0xf]
        %v3685 = vld [vmem:[#allocation11 + $0x1f8] sm:$0xf]
        %v3686 = vld [vmem:[#allocation11 + $0x1fc] sm:$0xf]
        %v3687 = vld [vmem:[#allocation13] sm:$0x1]
        %v3689 = vlaneseq
        %v3690 = vshrl.u32 %v3689, 7
        %v3691 = vsub.s32 0, %v3690
        %v3692 = vrot.slane %v3687, %v3691
        %v3822 = vunpack.c.l.b16 %v3559
        %v3823 = vunpack.c.l.b16 %v3560
        %v3824 = vunpack.c.l.b16 %v3561
        %v3825 = vunpack.c.l.b16 %v3562
        %v3826 = vunpack.c.l.b16 %v3563
        %v3827 = vunpack.c.l.b16 %v3564
        %v3828 = vunpack.c.l.b16 %v3565
        %v3829 = vunpack.c.l.b16 %v3566
        %v3830 = vunpack.c.l.b16 %v3567
        %v3831 = vunpack.c.l.b16 %v3568
        %v3832 = vunpack.c.l.b16 %v3569
        %v3833 = vunpack.c.l.b16 %v3570
        %v3834 = vunpack.c.l.b16 %v3571
        %v3835 = vunpack.c.l.b16 %v3572
        %v3836 = vunpack.c.l.b16 %v3573
        %v3837 = vunpack.c.l.b16 %v3574
        %v3838 = vunpack.c.l.b16 %v3575
        %v3839 = vunpack.c.l.b16 %v3576
        %v3840 = vunpack.c.l.b16 %v3577
        %v3841 = vunpack.c.l.b16 %v3578
        %v3842 = vunpack.c.l.b16 %v3579
        %v3843 = vunpack.c.l.b16 %v3580
        %v3844 = vunpack.c.l.b16 %v3581
        %v3845 = vunpack.c.l.b16 %v3582
        %v3846 = vunpack.c.l.b16 %v3583
        %v3847 = vunpack.c.l.b16 %v3584
        %v3848 = vunpack.c.l.b16 %v3585
        %v3849 = vunpack.c.l.b16 %v3586
        %v3850 = vunpack.c.l.b16 %v3587
        %v3851 = vunpack.c.l.b16 %v3588
        %v3852 = vunpack.c.l.b16 %v3589
        %v3853 = vunpack.c.l.b16 %v3590
        %v3854 = vunpack.c.l.b16 %v3591
        %v3855 = vunpack.c.l.b16 %v3592
        %v3856 = vunpack.c.l.b16 %v3593
        %v3857 = vunpack.c.l.b16 %v3594
        %v3858 = vunpack.c.l.b16 %v3595
        %v3859 = vunpack.c.l.b16 %v3596
        %v3860 = vunpack.c.l.b16 %v3597
        %v3861 = vunpack.c.l.b16 %v3598
        %v3862 = vunpack.c.l.b16 %v3599
        %v3863 = vunpack.c.l.b16 %v3600
        %v3864 = vunpack.c.l.b16 %v3601
        %v3865 = vunpack.c.l.b16 %v3602
        %v3866 = vunpack.c.l.b16 %v3603
        %v3867 = vunpack.c.l.b16 %v3604
        %v3868 = vunpack.c.l.b16 %v3605
        %v3869 = vunpack.c.l.b16 %v3606
        %v3870 = vunpack.c.l.b16 %v3607
        %v3871 = vunpack.c.l.b16 %v3608
        %v3872 = vunpack.c.l.b16 %v3609
        %v3873 = vunpack.c.l.b16 %v3610
        %v3874 = vunpack.c.l.b16 %v3611
        %v3875 = vunpack.c.l.b16 %v3612
        %v3876 = vunpack.c.l.b16 %v3613
        %v3877 = vunpack.c.l.b16 %v3614
        %v3878 = vunpack.c.l.b16 %v3615
        %v3879 = vunpack.c.l.b16 %v3616
        %v3880 = vunpack.c.l.b16 %v3617
        %v3881 = vunpack.c.l.b16 %v3618
        %v3882 = vunpack.c.l.b16 %v3619
        %v3883 = vunpack.c.l.b16 %v3620
        %v3884 = vunpack.c.l.b16 %v3621
        %v3885 = vunpack.c.l.b16 %v3622
        %v3886 = vunpack.c.l.b16 %v3623
        %v3887 = vunpack.c.l.b16 %v3624
        %v3888 = vunpack.c.l.b16 %v3625
        %v3889 = vunpack.c.l.b16 %v3626
        %v3890 = vunpack.c.l.b16 %v3627
        %v3891 = vunpack.c.l.b16 %v3628
        %v3892 = vunpack.c.l.b16 %v3629
        %v3893 = vunpack.c.l.b16 %v3630
        %v3894 = vunpack.c.l.b16 %v3631
        %v3895 = vunpack.c.l.b16 %v3632
        %v3896 = vunpack.c.l.b16 %v3633
        %v3897 = vunpack.c.l.b16 %v3634
        %v3898 = vunpack.c.l.b16 %v3635
        %v3899 = vunpack.c.l.b16 %v3636
        %v3900 = vunpack.c.l.b16 %v3637
        %v3901 = vunpack.c.l.b16 %v3638
        %v3902 = vunpack.c.l.b16 %v3639
        %v3903 = vunpack.c.l.b16 %v3640
        %v3904 = vunpack.c.l.b16 %v3641
        %v3905 = vunpack.c.l.b16 %v3642
        %v3906 = vunpack.c.l.b16 %v3643
        %v3907 = vunpack.c.l.b16 %v3644
        %v3908 = vunpack.c.l.b16 %v3645
        %v3909 = vunpack.c.l.b16 %v3646
        %v3910 = vunpack.c.l.b16 %v3647
        %v3911 = vunpack.c.l.b16 %v3648
        %v3912 = vunpack.c.l.b16 %v3649
        %v3913 = vunpack.c.l.b16 %v3650
        %v3914 = vunpack.c.l.b16 %v3651
        %v3915 = vunpack.c.l.b16 %v3652
        %v3916 = vunpack.c.l.b16 %v3653
        %v3917 = vunpack.c.l.b16 %v3654
        %v3918 = vunpack.c.l.b16 %v3655
        %v3919 = vunpack.c.l.b16 %v3656
        %v3920 = vunpack.c.l.b16 %v3657
        %v3921 = vunpack.c.l.b16 %v3658
        %v3922 = vunpack.c.l.b16 %v3659
        %v3923 = vunpack.c.l.b16 %v3660
        %v3924 = vunpack.c.l.b16 %v3661
        %v3925 = vunpack.c.l.b16 %v3662
        %v3926 = vunpack.c.l.b16 %v3663
        %v3927 = vunpack.c.l.b16 %v3664
        %v3928 = vunpack.c.l.b16 %v3665
        %v3929 = vunpack.c.l.b16 %v3666
        %v3930 = vunpack.c.l.b16 %v3667
        %v3931 = vunpack.c.l.b16 %v3668
        %v3932 = vunpack.c.l.b16 %v3669
        %v3933 = vunpack.c.l.b16 %v3670
        %v3934 = vunpack.c.l.b16 %v3671
        %v3935 = vunpack.c.l.b16 %v3672
        %v3936 = vunpack.c.l.b16 %v3673
        %v3937 = vunpack.c.l.b16 %v3674
        %v3938 = vunpack.c.l.b16 %v3675
        %v3939 = vunpack.c.l.b16 %v3676
        %v3940 = vunpack.c.l.b16 %v3677
        %v3941 = vunpack.c.l.b16 %v3678
        %v3942 = vunpack.c.l.b16 %v3679
        %v3943 = vunpack.c.l.b16 %v3680
        %v3944 = vunpack.c.l.b16 %v3681
        %v3945 = vunpack.c.l.b16 %v3682
        %v3946 = vunpack.c.l.b16 %v3683
        %v3947 = vunpack.c.l.b16 %v3684
        %v3948 = vunpack.c.l.b16 %v3685
        %v3949 = vunpack.c.l.b16 %v3686
        %v3950 = vpack.c.b16 %v3823, %v3822
        %v3951 = vpack.c.b16 %v3825, %v3824
        %v3952 = vpack.c.b16 %v3827, %v3826
        %v3953 = vpack.c.b16 %v3829, %v3828
        %v3954 = vpack.c.b16 %v3831, %v3830
        %v3955 = vpack.c.b16 %v3833, %v3832
        %v3956 = vpack.c.b16 %v3835, %v3834
        %v3957 = vpack.c.b16 %v3837, %v3836
        %v3958 = vpack.c.b16 %v3839, %v3838
        %v3959 = vpack.c.b16 %v3841, %v3840
        %v3960 = vpack.c.b16 %v3843, %v3842
        %v3961 = vpack.c.b16 %v3845, %v3844
        %v3962 = vpack.c.b16 %v3847, %v3846
        %v3963 = vpack.c.b16 %v3849, %v3848
        %v3964 = vpack.c.b16 %v3851, %v3850
        %v3965 = vpack.c.b16 %v3853, %v3852
        %v3966 = vpack.c.b16 %v3855, %v3854
        %v3967 = vpack.c.b16 %v3857, %v3856
        %v3968 = vpack.c.b16 %v3859, %v3858
        %v3969 = vpack.c.b16 %v3861, %v3860
        %v3970 = vpack.c.b16 %v3863, %v3862
        %v3971 = vpack.c.b16 %v3865, %v3864
        %v3972 = vpack.c.b16 %v3867, %v3866
        %v3973 = vpack.c.b16 %v3869, %v3868
        %v3974 = vpack.c.b16 %v3871, %v3870
        %v3975 = vpack.c.b16 %v3873, %v3872
        %v3976 = vpack.c.b16 %v3875, %v3874
        %v3977 = vpack.c.b16 %v3877, %v3876
        %v3978 = vpack.c.b16 %v3879, %v3878
        %v3979 = vpack.c.b16 %v3881, %v3880
        %v3980 = vpack.c.b16 %v3883, %v3882
        %v3981 = vpack.c.b16 %v3885, %v3884
        %v3982 = vpack.c.b16 %v3887, %v3886
        %v3983 = vpack.c.b16 %v3889, %v3888
        %v3984 = vpack.c.b16 %v3891, %v3890
        %v3985 = vpack.c.b16 %v3893, %v3892
        %v3986 = vpack.c.b16 %v3895, %v3894
        %v3987 = vpack.c.b16 %v3897, %v3896
        %v3988 = vpack.c.b16 %v3899, %v3898
        %v3989 = vpack.c.b16 %v3901, %v3900
        %v3990 = vpack.c.b16 %v3903, %v3902
        %v3991 = vpack.c.b16 %v3905, %v3904
        %v3992 = vpack.c.b16 %v3907, %v3906
        %v3993 = vpack.c.b16 %v3909, %v3908
        %v3994 = vpack.c.b16 %v3911, %v3910
        %v3995 = vpack.c.b16 %v3913, %v3912
        %v3996 = vpack.c.b16 %v3915, %v3914
        %v3997 = vpack.c.b16 %v3917, %v3916
        %v3998 = vpack.c.b16 %v3919, %v3918
        %v3999 = vpack.c.b16 %v3921, %v3920
        %v4000 = vpack.c.b16 %v3923, %v3922
        %v4001 = vpack.c.b16 %v3925, %v3924
        %v4002 = vpack.c.b16 %v3927, %v3926
        %v4003 = vpack.c.b16 %v3929, %v3928
        %v4004 = vpack.c.b16 %v3931, %v3930
        %v4005 = vpack.c.b16 %v3933, %v3932
        %v4006 = vpack.c.b16 %v3935, %v3934
        %v4007 = vpack.c.b16 %v3937, %v3936
        %v4008 = vpack.c.b16 %v3939, %v3938
        %v4009 = vpack.c.b16 %v3941, %v3940
        %v4010 = vpack.c.b16 %v3943, %v3942
        %v4011 = vpack.c.b16 %v3945, %v3944
        %v4012 = vpack.c.b16 %v3947, %v3946
        %v4013 = vpack.c.b16 %v3949, %v3948
        %4078 = vmatprep.subr.bf16.mxu0 0
        %4079 = vmatpush1.bf16.msra.mxu0 %v3950
        %4080 = vmatprep.subr.bf16.mxu0 0
        %4081 = vmatpush1.bf16.msra.mxu0 %v3951
        %4082 = vmatprep.subr.bf16.mxu0 0
        %4083 = vmatpush1.bf16.msra.mxu0 %v3952
        %4084 = vmatprep.subr.bf16.mxu0 0
        %4085 = vmatpush1.bf16.msra.mxu0 %v3953
        %4086 = vmatprep.subr.bf16.mxu0 0
        %4087 = vmatpush1.bf16.msra.mxu0 %v3954
        %4088 = vmatprep.subr.bf16.mxu0 0
        %4089 = vmatpush1.bf16.msra.mxu0 %v3955
        %4090 = vmatprep.subr.bf16.mxu0 0
        %4091 = vmatpush1.bf16.msra.mxu0 %v3956
        %4092 = vmatprep.subr.bf16.mxu0 0
        %4093 = vmatpush1.bf16.msra.mxu0 %v3957
        %4094 = vmatprep.subr.bf16.mxu0 0
        %4095 = vmatpush1.bf16.msra.mxu0 %v3958
        %4096 = vmatprep.subr.bf16.mxu0 0
        %4097 = vmatpush1.bf16.msra.mxu0 %v3959
        %4098 = vmatprep.subr.bf16.mxu0 0
        %4099 = vmatpush1.bf16.msra.mxu0 %v3960
        %4100 = vmatprep.subr.bf16.mxu0 0
        %4101 = vmatpush1.bf16.msra.mxu0 %v3961
        %4102 = vmatprep.subr.bf16.mxu0 0
        %4103 = vmatpush1.bf16.msra.mxu0 %v3962
        %4104 = vmatprep.subr.bf16.mxu0 0
        %4105 = vmatpush1.bf16.msra.mxu0 %v3963
        %4106 = vmatprep.subr.bf16.mxu0 0
        %4107 = vmatpush1.bf16.msra.mxu0 %v3964
        %4108 = vmatprep.subr.bf16.mxu0 0
        %4109 = vmatpush1.bf16.msra.mxu0 %v3965
        %4110 = vmatprep.mubr.bf16.mxu0 %v3432
        %4111 = vmatmul.mubr.bf16.gmra.mrb[0].mxu0 %v3431
        %v4112 = vpop.f32.mrb[0].mxu0
        %v4113 = vadd.f32 %v3692, %v4112
        %v4114 = vpop.f32.mrb[0].mxu0
        %v4115 = vpop.f32.mrb[0].mxu0
        %v4116 = vadd.f32 %v3692, %v4115
        %v4117 = vpop.f32.mrb[0].mxu0
        %4118 = vmatprep.mubr.bf16.mxu0 %v3440
        %4119 = vmatmul.mubr.bf16.gmra.mrb[0].mxu0 %v3439
        %v4120 = vpop.f32.mrb[0].mxu0
        %v4121 = vadd.f32 %v3692, %v4120
        %v4122 = vpop.f32.mrb[0].mxu0
        %v4123 = vpop.f32.mrb[0].mxu0
        %v4124 = vadd.f32 %v3692, %v4123
        %v4125 = vpop.f32.mrb[0].mxu0
        %4126 = vmatprep.mubr.bf16.mxu0 %v3448
        %4127 = vmatmul.mubr.bf16.gmra.mrb[0].mxu0 %v3447
        %v4128 = vpop.f32.mrb[0].mxu0
        %v4129 = vadd.f32 %v3692, %v4128
        %v4130 = vpop.f32.mrb[0].mxu0
        %v4131 = vpop.f32.mrb[0].mxu0
        %v4132 = vadd.f32 %v3692, %v4131
        %v4133 = vpop.f32.mrb[0].mxu0
        %4134 = vmatprep.mubr.bf16.mxu0 %v3456
        %4135 = vmatmul.mubr.bf16.gmra.mrb[0].mxu0 %v3455
        %v4136 = vpop.f32.mrb[0].mxu0
        %v4137 = vadd.f32 %v3692, %v4136
        %v4138 = vpop.f32.mrb[0].mxu0
        %v4139 = vpop.f32.mrb[0].mxu0
        %v4140 = vadd.f32 %v3692, %v4139
        %v4141 = vpop.f32.mrb[0].mxu0
        %4142 = vmatprep.mubr.bf16.mxu0 %v3464
        %4143 = vmatmul.mubr.bf16.gmra.mrb[0].mxu0 %v3463
        %v4144 = vpop.f32.mrb[0].mxu0
        %v4145 = vadd.f32 %v3692, %v4144
        %v4146 = vpop.f32.mrb[0].mxu0
        %v4147 = vpop.f32.mrb[0].mxu0
        %v4148 = vadd.f32 %v3692, %v4147
        %v4149 = vpop.f32.mrb[0].mxu0
        %4150 = vmatprep.mubr.bf16.mxu0 %v3472
        %4151 = vmatmul.mubr.bf16.gmra.mrb[0].mxu0 %v3471
        %v4152 = vpop.f32.mrb[0].mxu0
        %v4153 = vadd.f32 %v3692, %v4152
        %v4154 = vpop.f32.mrb[0].mxu0
        %v4155 = vpop.f32.mrb[0].mxu0
        %v4156 = vadd.f32 %v3692, %v4155
        %v4157 = vpop.f32.mrb[0].mxu0
        %4158 = vmatprep.mubr.bf16.mxu0 %v3480
        %4159 = vmatmul.mubr.bf16.gmra.mrb[0].mxu0 %v3479
        %v4160 = vpop.f32.mrb[0].mxu0
        %v4161 = vadd.f32 %v3692, %v4160
        %v4162 = vpop.f32.mrb[0].mxu0
        %v4163 = vpop.f32.mrb[0].mxu0
        %v4164 = vadd.f32 %v3692, %v4163
        %v4165 = vpop.f32.mrb[0].mxu0
        %4166 = vmatprep.mubr.bf16.mxu0 %v3488
        %4167 = vmatmul.mubr.bf16.gmra.mrb[0].mxu0 %v3487
        %v4168 = vpop.f32.mrb[0].mxu0
        %v4169 = vadd.f32 %v3692, %v4168
        %v4170 = vpop.f32.mrb[0].mxu0
        %v4171 = vpop.f32.mrb[0].mxu0
        %v4172 = vadd.f32 %v3692, %v4171
        %v4173 = vpop.f32.mrb[0].mxu0
        %4174 = vmatprep.mubr.bf16.mxu0 %v3496
        %4175 = vmatmul.mubr.bf16.gmra.mrb[0].mxu0 %v3495
        %v4176 = vpop.f32.mrb[0].mxu0
        %v4177 = vadd.f32 %v3692, %v4176
        %v4178 = vpop.f32.mrb[0].mxu0
        %v4179 = vpop.f32.mrb[0].mxu0
        %v4180 = vadd.f32 %v3692, %v4179
        %v4181 = vpop.f32.mrb[0].mxu0
        %4182 = vmatprep.mubr.bf16.mxu0 %v3504
        %4183 = vmatmul.mubr.bf16.gmra.mrb[0].mxu0 %v3503
        %v4184 = vpop.f32.mrb[0].mxu0
        %v4185 = vadd.f32 %v3692, %v4184
        %v4186 = vpop.f32.mrb[0].mxu0
        %v4187 = vpop.f32.mrb[0].mxu0
        %v4188 = vadd.f32 %v3692, %v4187
        %v4189 = vpop.f32.mrb[0].mxu0
        %4190 = vmatprep.mubr.bf16.mxu0 %v3512
        %4191 = vmatmul.mubr.bf16.gmra.mrb[0].mxu0 %v3511
        %v4192 = vpop.f32.mrb[0].mxu0
        %v4193 = vadd.f32 %v3692, %v4192
        %v4194 = vpop.f32.mrb[0].mxu0
        %v4195 = vpop.f32.mrb[0].mxu0
        %v4196 = vadd.f32 %v3692, %v4195
        %v4197 = vpop.f32.mrb[0].mxu0
        %4198 = vmatprep.mubr.bf16.mxu0 %v3520
        %4199 = vmatmul.mubr.bf16.gmra.mrb[0].mxu0 %v3519
        %v4200 = vpop.f32.mrb[0].mxu0
        %v4201 = vadd.f32 %v3692, %v4200
        %v4202 = vpop.f32.mrb[0].mxu0
        %v4203 = vpop.f32.mrb[0].mxu0
        %v4204 = vadd.f32 %v3692, %v4203
        %v4205 = vpop.f32.mrb[0].mxu0
        %4206 = vmatprep.mubr.bf16.mxu0 %v3528
        %4207 = vmatmul.mubr.bf16.gmra.mrb[0].mxu0 %v3527
        %v4208 = vpop.f32.mrb[0].mxu0
        %v4209 = vadd.f32 %v3692, %v4208
        %v4210 = vpop.f32.mrb[0].mxu0
        %v4211 = vpop.f32.mrb[0].mxu0
        %v4212 = vadd.f32 %v3692, %v4211
        %v4213 = vpop.f32.mrb[0].mxu0
        %4214 = vmatprep.mubr.bf16.mxu0 %v3536
        %4215 = vmatmul.mubr.bf16.gmra.mrb[0].mxu0 %v3535
        %v4216 = vpop.f32.mrb[0].mxu0
        %v4217 = vadd.f32 %v3692, %v4216
        %v4218 = vpop.f32.mrb[0].mxu0
        %v4219 = vpop.f32.mrb[0].mxu0
        %v4220 = vadd.f32 %v3692, %v4219
        %v4221 = vpop.f32.mrb[0].mxu0
        %4222 = vmatprep.mubr.bf16.mxu0 %v3544
        %4223 = vmatmul.mubr.bf16.gmra.mrb[0].mxu0 %v3543
        %v4224 = vpop.f32.mrb[0].mxu0
        %v4225 = vadd.f32 %v3692, %v4224
        %v4226 = vpop.f32.mrb[0].mxu0
        %v4227 = vpop.f32.mrb[0].mxu0
        %v4228 = vadd.f32 %v3692, %v4227
        %v4229 = vpop.f32.mrb[0].mxu0
        %4230 = vmatprep.mubr.bf16.mxu0 %v3552
        %4231 = vmatmul.mubr.bf16.gmra.mrb[0].mxu0 %v3551
        %v4232 = vpop.f32.mrb[0].mxu0
        %v4233 = vadd.f32 %v3692, %v4232
        %v4234 = vpop.f32.mrb[0].mxu0
        %v4235 = vpop.f32.mrb[0].mxu0
        %v4236 = vadd.f32 %v3692, %v4235
        %v4237 = vpop.f32.mrb[0].mxu0
        %4238 = vdwg.mxu0
        %4239 = vmatprep.subr.bf16.mxu0 0
        %4240 = vmatpush1.bf16.msra.mxu0 %v3966
        %4241 = vmatprep.subr.bf16.mxu0 0
        %4242 = vmatpush1.bf16.msra.mxu0 %v3967
        %4243 = vmatprep.subr.bf16.mxu0 0
        %4244 = vmatpush1.bf16.msra.mxu0 %v3968
        %4245 = vmatprep.subr.bf16.mxu0 0
        %4246 = vmatpush1.bf16.msra.mxu0 %v3969
        %4247 = vmatprep.subr.bf16.mxu0 0
        %4248 = vmatpush1.bf16.msra.mxu0 %v3970
        %4249 = vmatprep.subr.bf16.mxu0 0
        %4250 = vmatpush1.bf16.msra.mxu0 %v3971
        %4251 = vmatprep.subr.bf16.mxu0 0
        %4252 = vmatpush1.bf16.msra.mxu0 %v3972
        %4253 = vmatprep.subr.bf16.mxu0 0
        %4254 = vmatpush1.bf16.msra.mxu0 %v3973
        %4255 = vmatprep.subr.bf16.mxu0 0
        %4256 = vmatpush1.bf16.msra.mxu0 %v3974
        %4257 = vmatprep.subr.bf16.mxu0 0
        %4258 = vmatpush1.bf16.msra.mxu0 %v3975
        %4259 = vmatprep.subr.bf16.mxu0 0
        %4260 = vmatpush1.bf16.msra.mxu0 %v3976
        %4261 = vmatprep.subr.bf16.mxu0 0
        %4262 = vmatpush1.bf16.msra.mxu0 %v3977
        %4263 = vmatprep.subr.bf16.mxu0 0
        %4264 = vmatpush1.bf16.msra.mxu0 %v3978
        %4265 = vmatprep.subr.bf16.mxu0 0
        %4266 = vmatpush1.bf16.msra.mxu0 %v3979
        %4267 = vmatprep.subr.bf16.mxu0 0
        %4268 = vmatpush1.bf16.msra.mxu0 %v3980
        %4269 = vmatprep.subr.bf16.mxu0 0
        %4270 = vmatpush1.bf16.msra.mxu0 %v3981
        %4271 = vmatprep.mubr.bf16.mxu0 %v3434
        %4272 = vmatmul.mubr.bf16.gmra.mrb[0].mxu0 %v3433
        %v4273 = vpop.f32.mrb[0].mxu0
        %v4274 = vadd.f32 %v4113, %v4273
        %v4275 = vpop.f32.mrb[0].mxu0
        %v4276 = vpop.f32.mrb[0].mxu0
        %v4277 = vadd.f32 %v4116, %v4276
        %v4278 = vpop.f32.mrb[0].mxu0
        %4279 = vmatprep.mubr.bf16.mxu0 %v3442
        %4280 = vmatmul.mubr.bf16.gmra.mrb[0].mxu0 %v3441
        %v4281 = vpop.f32.mrb[0].mxu0
        %v4282 = vadd.f32 %v4121, %v4281
        %v4283 = vpop.f32.mrb[0].mxu0
        %v4284 = vpop.f32.mrb[0].mxu0
        %v4285 = vadd.f32 %v4124, %v4284
        %v4286 = vpop.f32.mrb[0].mxu0
        %4287 = vmatprep.mubr.bf16.mxu0 %v3450
        %4288 = vmatmul.mubr.bf16.gmra.mrb[0].mxu0 %v3449
        %v4289 = vpop.f32.mrb[0].mxu0
        %v4290 = vadd.f32 %v4129, %v4289
        %v4291 = vpop.f32.mrb[0].mxu0
        %v4292 = vpop.f32.mrb[0].mxu0
        %v4293 = vadd.f32 %v4132, %v4292
        %v4294 = vpop.f32.mrb[0].mxu0
        %4295 = vmatprep.mubr.bf16.mxu0 %v3458
        %4296 = vmatmul.mubr.bf16.gmra.mrb[0].mxu0 %v3457
        %v4297 = vpop.f32.mrb[0].mxu0
        %v4298 = vadd.f32 %v4137, %v4297
        %v4299 = vpop.f32.mrb[0].mxu0
        %v4300 = vpop.f32.mrb[0].mxu0
        %v4301 = vadd.f32 %v4140, %v4300
        %v4302 = vpop.f32.mrb[0].mxu0
        %4303 = vmatprep.mubr.bf16.mxu0 %v3466
        %4304 = vmatmul.mubr.bf16.gmra.mrb[0].mxu0 %v3465
        %v4305 = vpop.f32.mrb[0].mxu0
        %v4306 = vadd.f32 %v4145, %v4305
        %v4307 = vpop.f32.mrb[0].mxu0
        %v4308 = vpop.f32.mrb[0].mxu0
        %v4309 = vadd.f32 %v4148, %v4308
        %v4310 = vpop.f32.mrb[0].mxu0
        %4311 = vmatprep.mubr.bf16.mxu0 %v3474
        %4312 = vmatmul.mubr.bf16.gmra.mrb[0].mxu0 %v3473
        %v4313 = vpop.f32.mrb[0].mxu0
        %v4314 = vadd.f32 %v4153, %v4313
        %v4315 = vpop.f32.mrb[0].mxu0
        %v4316 = vpop.f32.mrb[0].mxu0
        %v4317 = vadd.f32 %v4156, %v4316
        %v4318 = vpop.f32.mrb[0].mxu0
        %4319 = vmatprep.mubr.bf16.mxu0 %v3482
        %4320 = vmatmul.mubr.bf16.gmra.mrb[0].mxu0 %v3481
        %v4321 = vpop.f32.mrb[0].mxu0
        %v4322 = vadd.f32 %v4161, %v4321
        %v4323 = vpop.f32.mrb[0].mxu0
        %v4324 = vpop.f32.mrb[0].mxu0
        %v4325 = vadd.f32 %v4164, %v4324
        %v4326 = vpop.f32.mrb[0].mxu0
        %4327 = vmatprep.mubr.bf16.mxu0 %v3490
        %4328 = vmatmul.mubr.bf16.gmra.mrb[0].mxu0 %v3489
        %v4329 = vpop.f32.mrb[0].mxu0
        %v4330 = vadd.f32 %v4169, %v4329
        %v4331 = vpop.f32.mrb[0].mxu0
        %v4332 = vpop.f32.mrb[0].mxu0
        %v4333 = vadd.f32 %v4172, %v4332
        %v4334 = vpop.f32.mrb[0].mxu0
        %4335 = vmatprep.mubr.bf16.mxu0 %v3498
        %4336 = vmatmul.mubr.bf16.gmra.mrb[0].mxu0 %v3497
        %v4337 = vpop.f32.mrb[0].mxu0
        %v4338 = vadd.f32 %v4177, %v4337
        %v4339 = vpop.f32.mrb[0].mxu0
        %v4340 = vpop.f32.mrb[0].mxu0
        %v4341 = vadd.f32 %v4180, %v4340
        %v4342 = vpop.f32.mrb[0].mxu0
        %4343 = vmatprep.mubr.bf16.mxu0 %v3506
        %4344 = vmatmul.mubr.bf16.gmra.mrb[0].mxu0 %v3505
        %v4345 = vpop.f32.mrb[0].mxu0
        %v4346 = vadd.f32 %v4185, %v4345
        %v4347 = vpop.f32.mrb[0].mxu0
        %v4348 = vpop.f32.mrb[0].mxu0
        %v4349 = vadd.f32 %v4188, %v4348
        %v4350 = vpop.f32.mrb[0].mxu0
        %4351 = vmatprep.mubr.bf16.mxu0 %v3514
        %4352 = vmatmul.mubr.bf16.gmra.mrb[0].mxu0 %v3513
        %v4353 = vpop.f32.mrb[0].mxu0
        %v4354 = vadd.f32 %v4193, %v4353
        %v4355 = vpop.f32.mrb[0].mxu0
        %v4356 = vpop.f32.mrb[0].mxu0
        %v4357 = vadd.f32 %v4196, %v4356
        %v4358 = vpop.f32.mrb[0].mxu0
        %4359 = vmatprep.mubr.bf16.mxu0 %v3522
        %4360 = vmatmul.mubr.bf16.gmra.mrb[0].mxu0 %v3521
        %v4361 = vpop.f32.mrb[0].mxu0
        %v4362 = vadd.f32 %v4201, %v4361
        %v4363 = vpop.f32.mrb[0].mxu0
        %v4364 = vpop.f32.mrb[0].mxu0
        %v4365 = vadd.f32 %v4204, %v4364
        %v4366 = vpop.f32.mrb[0].mxu0
        %4367 = vmatprep.mubr.bf16.mxu0 %v3530
        %4368 = vmatmul.mubr.bf16.gmra.mrb[0].mxu0 %v3529
        %v4369 = vpop.f32.mrb[0].mxu0
        %v4370 = vadd.f32 %v4209, %v4369
        %v4371 = vpop.f32.mrb[0].mxu0
        %v4372 = vpop.f32.mrb[0].mxu0
        %v4373 = vadd.f32 %v4212, %v4372
        %v4374 = vpop.f32.mrb[0].mxu0
        %4375 = vmatprep.mubr.bf16.mxu0 %v3538
        %4376 = vmatmul.mubr.bf16.gmra.mrb[0].mxu0 %v3537
        %v4377 = vpop.f32.mrb[0].mxu0
        %v4378 = vadd.f32 %v4217, %v4377
        %v4379 = vpop.f32.mrb[0].mxu0
        %v4380 = vpop.f32.mrb[0].mxu0
        %v4381 = vadd.f32 %v4220, %v4380
        %v4382 = vpop.f32.mrb[0].mxu0
        %4383 = vmatprep.mubr.bf16.mxu0 %v3546
        %4384 = vmatmul.mubr.bf16.gmra.mrb[0].mxu0 %v3545
        %v4385 = vpop.f32.mrb[0].mxu0
        %v4386 = vadd.f32 %v4225, %v4385
        %v4387 = vpop.f32.mrb[0].mxu0
        %v4388 = vpop.f32.mrb[0].mxu0
        %v4389 = vadd.f32 %v4228, %v4388
        %v4390 = vpop.f32.mrb[0].mxu0
        %4391 = vmatprep.mubr.bf16.mxu0 %v3554
        %4392 = vmatmul.mubr.bf16.gmra.mrb[0].mxu0 %v3553
        %v4393 = vpop.f32.mrb[0].mxu0
        %v4394 = vadd.f32 %v4233, %v4393
        %v4395 = vpop.f32.mrb[0].mxu0
        %v4396 = vpop.f32.mrb[0].mxu0
        %v4397 = vadd.f32 %v4236, %v4396
        %v4398 = vpop.f32.mrb[0].mxu0
        %4399 = vdwg.mxu0
        %4400 = vmatprep.subr.bf16.mxu0 0
        %4401 = vmatpush1.bf16.msra.mxu0 %v3982
        %4402 = vmatprep.subr.bf16.mxu0 0
        %4403 = vmatpush1.bf16.msra.mxu0 %v3983
        %4404 = vmatprep.subr.bf16.mxu0 0
        %4405 = vmatpush1.bf16.msra.mxu0 %v3984
        %4406 = vmatprep.subr.bf16.mxu0 0
        %4407 = vmatpush1.bf16.msra.mxu0 %v3985
        %4408 = vmatprep.subr.bf16.mxu0 0
        %4409 = vmatpush1.bf16.msra.mxu0 %v3986
        %4410 = vmatprep.subr.bf16.mxu0 0
        %4411 = vmatpush1.bf16.msra.mxu0 %v3987
        %4412 = vmatprep.subr.bf16.mxu0 0
        %4413 = vmatpush1.bf16.msra.mxu0 %v3988
        %4414 = vmatprep.subr.bf16.mxu0 0
        %4415 = vmatpush1.bf16.msra.mxu0 %v3989
        %4416 = vmatprep.subr.bf16.mxu0 0
        %4417 = vmatpush1.bf16.msra.mxu0 %v3990
        %4418 = vmatprep.subr.bf16.mxu0 0
        %4419 = vmatpush1.bf16.msra.mxu0 %v3991
        %4420 = vmatprep.subr.bf16.mxu0 0
        %4421 = vmatpush1.bf16.msra.mxu0 %v3992
        %4422 = vmatprep.subr.bf16.mxu0 0
        %4423 = vmatpush1.bf16.msra.mxu0 %v3993
        %4424 = vmatprep.subr.bf16.mxu0 0
        %4425 = vmatpush1.bf16.msra.mxu0 %v3994
        %4426 = vmatprep.subr.bf16.mxu0 0
        %4427 = vmatpush1.bf16.msra.mxu0 %v3995
        %4428 = vmatprep.subr.bf16.mxu0 0
        %4429 = vmatpush1.bf16.msra.mxu0 %v3996
        %4430 = vmatprep.subr.bf16.mxu0 0
        %4431 = vmatpush1.bf16.msra.mxu0 %v3997
        %4432 = vmatprep.mubr.bf16.mxu0 %v3436
        %4433 = vmatmul.mubr.bf16.gmra.mrb[0].mxu0 %v3435
        %v4434 = vpop.f32.mrb[0].mxu0
        %v4435 = vadd.f32 %v4274, %v4434
        %v4436 = vpop.f32.mrb[0].mxu0
        %v4437 = vpop.f32.mrb[0].mxu0
        %v4438 = vadd.f32 %v4277, %v4437
        %v4439 = vpop.f32.mrb[0].mxu0
        %4440 = vmatprep.mubr.bf16.mxu0 %v3444
        %4441 = vmatmul.mubr.bf16.gmra.mrb[0].mxu0 %v3443
        %v4442 = vpop.f32.mrb[0].mxu0
        %v4443 = vadd.f32 %v4282, %v4442
        %v4444 = vpop.f32.mrb[0].mxu0
        %v4445 = vpop.f32.mrb[0].mxu0
        %v4446 = vadd.f32 %v4285, %v4445
        %v4447 = vpop.f32.mrb[0].mxu0
        %4448 = vmatprep.mubr.bf16.mxu0 %v3452
        %4449 = vmatmul.mubr.bf16.gmra.mrb[0].mxu0 %v3451
        %v4450 = vpop.f32.mrb[0].mxu0
        %v4451 = vadd.f32 %v4290, %v4450
        %v4452 = vpop.f32.mrb[0].mxu0
        %v4453 = vpop.f32.mrb[0].mxu0
        %v4454 = vadd.f32 %v4293, %v4453
        %v4455 = vpop.f32.mrb[0].mxu0
        %4456 = vmatprep.mubr.bf16.mxu0 %v3460
        %4457 = vmatmul.mubr.bf16.gmra.mrb[0].mxu0 %v3459
        %v4458 = vpop.f32.mrb[0].mxu0
        %v4459 = vadd.f32 %v4298, %v4458
        %v4460 = vpop.f32.mrb[0].mxu0
        %v4461 = vpop.f32.mrb[0].mxu0
        %v4462 = vadd.f32 %v4301, %v4461
        %v4463 = vpop.f32.mrb[0].mxu0
        %4464 = vmatprep.mubr.bf16.mxu0 %v3468
        %4465 = vmatmul.mubr.bf16.gmra.mrb[0].mxu0 %v3467
        %v4466 = vpop.f32.mrb[0].mxu0
        %v4467 = vadd.f32 %v4306, %v4466
        %v4468 = vpop.f32.mrb[0].mxu0
        %v4469 = vpop.f32.mrb[0].mxu0
        %v4470 = vadd.f32 %v4309, %v4469
        %v4471 = vpop.f32.mrb[0].mxu0
        %4472 = vmatprep.mubr.bf16.mxu0 %v3476
        %4473 = vmatmul.mubr.bf16.gmra.mrb[0].mxu0 %v3475
        %v4474 = vpop.f32.mrb[0].mxu0
        %v4475 = vadd.f32 %v4314, %v4474
        %v4476 = vpop.f32.mrb[0].mxu0
        %v4477 = vpop.f32.mrb[0].mxu0
        %v4478 = vadd.f32 %v4317, %v4477
        %v4479 = vpop.f32.mrb[0].mxu0
        %4480 = vmatprep.mubr.bf16.mxu0 %v3484
        %4481 = vmatmul.mubr.bf16.gmra.mrb[0].mxu0 %v3483
        %v4482 = vpop.f32.mrb[0].mxu0
        %v4483 = vadd.f32 %v4322, %v4482
        %v4484 = vpop.f32.mrb[0].mxu0
        %v4485 = vpop.f32.mrb[0].mxu0
        %v4486 = vadd.f32 %v4325, %v4485
        %v4487 = vpop.f32.mrb[0].mxu0
        %4488 = vmatprep.mubr.bf16.mxu0 %v3492
        %4489 = vmatmul.mubr.bf16.gmra.mrb[0].mxu0 %v3491
        %v4490 = vpop.f32.mrb[0].mxu0
        %v4491 = vadd.f32 %v4330, %v4490
        %v4492 = vpop.f32.mrb[0].mxu0
        %v4493 = vpop.f32.mrb[0].mxu0
        %v4494 = vadd.f32 %v4333, %v4493
        %v4495 = vpop.f32.mrb[0].mxu0
        %4496 = vmatprep.mubr.bf16.mxu0 %v3500
        %4497 = vmatmul.mubr.bf16.gmra.mrb[0].mxu0 %v3499
        %v4498 = vpop.f32.mrb[0].mxu0
        %v4499 = vadd.f32 %v4338, %v4498
        %v4500 = vpop.f32.mrb[0].mxu0
        %v4501 = vpop.f32.mrb[0].mxu0
        %v4502 = vadd.f32 %v4341, %v4501
        %v4503 = vpop.f32.mrb[0].mxu0
        %4504 = vmatprep.mubr.bf16.mxu0 %v3508
        %4505 = vmatmul.mubr.bf16.gmra.mrb[0].mxu0 %v3507
        %v4506 = vpop.f32.mrb[0].mxu0
        %v4507 = vadd.f32 %v4346, %v4506
        %v4508 = vpop.f32.mrb[0].mxu0
        %v4509 = vpop.f32.mrb[0].mxu0
        %v4510 = vadd.f32 %v4349, %v4509
        %v4511 = vpop.f32.mrb[0].mxu0
        %4512 = vmatprep.mubr.bf16.mxu0 %v3516
        %4513 = vmatmul.mubr.bf16.gmra.mrb[0].mxu0 %v3515
        %v4514 = vpop.f32.mrb[0].mxu0
        %v4515 = vadd.f32 %v4354, %v4514
        %v4516 = vpop.f32.mrb[0].mxu0
        %v4517 = vpop.f32.mrb[0].mxu0
        %v4518 = vadd.f32 %v4357, %v4517
        %v4519 = vpop.f32.mrb[0].mxu0
        %4520 = vmatprep.mubr.bf16.mxu0 %v3524
        %4521 = vmatmul.mubr.bf16.gmra.mrb[0].mxu0 %v3523
        %v4522 = vpop.f32.mrb[0].mxu0
        %v4523 = vadd.f32 %v4362, %v4522
        %v4524 = vpop.f32.mrb[0].mxu0
        %v4525 = vpop.f32.mrb[0].mxu0
        %v4526 = vadd.f32 %v4365, %v4525
        %v4527 = vpop.f32.mrb[0].mxu0
        %4528 = vmatprep.mubr.bf16.mxu0 %v3532
        %4529 = vmatmul.mubr.bf16.gmra.mrb[0].mxu0 %v3531
        %v4530 = vpop.f32.mrb[0].mxu0
        %v4531 = vadd.f32 %v4370, %v4530
        %v4532 = vpop.f32.mrb[0].mxu0
        %v4533 = vpop.f32.mrb[0].mxu0
        %v4534 = vadd.f32 %v4373, %v4533
        %v4535 = vpop.f32.mrb[0].mxu0
        %4536 = vmatprep.mubr.bf16.mxu0 %v3540
        %4537 = vmatmul.mubr.bf16.gmra.mrb[0].mxu0 %v3539
        %v4538 = vpop.f32.mrb[0].mxu0
        %v4539 = vadd.f32 %v4378, %v4538
        %v4540 = vpop.f32.mrb[0].mxu0
        %v4541 = vpop.f32.mrb[0].mxu0
        %v4542 = vadd.f32 %v4381, %v4541
        %v4543 = vpop.f32.mrb[0].mxu0
        %4544 = vmatprep.mubr.bf16.mxu0 %v3548
        %4545 = vmatmul.mubr.bf16.gmra.mrb[0].mxu0 %v3547
        %v4546 = vpop.f32.mrb[0].mxu0
        %v4547 = vadd.f32 %v4386, %v4546
        %v4548 = vpop.f32.mrb[0].mxu0
        %v4549 = vpop.f32.mrb[0].mxu0
        %v4550 = vadd.f32 %v4389, %v4549
        %v4551 = vpop.f32.mrb[0].mxu0
        %4552 = vmatprep.mubr.bf16.mxu0 %v3556
        %4553 = vmatmul.mubr.bf16.gmra.mrb[0].mxu0 %v3555
        %v4554 = vpop.f32.mrb[0].mxu0
        %v4555 = vadd.f32 %v4394, %v4554
        %v4556 = vpop.f32.mrb[0].mxu0
        %v4557 = vpop.f32.mrb[0].mxu0
        %v4558 = vadd.f32 %v4397, %v4557
        %v4559 = vpop.f32.mrb[0].mxu0
        %4560 = vdwg.mxu0
        %4561 = vmatprep.subr.bf16.mxu0 0
        %4562 = vmatpush1.bf16.msra.mxu0 %v3998
        %4563 = vmatprep.subr.bf16.mxu0 0
        %4564 = vmatpush1.bf16.msra.mxu0 %v3999
        %4565 = vmatprep.subr.bf16.mxu0 0
        %4566 = vmatpush1.bf16.msra.mxu0 %v4000
        %4567 = vmatprep.subr.bf16.mxu0 0
        %4568 = vmatpush1.bf16.msra.mxu0 %v4001
        %4569 = vmatprep.subr.bf16.mxu0 0
        %4570 = vmatpush1.bf16.msra.mxu0 %v4002
        %4571 = vmatprep.subr.bf16.mxu0 0
        %4572 = vmatpush1.bf16.msra.mxu0 %v4003
        %4573 = vmatprep.subr.bf16.mxu0 0
        %4574 = vmatpush1.bf16.msra.mxu0 %v4004
        %4575 = vmatprep.subr.bf16.mxu0 0
        %4576 = vmatpush1.bf16.msra.mxu0 %v4005
        %4577 = vmatprep.subr.bf16.mxu0 0
        %4578 = vmatpush1.bf16.msra.mxu0 %v4006
        %4579 = vmatprep.subr.bf16.mxu0 0
        %4580 = vmatpush1.bf16.msra.mxu0 %v4007
        %4581 = vmatprep.subr.bf16.mxu0 0
        %4582 = vmatpush1.bf16.msra.mxu0 %v4008
        %4583 = vmatprep.subr.bf16.mxu0 0
        %4584 = vmatpush1.bf16.msra.mxu0 %v4009
        %4585 = vmatprep.subr.bf16.mxu0 0
        %4586 = vmatpush1.bf16.msra.mxu0 %v4010
        %4587 = vmatprep.subr.bf16.mxu0 0
        %4588 = vmatpush1.bf16.msra.mxu0 %v4011
        %4589 = vmatprep.subr.bf16.mxu0 0
        %4590 = vmatpush1.bf16.msra.mxu0 %v4012
        %4591 = vmatprep.subr.bf16.mxu0 0
        %4592 = vmatpush1.bf16.msra.mxu0 %v4013
        %4593 = vmatprep.mubr.bf16.mxu0 %v3438
        %4594 = vmatmul.mubr.bf16.gmra.mrb[0].mxu0 %v3437
        %v4595 = vpop.f32.mrb[0].mxu0
        %v4596 = vadd.f32 %v4435, %v4595
        %v4597 = vpop.f32.mrb[0].mxu0
        %v4598 = vpop.f32.mrb[0].mxu0
        %v4599 = vadd.f32 %v4438, %v4598
        %v4600 = vpop.f32.mrb[0].mxu0
        %4601 = vmatprep.mubr.bf16.mxu0 %v3446
        %4602 = vmatmul.mubr.bf16.gmra.mrb[0].mxu0 %v3445
        %v4603 = vpop.f32.mrb[0].mxu0
        %v4604 = vadd.f32 %v4443, %v4603
        %v4605 = vpop.f32.mrb[0].mxu0
        %v4606 = vpop.f32.mrb[0].mxu0
        %v4607 = vadd.f32 %v4446, %v4606
        %v4608 = vpop.f32.mrb[0].mxu0
        %4609 = vmatprep.mubr.bf16.mxu0 %v3454
        %4610 = vmatmul.mubr.bf16.gmra.mrb[0].mxu0 %v3453
        %v4611 = vpop.f32.mrb[0].mxu0
        %v4612 = vadd.f32 %v4451, %v4611
        %v4613 = vpop.f32.mrb[0].mxu0
        %v4614 = vpop.f32.mrb[0].mxu0
        %v4615 = vadd.f32 %v4454, %v4614
        %v4616 = vpop.f32.mrb[0].mxu0
        %4617 = vmatprep.mubr.bf16.mxu0 %v3462
        %4618 = vmatmul.mubr.bf16.gmra.mrb[0].mxu0 %v3461
        %v4619 = vpop.f32.mrb[0].mxu0
        %v4620 = vadd.f32 %v4459, %v4619
        %v4621 = vpop.f32.mrb[0].mxu0
        %v4622 = vpop.f32.mrb[0].mxu0
        %v4623 = vadd.f32 %v4462, %v4622
        %v4624 = vpop.f32.mrb[0].mxu0
        %4625 = vmatprep.mubr.bf16.mxu0 %v3470
        %4626 = vmatmul.mubr.bf16.gmra.mrb[0].mxu0 %v3469
        %v4627 = vpop.f32.mrb[0].mxu0
        %v4628 = vadd.f32 %v4467, %v4627
        %v4629 = vpop.f32.mrb[0].mxu0
        %v4630 = vpop.f32.mrb[0].mxu0
        %v4631 = vadd.f32 %v4470, %v4630
        %v4632 = vpop.f32.mrb[0].mxu0
        %4633 = vmatprep.mubr.bf16.mxu0 %v3478
        %4634 = vmatmul.mubr.bf16.gmra.mrb[0].mxu0 %v3477
        %v4635 = vpop.f32.mrb[0].mxu0
        %v4636 = vadd.f32 %v4475, %v4635
        %v4637 = vpop.f32.mrb[0].mxu0
        %v4638 = vpop.f32.mrb[0].mxu0
        %v4639 = vadd.f32 %v4478, %v4638
        %v4640 = vpop.f32.mrb[0].mxu0
        %4641 = vmatprep.mubr.bf16.mxu0 %v3486
        %4642 = vmatmul.mubr.bf16.gmra.mrb[0].mxu0 %v3485
        %v4643 = vpop.f32.mrb[0].mxu0
        %v4644 = vadd.f32 %v4483, %v4643
        %v4645 = vpop.f32.mrb[0].mxu0
        %v4646 = vpop.f32.mrb[0].mxu0
        %v4647 = vadd.f32 %v4486, %v4646
        %v4648 = vpop.f32.mrb[0].mxu0
        %4649 = vmatprep.mubr.bf16.mxu0 %v3494
        %4650 = vmatmul.mubr.bf16.gmra.mrb[0].mxu0 %v3493
        %v4651 = vpop.f32.mrb[0].mxu0
        %v4652 = vadd.f32 %v4491, %v4651
        %v4653 = vpop.f32.mrb[0].mxu0
        %v4654 = vpop.f32.mrb[0].mxu0
        %v4655 = vadd.f32 %v4494, %v4654
        %v4656 = vpop.f32.mrb[0].mxu0
        %4657 = vmatprep.mubr.bf16.mxu0 %v3502
        %4658 = vmatmul.mubr.bf16.gmra.mrb[0].mxu0 %v3501
        %v4659 = vpop.f32.mrb[0].mxu0
        %v4660 = vadd.f32 %v4499, %v4659
        %v4661 = vpop.f32.mrb[0].mxu0
        %v4662 = vpop.f32.mrb[0].mxu0
        %v4663 = vadd.f32 %v4502, %v4662
        %v4664 = vpop.f32.mrb[0].mxu0
        %4665 = vmatprep.mubr.bf16.mxu0 %v3510
        %4666 = vmatmul.mubr.bf16.gmra.mrb[0].mxu0 %v3509
        %v4667 = vpop.f32.mrb[0].mxu0
        %v4668 = vadd.f32 %v4507, %v4667
        %v4669 = vpop.f32.mrb[0].mxu0
        %v4670 = vpop.f32.mrb[0].mxu0
        %v4671 = vadd.f32 %v4510, %v4670
        %v4672 = vpop.f32.mrb[0].mxu0
        %4673 = vmatprep.mubr.bf16.mxu0 %v3518
        %4674 = vmatmul.mubr.bf16.gmra.mrb[0].mxu0 %v3517
        %v4675 = vpop.f32.mrb[0].mxu0
        %v4676 = vadd.f32 %v4515, %v4675
        %v4677 = vpop.f32.mrb[0].mxu0
        %v4678 = vpop.f32.mrb[0].mxu0
        %v4679 = vadd.f32 %v4518, %v4678
        %v4680 = vpop.f32.mrb[0].mxu0
        %4681 = vmatprep.mubr.bf16.mxu0 %v3526
        %4682 = vmatmul.mubr.bf16.gmra.mrb[0].mxu0 %v3525
        %v4683 = vpop.f32.mrb[0].mxu0
        %v4684 = vadd.f32 %v4523, %v4683
        %v4685 = vpop.f32.mrb[0].mxu0
        %v4686 = vpop.f32.mrb[0].mxu0
        %v4687 = vadd.f32 %v4526, %v4686
        %v4688 = vpop.f32.mrb[0].mxu0
        %4689 = vmatprep.mubr.bf16.mxu0 %v3534
        %4690 = vmatmul.mubr.bf16.gmra.mrb[0].mxu0 %v3533
        %v4691 = vpop.f32.mrb[0].mxu0
        %v4692 = vadd.f32 %v4531, %v4691
        %v4693 = vpop.f32.mrb[0].mxu0
        %v4694 = vpop.f32.mrb[0].mxu0
        %v4695 = vadd.f32 %v4534, %v4694
        %v4696 = vpop.f32.mrb[0].mxu0
        %4697 = vmatprep.mubr.bf16.mxu0 %v3542
        %4698 = vmatmul.mubr.bf16.gmra.mrb[0].mxu0 %v3541
        %v4699 = vpop.f32.mrb[0].mxu0
        %v4700 = vadd.f32 %v4539, %v4699
        %v4701 = vpop.f32.mrb[0].mxu0
        %v4702 = vpop.f32.mrb[0].mxu0
        %v4703 = vadd.f32 %v4542, %v4702
        %v4704 = vpop.f32.mrb[0].mxu0
        %4705 = vmatprep.mubr.bf16.mxu0 %v3550
        %4706 = vmatmul.mubr.bf16.gmra.mrb[0].mxu0 %v3549
        %v4707 = vpop.f32.mrb[0].mxu0
        %v4708 = vadd.f32 %v4547, %v4707
        %v4709 = vpop.f32.mrb[0].mxu0
        %v4710 = vpop.f32.mrb[0].mxu0
        %v4711 = vadd.f32 %v4550, %v4710
        %v4712 = vpop.f32.mrb[0].mxu0
        %4713 = vmatprep.mubr.bf16.mxu0 %v3558
        %4714 = vmatmul.mubr.bf16.gmra.mrb[0].mxu0 %v3557
        %v4715 = vpop.f32.mrb[0].mxu0
        %v4716 = vadd.f32 %v4555, %v4715
        %v4717 = vpop.f32.mrb[0].mxu0
        %v4718 = vpop.f32.mrb[0].mxu0
        %v4719 = vadd.f32 %v4558, %v4718
        %v4720 = vpop.f32.mrb[0].mxu0
        %4721 = vdwg.mxu0
        %4722 = vst [vmem:[%s375] sm:$0xff] %v4596
        %4723 = vst [vmem:[%s375 + $0x8] sm:$0xff] %v4599
        %4724 = vst [vmem:[%s375 + $0x10] sm:$0xff] %v4604
        %4725 = vst [vmem:[%s375 + $0x18] sm:$0xff] %v4607
        %4726 = vst [vmem:[%s375 + $0x20] sm:$0xff] %v4612
        %4727 = vst [vmem:[%s375 + $0x28] sm:$0xff] %v4615
        %4728 = vst [vmem:[%s375 + $0x30] sm:$0xff] %v4620
        %4729 = vst [vmem:[%s375 + $0x38] sm:$0xff] %v4623
        %4730 = vst [vmem:[%s375 + $0x40] sm:$0xff] %v4628
        %4731 = vst [vmem:[%s375 + $0x48] sm:$0xff] %v4631
        %4732 = vst [vmem:[%s375 + $0x50] sm:$0xff] %v4636
        %4733 = vst [vmem:[%s375 + $0x58] sm:$0xff] %v4639
        %4734 = vst [vmem:[%s375 + $0x60] sm:$0xff] %v4644
        %4735 = vst [vmem:[%s375 + $0x68] sm:$0xff] %v4647
        %4736 = vst [vmem:[%s375 + $0x70] sm:$0xff] %v4652
        %4737 = vst [vmem:[%s375 + $0x78] sm:$0xff] %v4655
        %4738 = vst [vmem:[%s375 + $0x80] sm:$0xff] %v4660
        %4739 = vst [vmem:[%s375 + $0x88] sm:$0xff] %v4663
        %4740 = vst [vmem:[%s375 + $0x90] sm:$0xff] %v4668
        %4741 = vst [vmem:[%s375 + $0x98] sm:$0xff] %v4671
        %4742 = vst [vmem:[%s375 + $0xa0] sm:$0xff] %v4676
        %4743 = vst [vmem:[%s375 + $0xa8] sm:$0xff] %v4679
        %4744 = vst [vmem:[%s375 + $0xb0] sm:$0xff] %v4684
        %4745 = vst [vmem:[%s375 + $0xb8] sm:$0xff] %v4687
        %4746 = vst [vmem:[%s375 + $0xc0] sm:$0xff] %v4692
        %4747 = vst [vmem:[%s375 + $0xc8] sm:$0xff] %v4695
        %4748 = vst [vmem:[%s375 + $0xd0] sm:$0xff] %v4700
        %4749 = vst [vmem:[%s375 + $0xd8] sm:$0xff] %v4703
        %4750 = vst [vmem:[%s375 + $0xe0] sm:$0xff] %v4708
        %4751 = vst [vmem:[%s375 + $0xe8] sm:$0xff] %v4711
        %4752 = vst [vmem:[%s375 + $0xf0] sm:$0xff] %v4716
        %4753 = vst [vmem:[%s375 + $0xf8] sm:$0xff] %v4719
        %s4754 = sand.u32 %s187, 1
        %s4755 = scalar_lea.sflag [#allocation4], %s4754
        %s4756 = sand.u32 %s187, 1
        %s4757 = smul.addr %s4756, 256
        %s4758 = scalar_lea.vmem [#allocation14], %s4757
        // Predicated region
        $region77: #{tpu_custom_call.1} parent=47 // pred_check
          %p4759 = pneg %p197
        $region78: #{tpu_custom_call.1} parent=47 // pred_check_branch
          %4761 = sbr.rel (%p4759) target = $region80
        $region79: #{tpu_custom_call.1} parent=47 // pred_region
          %s4762 = smul.u32 32, %s27
          %s4764 = ssub.s32 4096, 4096
          %4765 = vsyncadd %s4755, %s4764
          %s4766 = smul.addr %s4762, 128
          %s4767 = scalar_lea.hbm %s7, %s4766
          %s4768 = sshll.u32 %s4758, 4
          %s4769 = int_to_ptr.vmem [resolvable:$true] %s4768
          %4774 = dma.vmem_to_hbm [thread:$0]  %s4769, 4096, %s4767, %s4755, 128, 128, 8
        $region80: #{tpu_custom_call.1} parent=47 // pred_fallthru
          _
      $region48: #{tpu_custom_call.1} parent=5 // pred_fallthru
        _
      %p4775 = scmp.le.s32.totalorder 2, %s22
      // Predicated region
      $region81: #{tpu_custom_call.1} parent=5 // pred_check
        %p4776 = pneg %p4775
      $region82: #{tpu_custom_call.1} parent=5 // pred_check_branch
        %4778 = sbr.rel (%p4776) target = $region84
      $region83: #{tpu_custom_call.1} parent=5 // pred_region
        %s4779 = ssub.s32 %s22, 2
        // Predicated region
        $region85: #{tpu_custom_call.1} parent=83 // pred_check
          %p4780 = pneg %p203
        $region86: #{tpu_custom_call.1} parent=83 // pred_check_branch
          %4782 = sbr.rel (%p4780) target = $region88
        $region87: #{tpu_custom_call.1} parent=83 // pred_region
          %s4783 = sand.u32 %s188, 1
          %s4784 = scalar_lea.sflag [#allocation4], %s4783
          %s4785 = sand.u32 %s188, 1
          %s4786 = smul.addr %s4785, 256
          %s4787 = scalar_lea.vmem [#allocation14], %s4786
          %4788 = dma.done %s4784, 4096
        $region88: #{tpu_custom_call.1} parent=83 // pred_fallthru
          _
      $region84: #{tpu_custom_call.1} parent=5 // pred_fallthru
        _
    $region6: #{tpu_custom_call.1} parent=1 // loop_footer
      %s26 = sadd.s32 1, %s22
    $region7: #{tpu_custom_call.1} parent=1 // loop_footer_branch
      %21 = sbr.rel target = $region3
    $region8: #{tpu_custom_call.1} parent=1 // loop_exit
      _
    %4789 = vsyncpa [#allocation3], 1
    %s4790 = scalar_lea.sflag [#allocation3], 1
    %4791 = vsyncpa %s4790, 1
    %4792 = vsyncpa [#allocation6], 1
    %4793 = vsyncpa [#allocation9], 1
    %4794 = vsyncpa [#allocation12], 1
    %4795 = vsyncpa [#allocation4], 1
    %s4796 = scalar_lea.sflag [#allocation4], 1
    %4797 = vsyncpa %s4796, 1

</llo_original>
